<compile_context>
chip_gen: v7x
topology: tpu7x:2x2x1
jax: 0.10.0
libtpu: 0.0.40
codegen_flags: <defaults>
</compile_context>

<pallas_src>
import numpy as np
import jax
import jax.numpy as jnp
from jax.experimental import pallas as pl
from jax.experimental.pallas import tpu as pltpu


def _viterbi_kernel(trans_ref, start_ref, end_ref, em_ref,
                    tags_ref, score_ref, hist_ref):
    """Viterbi forward recursion + in-kernel backtracking for one batch tile.

    trans_ref : ((L-1)*C*C,)      f32 SMEM  transitions[k, j, t] at t*C*C + k*C + j
    start_ref : (C,)              f32 SMEM
    end_ref   : (C,)              f32 SMEM
    em_ref    : (L, C, rb, 128)   f32 VMEM  emissions, batch on lanes (dense)
    tags_ref  : (L, rb, 128)      i32 VMEM  decoded tags (output)
    score_ref : (C, rb, 128)      f32 VMEM  final per-tag scores incl. end (output)
    hist_ref  : (L-1, C, rb, 128) i32 VMEM  scratch backpointers (never hits HBM)
    """
    L, C = em_ref.shape[0], em_ref.shape[1]
    rb, lanes = em_ref.shape[2], em_ref.shape[3]

    # Hoisted constant vregs: reused by every select / init / equality test.
    idx_const = [jnp.full((rb, lanes), j, dtype=jnp.int32) for j in range(C)]

    # ---- forward (max-product) recursion; score kept as C dense (rb,128) tiles.
    score = [em_ref[0, j] + start_ref[j] for j in range(C)]
    # TODO(synk): switch the t loop to lax.fori_loop for long sequences; static
    # unroll is fine (and fastest) at L=8, C=5.
    for t in range(L - 1):
        new_score = []
        for j in range(C):
            # best over (score[k] + trans[t,k,j]); emission for (t+1, j) is
            # constant across k, so it is added once after the max.
            best = score[0] + trans_ref[t * C * C + j]                 # k = 0
            best_idx = idx_const[0]
            for k in range(1, C):
                cand = score[k] + trans_ref[t * C * C + k * C + j]
                take = cand > best                 # strict: first-max tie-break
                best = jnp.where(take, cand, best)
                best_idx = jnp.where(take, idx_const[k], best_idx)
            hist_ref[t, j] = best_idx
            new_score.append(best + em_ref[t + 1, j])
        score = new_score

    # ---- end transitions + argmax over final tag (all lane-dense VPU work)
    final = [score[j] + end_ref[j] for j in range(C)]
    best_score = final[0]
    best_tag = idx_const[0]
    for j in range(1, C):
        take = final[j] > best_score
        best_score = jnp.where(take, final[j], best_score)
        best_tag = jnp.where(take, idx_const[j], best_tag)
    for j in range(C):
        score_ref[j] = final[j]

    # ---- in-kernel backtracking (mask is all-ones -> every sequence has length L)
    tags_ref[L - 1] = best_tag
    cur = best_tag
    for t in range(L - 2, -1, -1):
        prev = hist_ref[t, 0]
        for j in range(1, C):
            prev = jnp.where(cur == idx_const[j], hist_ref[t, j], prev)
        tags_ref[t] = prev
        cur = prev


def _pick_rb(R, B, desired_rb=16):
    """Rows (of 128 lanes) per program.  Always >= 8 so vregs are full on the
    sublane axis (pad R up instead of shrinking rb); capped so the 'parallel'
    grid keeps >= 2 programs (v7x has 2 TensorCores) when B alone does not
    provide them and there is enough work to split."""
    rb = max(8, min(desired_rb, R))
    if B < 2 and R >= 16:
        rb = max(8, min(rb, R // 2))
    return rb


def crf_viterbi_decode(emissions, transitions, start_transitions, end_transitions,
                       *, desired_rb=16):
    """emissions: (B, L, C, H, W); transitions: (C, C, L-1); start/end: (C,).
    Returns (tags (N, L) int32, final per-tag scores (N, C) f32), N = B*H*W."""
    B, L, C, H, W = emissions.shape
    HW = H * W
    N = B * HW

    # Zero-copy re-layout: merge the contiguous (H, W) trailing dims and split
    # into rows x 128 lanes.  No transpose is materialized in HBM; all tiling
    # happens in the BlockSpec index_map.  Padding only occurs when H*W is not
    # a multiple of rb*128 (not the case for the demo shape).
    R = pl.cdiv(HW, 128)
    rb = _pick_rb(R, B, desired_rb)
    R_pad = pl.cdiv(R, rb) * rb
    HW_pad = R_pad * 128
    em = emissions.reshape(B, L, C, HW).astype(jnp.float32)
    if HW_pad != HW:
        em = jnp.pad(em, ((0, 0), (0, 0), (0, 0), (0, HW_pad - HW)))
    em = em.reshape(B, L, C, R_pad, 128)

    # transitions[k, j, t] -> flat [t, k, j] for scalar SMEM reads in-kernel.
    # TODO(synk): if C grows to ~16+, move transitions to a VMEM tile with
    # sublane-broadcast reads instead of one SMEM scalar load per candidate.
    trans_flat = jnp.transpose(transitions, (2, 0, 1)).reshape(-1).astype(jnp.float32)
    if trans_flat.size == 0:                       # L == 1 edge case
        trans_flat = jnp.zeros((1,), jnp.float32)
    start = start_transitions.reshape(C).astype(jnp.float32)
    end = end_transitions.reshape(C).astype(jnp.float32)

    grid = (B, R_pad // rb)
    # TODO(synk): for long L / large C on v7x (64 MiB VMEM), store backpointers
    # as int8 or chunk L with a two-pass backtrack; int32 is trivial at demo shape.
    tags4, scores4 = pl.pallas_call(
        _viterbi_kernel,
        grid=grid,
        in_specs=[
            pl.BlockSpec(memory_space=pltpu.MemorySpace.SMEM),     # transitions
            pl.BlockSpec(memory_space=pltpu.MemorySpace.SMEM),     # start_transitions
            pl.BlockSpec(memory_space=pltpu.MemorySpace.SMEM),     # end_transitions
            pl.BlockSpec((None, L, C, rb, 128),
                         lambda b, r: (b, 0, 0, r, 0)),            # emissions
        ],
        out_specs=(
            pl.BlockSpec((None, L, rb, 128), lambda b, r: (b, 0, r, 0)),   # tags
            pl.BlockSpec((None, C, rb, 128), lambda b, r: (b, 0, r, 0)),   # scores
        ),
        out_shape=(
            jax.ShapeDtypeStruct((B, L, R_pad, 128), jnp.int32),
            jax.ShapeDtypeStruct((B, C, R_pad, 128), jnp.float32),
        ),
        scratch_shapes=[pltpu.VMEM((max(L - 1, 1), C, rb, 128), jnp.int32)],
        compiler_params=pltpu.CompilerParams(
            dimension_semantics=("parallel", "parallel")),
    )(trans_flat, start, end, em)

    # (B, L, HW) -> (N, L) in torch order n = b*H*W + h*W + w.  These output
    # transposes touch only L*N*4 + C*N*4 bytes (small next to emissions); the
    # kernel-side stores stay lane-dense / unmasked.
    tags = tags4.reshape(B, L, HW_pad)[:, :, :HW].transpose(0, 2, 1).reshape(N, L)
    scores = scores4.reshape(B, C, HW_pad)[:, :, :HW].transpose(0, 2, 1).reshape(N, C)
    return tags, scores


# ------------------------- pure-numpy reference -------------------------
def _viterbi_ref(em, trans, start, end):
    # em (L, N, C), trans (C, C, L-1), start/end (C,)  -- torch _viterbi_decode math
    L, N, C = em.shape
    score = start[None, :] + em[0]
    hist = []
    for t in range(1, L):
        nxt = score[:, :, None] + trans[None, :, :, t - 1] + em[t][:, None, :]
        hist.append(nxt.argmax(axis=1).astype(np.int32))
        score = nxt.max(axis=1)
    score = score + end[None, :]
    best = score.argmax(axis=1).astype(np.int32)
    seq = [best]
    for h in reversed(hist):
        best = h[np.arange(N), best]
        seq.append(best)
    seq.reverse()
    return np.stack(seq, axis=1).astype(np.int32), score


if __name__ == "__main__":
    # Shapes consistent with the module: emissions (B, L, C, H, W), C == num_tags,
    # L == seq, transitions (num_tags, num_tags, seq-1).  N = B*H*W = 2048 ->
    # grid of (2, 1) "parallel" programs (both v7x TensorCores get work).
    B, L, C, H, W = 2, 8, 5, 32, 32
    key = jax.random.PRNGKey(0)
    k_em, k_tr, k_st, k_en = jax.random.split(key, 4)

    emissions = jax.random.normal(k_em, (B, L, C, H, W), dtype=jnp.float32)
    # learn_ind init: uniform(-0.1, 0.1), deterministic
    transitions = jax.random.uniform(k_tr, (C, C, L - 1), minval=-0.1, maxval=0.1,
                                     dtype=jnp.float32)
    start_transitions = jax.random.uniform(k_st, (C,), minval=-0.1, maxval=0.1,
                                           dtype=jnp.float32)
    end_transitions = jax.random.uniform(k_en, (C,), minval=-0.1, maxval=0.1,
                                         dtype=jnp.float32)

    tags, scores = crf_viterbi_decode(emissions, transitions,
                                      start_transitions, end_transitions)
    tags = jax.block_until_ready(tags)
    scores = jax.block_until_ready(scores)

    # Reference check (same math, numpy, torch layout).
    em_np = np.transpose(np.asarray(emissions), (1, 0, 3, 4, 2)).reshape(L, B * H * W, C)
    ref_tags, ref_scores = _viterbi_ref(em_np, np.asarray(transitions),
                                        np.asarray(start_transitions),
                                        np.asarray(end_transitions))
    assert tags.shape == (B * H * W, L)
    np.testing.assert_allclose(np.asarray(scores), ref_scores, rtol=1e-5, atol=1e-5)
    np.testing.assert_array_equal(np.asarray(tags), ref_tags)

    print("KERNEL_OK")
</pallas_src>

<mosaic_0001>
module attributes {stable_mosaic.version = 11 : i64} {
  func.func @_viterbi_kernel(%arg0: i32, %arg1: i32, %arg2: memref<175xf32, #tpu.memory_space<smem>>, %arg3: memref<5xf32, #tpu.memory_space<smem>>, %arg4: memref<5xf32, #tpu.memory_space<smem>>, %arg5: memref<1x8x5x8x128xf32, #tpu.memory_space<vmem>>, %arg6: memref<1x8x8x128xi32, #tpu.memory_space<vmem>>, %arg7: memref<1x5x8x128xf32, #tpu.memory_space<vmem>>, %arg8: memref<7x5x8x128xi32, #tpu.memory_space<vmem>>) attributes {dimension_semantics = [#tpu.dimension_semantics<parallel>, #tpu.dimension_semantics<parallel>], iteration_bounds = array<i64: 2, 1>, scalar_prefetch = 0 : i64, scratch_operands = 1 : i64, tpu.core_type = #tpu.core_type<tc>, window_params = [{transform_indices = @transform_0, window_bounds = array<i64: 175>}, {transform_indices = @transform_1, window_bounds = array<i64: 5>}, {transform_indices = @transform_2, window_bounds = array<i64: 5>}, {transform_indices = @transform_3, window_bounds = array<i64: 1, 8, 5, 8, 128>}, {transform_indices = @transform_4, window_bounds = array<i64: 1, 8, 8, 128>}, {transform_indices = @transform_5, window_bounds = array<i64: 1, 5, 8, 128>}]} {
    %c0_i32 = arith.constant 0 : i32
    %0 = vector.broadcast %c0_i32 : i32 to vector<8x128xi32>
    %c1_i32 = arith.constant 1 : i32
    %1 = vector.broadcast %c1_i32 : i32 to vector<8x128xi32>
    %c2_i32 = arith.constant 2 : i32
    %2 = vector.broadcast %c2_i32 : i32 to vector<8x128xi32>
    %c3_i32 = arith.constant 3 : i32
    %3 = vector.broadcast %c3_i32 : i32 to vector<8x128xi32>
    %c4_i32 = arith.constant 4 : i32
    %4 = vector.broadcast %c4_i32 : i32 to vector<8x128xi32>
    %c0 = arith.constant 0 : index
    %c0_0 = arith.constant 0 : index
    %c0_1 = arith.constant 0 : index
    %c0_2 = arith.constant 0 : index
    %c0_3 = arith.constant 0 : index
    %5 = vector.load %arg5[%c0, %c0_0, %c0_1, %c0_2, %c0_3] : memref<1x8x5x8x128xf32, #tpu.memory_space<vmem>>, vector<1x1x1x8x128xf32>
    %6 = vector.shape_cast %5 : vector<1x1x1x8x128xf32> to vector<8x128xf32>
    %c0_4 = arith.constant 0 : index
    %7 = memref.load %arg3[%c0_4] : memref<5xf32, #tpu.memory_space<smem>>
    %8 = vector.broadcast %7 : f32 to vector<8x128xf32>
    %9 = arith.addf %6, %8 : vector<8x128xf32>
    %c0_5 = arith.constant 0 : index
    %c0_6 = arith.constant 0 : index
    %c1 = arith.constant 1 : index
    %c0_7 = arith.constant 0 : index
    %c0_8 = arith.constant 0 : index
    %10 = vector.load %arg5[%c0_5, %c0_6, %c1, %c0_7, %c0_8] : memref<1x8x5x8x128xf32, #tpu.memory_space<vmem>>, vector<1x1x1x8x128xf32>
    %11 = vector.shape_cast %10 : vector<1x1x1x8x128xf32> to vector<8x128xf32>
    %c1_9 = arith.constant 1 : index
    %12 = memref.load %arg3[%c1_9] : memref<5xf32, #tpu.memory_space<smem>>
    %13 = vector.broadcast %12 : f32 to vector<8x128xf32>
    %14 = arith.addf %11, %13 : vector<8x128xf32>
    %c0_10 = arith.constant 0 : index
    %c0_11 = arith.constant 0 : index
    %c2 = arith.constant 2 : index
    %c0_12 = arith.constant 0 : index
    %c0_13 = arith.constant 0 : index
    %15 = vector.load %arg5[%c0_10, %c0_11, %c2, %c0_12, %c0_13] : memref<1x8x5x8x128xf32, #tpu.memory_space<vmem>>, vector<1x1x1x8x128xf32>
    %16 = vector.shape_cast %15 : vector<1x1x1x8x128xf32> to vector<8x128xf32>
    %c2_14 = arith.constant 2 : index
    %17 = memref.load %arg3[%c2_14] : memref<5xf32, #tpu.memory_space<smem>>
    %18 = vector.broadcast %17 : f32 to vector<8x128xf32>
    %19 = arith.addf %16, %18 : vector<8x128xf32>
    %c0_15 = arith.constant 0 : index
    %c0_16 = arith.constant 0 : index
    %c3 = arith.constant 3 : index
    %c0_17 = arith.constant 0 : index
    %c0_18 = arith.constant 0 : index
    %20 = vector.load %arg5[%c0_15, %c0_16, %c3, %c0_17, %c0_18] : memref<1x8x5x8x128xf32, #tpu.memory_space<vmem>>, vector<1x1x1x8x128xf32>
    %21 = vector.shape_cast %20 : vector<1x1x1x8x128xf32> to vector<8x128xf32>
    %c3_19 = arith.constant 3 : index
    %22 = memref.load %arg3[%c3_19] : memref<5xf32, #tpu.memory_space<smem>>
    %23 = vector.broadcast %22 : f32 to vector<8x128xf32>
    %24 = arith.addf %21, %23 : vector<8x128xf32>
    %c0_20 = arith.constant 0 : index
    %c0_21 = arith.constant 0 : index
    %c4 = arith.constant 4 : index
    %c0_22 = arith.constant 0 : index
    %c0_23 = arith.constant 0 : index
    %25 = vector.load %arg5[%c0_20, %c0_21, %c4, %c0_22, %c0_23] : memref<1x8x5x8x128xf32, #tpu.memory_space<vmem>>, vector<1x1x1x8x128xf32>
    %26 = vector.shape_cast %25 : vector<1x1x1x8x128xf32> to vector<8x128xf32>
    %c4_24 = arith.constant 4 : index
    %27 = memref.load %arg3[%c4_24] : memref<5xf32, #tpu.memory_space<smem>>
    %28 = vector.broadcast %27 : f32 to vector<8x128xf32>
    %29 = arith.addf %26, %28 : vector<8x128xf32>
    %c0_25 = arith.constant 0 : index
    %30 = memref.load %arg2[%c0_25] : memref<175xf32, #tpu.memory_space<smem>>
    %31 = vector.broadcast %30 : f32 to vector<8x128xf32>
    %32 = arith.addf %9, %31 : vector<8x128xf32>
    %c5 = arith.constant 5 : index
    %33 = memref.load %arg2[%c5] : memref<175xf32, #tpu.memory_space<smem>>
    %34 = vector.broadcast %33 : f32 to vector<8x128xf32>
    %35 = arith.addf %14, %34 : vector<8x128xf32>
    %36 = arith.cmpf ogt, %35, %32 : vector<8x128xf32>
    %37 = arith.select %36, %35, %32 : vector<8x128xi1>, vector<8x128xf32>
    %38 = arith.select %36, %1, %0 : vector<8x128xi1>, vector<8x128xi32>
    %c10 = arith.constant 10 : index
    %39 = memref.load %arg2[%c10] : memref<175xf32, #tpu.memory_space<smem>>
    %40 = vector.broadcast %39 : f32 to vector<8x128xf32>
    %41 = arith.addf %19, %40 : vector<8x128xf32>
    %42 = arith.cmpf ogt, %41, %37 : vector<8x128xf32>
    %43 = arith.select %42, %41, %37 : vector<8x128xi1>, vector<8x128xf32>
    %44 = arith.select %42, %2, %38 : vector<8x128xi1>, vector<8x128xi32>
    %c15 = arith.constant 15 : index
    %45 = memref.load %arg2[%c15] : memref<175xf32, #tpu.memory_space<smem>>
    %46 = vector.broadcast %45 : f32 to vector<8x128xf32>
    %47 = arith.addf %24, %46 : vector<8x128xf32>
    %48 = arith.cmpf ogt, %47, %43 : vector<8x128xf32>
    %49 = arith.select %48, %47, %43 : vector<8x128xi1>, vector<8x128xf32>
    %50 = arith.select %48, %3, %44 : vector<8x128xi1>, vector<8x128xi32>
    %c20 = arith.constant 20 : index
    %51 = memref.load %arg2[%c20] : memref<175xf32, #tpu.memory_space<smem>>
    %52 = vector.broadcast %51 : f32 to vector<8x128xf32>
    %53 = arith.addf %29, %52 : vector<8x128xf32>
    %54 = arith.cmpf ogt, %53, %49 : vector<8x128xf32>
    %55 = arith.select %54, %53, %49 : vector<8x128xi1>, vector<8x128xf32>
    %56 = arith.select %54, %4, %50 : vector<8x128xi1>, vector<8x128xi32>
    %c0_26 = arith.constant 0 : index
    %c0_27 = arith.constant 0 : index
    %c0_28 = arith.constant 0 : index
    %c0_29 = arith.constant 0 : index
    %57 = vector.load %arg8[%c0_26, %c0_27, %c0_28, %c0_29] : memref<7x5x8x128xi32, #tpu.memory_space<vmem>>, vector<1x1x8x128xi32>
    %58 = vector.shape_cast %57 : vector<1x1x8x128xi32> to vector<8x128xi32>
    %59 = vector.shape_cast %56 : vector<8x128xi32> to vector<1x1x8x128xi32>
    tpu.vector_store %arg8[%c0_26, %c0_27, %c0_28, %c0_29], %59 {strides = array<i32>} : memref<7x5x8x128xi32, #tpu.memory_space<vmem>>, vector<1x1x8x128xi32>,
    %c0_30 = arith.constant 0 : index
    %c1_31 = arith.constant 1 : index
    %c0_32 = arith.constant 0 : index
    %c0_33 = arith.constant 0 : index
    %c0_34 = arith.constant 0 : index
    %60 = vector.load %arg5[%c0_30, %c1_31, %c0_32, %c0_33, %c0_34] : memref<1x8x5x8x128xf32, #tpu.memory_space<vmem>>, vector<1x1x1x8x128xf32>
    %61 = vector.shape_cast %60 : vector<1x1x1x8x128xf32> to vector<8x128xf32>
    %62 = arith.addf %55, %61 : vector<8x128xf32>
    %c1_35 = arith.constant 1 : index
    %63 = memref.load %arg2[%c1_35] : memref<175xf32, #tpu.memory_space<smem>>
    %64 = vector.broadcast %63 : f32 to vector<8x128xf32>
    %65 = arith.addf %9, %64 : vector<8x128xf32>
    %c6 = arith.constant 6 : index
    %66 = memref.load %arg2[%c6] : memref<175xf32, #tpu.memory_space<smem>>
    %67 = vector.broadcast %66 : f32 to vector<8x128xf32>
    %68 = arith.addf %14, %67 : vector<8x128xf32>
    %69 = arith.cmpf ogt, %68, %65 : vector<8x128xf32>
    %70 = arith.select %69, %68, %65 : vector<8x128xi1>, vector<8x128xf32>
    %71 = arith.select %69, %1, %0 : vector<8x128xi1>, vector<8x128xi32>
    %c11 = arith.constant 11 : index
    %72 = memref.load %arg2[%c11] : memref<175xf32, #tpu.memory_space<smem>>
    %73 = vector.broadcast %72 : f32 to vector<8x128xf32>
    %74 = arith.addf %19, %73 : vector<8x128xf32>
    %75 = arith.cmpf ogt, %74, %70 : vector<8x128xf32>
    %76 = arith.select %75, %74, %70 : vector<8x128xi1>, vector<8x128xf32>
    %77 = arith.select %75, %2, %71 : vector<8x128xi1>, vector<8x128xi32>
    %c16 = arith.constant 16 : index
    %78 = memref.load %arg2[%c16] : memref<175xf32, #tpu.memory_space<smem>>
    %79 = vector.broadcast %78 : f32 to vector<8x128xf32>
    %80 = arith.addf %24, %79 : vector<8x128xf32>
    %81 = arith.cmpf ogt, %80, %76 : vector<8x128xf32>
    %82 = arith.select %81, %80, %76 : vector<8x128xi1>, vector<8x128xf32>
    %83 = arith.select %81, %3, %77 : vector<8x128xi1>, vector<8x128xi32>
    %c21 = arith.constant 21 : index
    %84 = memref.load %arg2[%c21] : memref<175xf32, #tpu.memory_space<smem>>
    %85 = vector.broadcast %84 : f32 to vector<8x128xf32>
    %86 = arith.addf %29, %85 : vector<8x128xf32>
    %87 = arith.cmpf ogt, %86, %82 : vector<8x128xf32>
    %88 = arith.select %87, %86, %82 : vector<8x128xi1>, vector<8x128xf32>
    %89 = arith.select %87, %4, %83 : vector<8x128xi1>, vector<8x128xi32>
    %c0_36 = arith.constant 0 : index
    %c1_37 = arith.constant 1 : index
    %c0_38 = arith.constant 0 : index
    %c0_39 = arith.constant 0 : index
    %90 = vector.load %arg8[%c0_36, %c1_37, %c0_38, %c0_39] : memref<7x5x8x128xi32, #tpu.memory_space<vmem>>, vector<1x1x8x128xi32>
    %91 = vector.shape_cast %90 : vector<1x1x8x128xi32> to vector<8x128xi32>
    %92 = vector.shape_cast %89 : vector<8x128xi32> to vector<1x1x8x128xi32>
    tpu.vector_store %arg8[%c0_36, %c1_37, %c0_38, %c0_39], %92 {strides = array<i32>} : memref<7x5x8x128xi32, #tpu.memory_space<vmem>>, vector<1x1x8x128xi32>,
    %c0_40 = arith.constant 0 : index
    %c1_41 = arith.constant 1 : index
    %c1_42 = arith.constant 1 : index
    %c0_43 = arith.constant 0 : index
    %c0_44 = arith.constant 0 : index
    %93 = vector.load %arg5[%c0_40, %c1_41, %c1_42, %c0_43, %c0_44] : memref<1x8x5x8x128xf32, #tpu.memory_space<vmem>>, vector<1x1x1x8x128xf32>
    %94 = vector.shape_cast %93 : vector<1x1x1x8x128xf32> to vector<8x128xf32>
    %95 = arith.addf %88, %94 : vector<8x128xf32>
    %c2_45 = arith.constant 2 : index
    %96 = memref.load %arg2[%c2_45] : memref<175xf32, #tpu.memory_space<smem>>
    %97 = vector.broadcast %96 : f32 to vector<8x128xf32>
    %98 = arith.addf %9, %97 : vector<8x128xf32>
    %c7 = arith.constant 7 : index
    %99 = memref.load %arg2[%c7] : memref<175xf32, #tpu.memory_space<smem>>
    %100 = vector.broadcast %99 : f32 to vector<8x128xf32>
    %101 = arith.addf %14, %100 : vector<8x128xf32>
    %102 = arith.cmpf ogt, %101, %98 : vector<8x128xf32>
    %103 = arith.select %102, %101, %98 : vector<8x128xi1>, vector<8x128xf32>
    %104 = arith.select %102, %1, %0 : vector<8x128xi1>, vector<8x128xi32>
    %c12 = arith.constant 12 : index
    %105 = memref.load %arg2[%c12] : memref<175xf32, #tpu.memory_space<smem>>
    %106 = vector.broadcast %105 : f32 to vector<8x128xf32>
    %107 = arith.addf %19, %106 : vector<8x128xf32>
    %108 = arith.cmpf ogt, %107, %103 : vector<8x128xf32>
    %109 = arith.select %108, %107, %103 : vector<8x128xi1>, vector<8x128xf32>
    %110 = arith.select %108, %2, %104 : vector<8x128xi1>, vector<8x128xi32>
    %c17 = arith.constant 17 : index
    %111 = memref.load %arg2[%c17] : memref<175xf32, #tpu.memory_space<smem>>
    %112 = vector.broadcast %111 : f32 to vector<8x128xf32>
    %113 = arith.addf %24, %112 : vector<8x128xf32>
    %114 = arith.cmpf ogt, %113, %109 : vector<8x128xf32>
    %115 = arith.select %114, %113, %109 : vector<8x128xi1>, vector<8x128xf32>
    %116 = arith.select %114, %3, %110 : vector<8x128xi1>, vector<8x128xi32>
    %c22 = arith.constant 22 : index
    %117 = memref.load %arg2[%c22] : memref<175xf32, #tpu.memory_space<smem>>
    %118 = vector.broadcast %117 : f32 to vector<8x128xf32>
    %119 = arith.addf %29, %118 : vector<8x128xf32>
    %120 = arith.cmpf ogt, %119, %115 : vector<8x128xf32>
    %121 = arith.select %120, %119, %115 : vector<8x128xi1>, vector<8x128xf32>
    %122 = arith.select %120, %4, %116 : vector<8x128xi1>, vector<8x128xi32>
    %c0_46 = arith.constant 0 : index
    %c2_47 = arith.constant 2 : index
    %c0_48 = arith.constant 0 : index
    %c0_49 = arith.constant 0 : index
    %123 = vector.load %arg8[%c0_46, %c2_47, %c0_48, %c0_49] : memref<7x5x8x128xi32, #tpu.memory_space<vmem>>, vector<1x1x8x128xi32>
    %124 = vector.shape_cast %123 : vector<1x1x8x128xi32> to vector<8x128xi32>
    %125 = vector.shape_cast %122 : vector<8x128xi32> to vector<1x1x8x128xi32>
    tpu.vector_store %arg8[%c0_46, %c2_47, %c0_48, %c0_49], %125 {strides = array<i32>} : memref<7x5x8x128xi32, #tpu.memory_space<vmem>>, vector<1x1x8x128xi32>,
    %c0_50 = arith.constant 0 : index
    %c1_51 = arith.constant 1 : index
    %c2_52 = arith.constant 2 : index
    %c0_53 = arith.constant 0 : index
    %c0_54 = arith.constant 0 : index
    %126 = vector.load %arg5[%c0_50, %c1_51, %c2_52, %c0_53, %c0_54] : memref<1x8x5x8x128xf32, #tpu.memory_space<vmem>>, vector<1x1x1x8x128xf32>
    %127 = vector.shape_cast %126 : vector<1x1x1x8x128xf32> to vector<8x128xf32>
    %128 = arith.addf %121, %127 : vector<8x128xf32>
    %c3_55 = arith.constant 3 : index
    %129 = memref.load %arg2[%c3_55] : memref<175xf32, #tpu.memory_space<smem>>
    %130 = vector.broadcast %129 : f32 to vector<8x128xf32>
    %131 = arith.addf %9, %130 : vector<8x128xf32>
    %c8 = arith.constant 8 : index
    %132 = memref.load %arg2[%c8] : memref<175xf32, #tpu.memory_space<smem>>
    %133 = vector.broadcast %132 : f32 to vector<8x128xf32>
    %134 = arith.addf %14, %133 : vector<8x128xf32>
    %135 = arith.cmpf ogt, %134, %131 : vector<8x128xf32>
    %136 = arith.select %135, %134, %131 : vector<8x128xi1>, vector<8x128xf32>
    %137 = arith.select %135, %1, %0 : vector<8x128xi1>, vector<8x128xi32>
    %c13 = arith.constant 13 : index
    %138 = memref.load %arg2[%c13] : memref<175xf32, #tpu.memory_space<smem>>
    %139 = vector.broadcast %138 : f32 to vector<8x128xf32>
    %140 = arith.addf %19, %139 : vector<8x128xf32>
    %141 = arith.cmpf ogt, %140, %136 : vector<8x128xf32>
    %142 = arith.select %141, %140, %136 : vector<8x128xi1>, vector<8x128xf32>
    %143 = arith.select %141, %2, %137 : vector<8x128xi1>, vector<8x128xi32>
    %c18 = arith.constant 18 : index
    %144 = memref.load %arg2[%c18] : memref<175xf32, #tpu.memory_space<smem>>
    %145 = vector.broadcast %144 : f32 to vector<8x128xf32>
    %146 = arith.addf %24, %145 : vector<8x128xf32>
    %147 = arith.cmpf ogt, %146, %142 : vector<8x128xf32>
    %148 = arith.select %147, %146, %142 : vector<8x128xi1>, vector<8x128xf32>
    %149 = arith.select %147, %3, %143 : vector<8x128xi1>, vector<8x128xi32>
    %c23 = arith.constant 23 : index
    %150 = memref.load %arg2[%c23] : memref<175xf32, #tpu.memory_space<smem>>
    %151 = vector.broadcast %150 : f32 to vector<8x128xf32>
    %152 = arith.addf %29, %151 : vector<8x128xf32>
    %153 = arith.cmpf ogt, %152, %148 : vector<8x128xf32>
    %154 = arith.select %153, %152, %148 : vector<8x128xi1>, vector<8x128xf32>
    %155 = arith.select %153, %4, %149 : vector<8x128xi1>, vector<8x128xi32>
    %c0_56 = arith.constant 0 : index
    %c3_57 = arith.constant 3 : index
    %c0_58 = arith.constant 0 : index
    %c0_59 = arith.constant 0 : index
    %156 = vector.load %arg8[%c0_56, %c3_57, %c0_58, %c0_59] : memref<7x5x8x128xi32, #tpu.memory_space<vmem>>, vector<1x1x8x128xi32>
    %157 = vector.shape_cast %156 : vector<1x1x8x128xi32> to vector<8x128xi32>
    %158 = vector.shape_cast %155 : vector<8x128xi32> to vector<1x1x8x128xi32>
    tpu.vector_store %arg8[%c0_56, %c3_57, %c0_58, %c0_59], %158 {strides = array<i32>} : memref<7x5x8x128xi32, #tpu.memory_space<vmem>>, vector<1x1x8x128xi32>,
    %c0_60 = arith.constant 0 : index
    %c1_61 = arith.constant 1 : index
    %c3_62 = arith.constant 3 : index
    %c0_63 = arith.constant 0 : index
    %c0_64 = arith.constant 0 : index
    %159 = vector.load %arg5[%c0_60, %c1_61, %c3_62, %c0_63, %c0_64] : memref<1x8x5x8x128xf32, #tpu.memory_space<vmem>>, vector<1x1x1x8x128xf32>
    %160 = vector.shape_cast %159 : vector<1x1x1x8x128xf32> to vector<8x128xf32>
    %161 = arith.addf %154, %160 : vector<8x128xf32>
    %c4_65 = arith.constant 4 : index
    %162 = memref.load %arg2[%c4_65] : memref<175xf32, #tpu.memory_space<smem>>
    %163 = vector.broadcast %162 : f32 to vector<8x128xf32>
    %164 = arith.addf %9, %163 : vector<8x128xf32>
    %c9 = arith.constant 9 : index
    %165 = memref.load %arg2[%c9] : memref<175xf32, #tpu.memory_space<smem>>
    %166 = vector.broadcast %165 : f32 to vector<8x128xf32>
    %167 = arith.addf %14, %166 : vector<8x128xf32>
    %168 = arith.cmpf ogt, %167, %164 : vector<8x128xf32>
    %169 = arith.select %168, %167, %164 : vector<8x128xi1>, vector<8x128xf32>
    %170 = arith.select %168, %1, %0 : vector<8x128xi1>, vector<8x128xi32>
    %c14 = arith.constant 14 : index
    %171 = memref.load %arg2[%c14] : memref<175xf32, #tpu.memory_space<smem>>
    %172 = vector.broadcast %171 : f32 to vector<8x128xf32>
    %173 = arith.addf %19, %172 : vector<8x128xf32>
    %174 = arith.cmpf ogt, %173, %169 : vector<8x128xf32>
    %175 = arith.select %174, %173, %169 : vector<8x128xi1>, vector<8x128xf32>
    %176 = arith.select %174, %2, %170 : vector<8x128xi1>, vector<8x128xi32>
    %c19 = arith.constant 19 : index
    %177 = memref.load %arg2[%c19] : memref<175xf32, #tpu.memory_space<smem>>
    %178 = vector.broadcast %177 : f32 to vector<8x128xf32>
    %179 = arith.addf %24, %178 : vector<8x128xf32>
    %180 = arith.cmpf ogt, %179, %175 : vector<8x128xf32>
    %181 = arith.select %180, %179, %175 : vector<8x128xi1>, vector<8x128xf32>
    %182 = arith.select %180, %3, %176 : vector<8x128xi1>, vector<8x128xi32>
    %c24 = arith.constant 24 : index
    %183 = memref.load %arg2[%c24] : memref<175xf32, #tpu.memory_space<smem>>
    %184 = vector.broadcast %183 : f32 to vector<8x128xf32>
    %185 = arith.addf %29, %184 : vector<8x128xf32>
    %186 = arith.cmpf ogt, %185, %181 : vector<8x128xf32>
    %187 = arith.select %186, %185, %181 : vector<8x128xi1>, vector<8x128xf32>
    %188 = arith.select %186, %4, %182 : vector<8x128xi1>, vector<8x128xi32>
    %c0_66 = arith.constant 0 : index
    %c4_67 = arith.constant 4 : index
    %c0_68 = arith.constant 0 : index
    %c0_69 = arith.constant 0 : index
    %189 = vector.load %arg8[%c0_66, %c4_67, %c0_68, %c0_69] : memref<7x5x8x128xi32, #tpu.memory_space<vmem>>, vector<1x1x8x128xi32>
    %190 = vector.shape_cast %189 : vector<1x1x8x128xi32> to vector<8x128xi32>
    %191 = vector.shape_cast %188 : vector<8x128xi32> to vector<1x1x8x128xi32>
    tpu.vector_store %arg8[%c0_66, %c4_67, %c0_68, %c0_69], %191 {strides = array<i32>} : memref<7x5x8x128xi32, #tpu.memory_space<vmem>>, vector<1x1x8x128xi32>,
    %c0_70 = arith.constant 0 : index
    %c1_71 = arith.constant 1 : index
    %c4_72 = arith.constant 4 : index
    %c0_73 = arith.constant 0 : index
    %c0_74 = arith.constant 0 : index
    %192 = vector.load %arg5[%c0_70, %c1_71, %c4_72, %c0_73, %c0_74] : memref<1x8x5x8x128xf32, #tpu.memory_space<vmem>>, vector<1x1x1x8x128xf32>
    %193 = vector.shape_cast %192 : vector<1x1x1x8x128xf32> to vector<8x128xf32>
    %194 = arith.addf %187, %193 : vector<8x128xf32>
    %c25 = arith.constant 25 : index
    %195 = memref.load %arg2[%c25] : memref<175xf32, #tpu.memory_space<smem>>
    %196 = vector.broadcast %195 : f32 to vector<8x128xf32>
    %197 = arith.addf %62, %196 : vector<8x128xf32>
    %c30 = arith.constant 30 : index
    %198 = memref.load %arg2[%c30] : memref<175xf32, #tpu.memory_space<smem>>
    %199 = vector.broadcast %198 : f32 to vector<8x128xf32>
    %200 = arith.addf %95, %199 : vector<8x128xf32>
    %201 = arith.cmpf ogt, %200, %197 : vector<8x128xf32>
    %202 = arith.select %201, %200, %197 : vector<8x128xi1>, vector<8x128xf32>
    %203 = arith.select %201, %1, %0 : vector<8x128xi1>, vector<8x128xi32>
    %c35 = arith.constant 35 : index
    %204 = memref.load %arg2[%c35] : memref<175xf32, #tpu.memory_space<smem>>
    %205 = vector.broadcast %204 : f32 to vector<8x128xf32>
    %206 = arith.addf %128, %205 : vector<8x128xf32>
    %207 = arith.cmpf ogt, %206, %202 : vector<8x128xf32>
    %208 = arith.select %207, %206, %202 : vector<8x128xi1>, vector<8x128xf32>
    %209 = arith.select %207, %2, %203 : vector<8x128xi1>, vector<8x128xi32>
    %c40 = arith.constant 40 : index
    %210 = memref.load %arg2[%c40] : memref<175xf32, #tpu.memory_space<smem>>
    %211 = vector.broadcast %210 : f32 to vector<8x128xf32>
    %212 = arith.addf %161, %211 : vector<8x128xf32>
    %213 = arith.cmpf ogt, %212, %208 : vector<8x128xf32>
    %214 = arith.select %213, %212, %208 : vector<8x128xi1>, vector<8x128xf32>
    %215 = arith.select %213, %3, %209 : vector<8x128xi1>, vector<8x128xi32>
    %c45 = arith.constant 45 : index
    %216 = memref.load %arg2[%c45] : memref<175xf32, #tpu.memory_space<smem>>
    %217 = vector.broadcast %216 : f32 to vector<8x128xf32>
    %218 = arith.addf %194, %217 : vector<8x128xf32>
    %219 = arith.cmpf ogt, %218, %214 : vector<8x128xf32>
    %220 = arith.select %219, %218, %214 : vector<8x128xi1>, vector<8x128xf32>
    %221 = arith.select %219, %4, %215 : vector<8x128xi1>, vector<8x128xi32>
    %c1_75 = arith.constant 1 : index
    %c0_76 = arith.constant 0 : index
    %c0_77 = arith.constant 0 : index
    %c0_78 = arith.constant 0 : index
    %222 = vector.load %arg8[%c1_75, %c0_76, %c0_77, %c0_78] : memref<7x5x8x128xi32, #tpu.memory_space<vmem>>, vector<1x1x8x128xi32>
    %223 = vector.shape_cast %222 : vector<1x1x8x128xi32> to vector<8x128xi32>
    %224 = vector.shape_cast %221 : vector<8x128xi32> to vector<1x1x8x128xi32>
    tpu.vector_store %arg8[%c1_75, %c0_76, %c0_77, %c0_78], %224 {strides = array<i32>} : memref<7x5x8x128xi32, #tpu.memory_space<vmem>>, vector<1x1x8x128xi32>,
    %c0_79 = arith.constant 0 : index
    %c2_80 = arith.constant 2 : index
    %c0_81 = arith.constant 0 : index
    %c0_82 = arith.constant 0 : index
    %c0_83 = arith.constant 0 : index
    %225 = vector.load %arg5[%c0_79, %c2_80, %c0_81, %c0_82, %c0_83] : memref<1x8x5x8x128xf32, #tpu.memory_space<vmem>>, vector<1x1x1x8x128xf32>
    %226 = vector.shape_cast %225 : vector<1x1x1x8x128xf32> to vector<8x128xf32>
    %227 = arith.addf %220, %226 : vector<8x128xf32>
    %c26 = arith.constant 26 : index
    %228 = memref.load %arg2[%c26] : memref<175xf32, #tpu.memory_space<smem>>
    %229 = vector.broadcast %228 : f32 to vector<8x128xf32>
    %230 = arith.addf %62, %229 : vector<8x128xf32>
    %c31 = arith.constant 31 : index
    %231 = memref.load %arg2[%c31] : memref<175xf32, #tpu.memory_space<smem>>
    %232 = vector.broadcast %231 : f32 to vector<8x128xf32>
    %233 = arith.addf %95, %232 : vector<8x128xf32>
    %234 = arith.cmpf ogt, %233, %230 : vector<8x128xf32>
    %235 = arith.select %234, %233, %230 : vector<8x128xi1>, vector<8x128xf32>
    %236 = arith.select %234, %1, %0 : vector<8x128xi1>, vector<8x128xi32>
    %c36 = arith.constant 36 : index
    %237 = memref.load %arg2[%c36] : memref<175xf32, #tpu.memory_space<smem>>
    %238 = vector.broadcast %237 : f32 to vector<8x128xf32>
    %239 = arith.addf %128, %238 : vector<8x128xf32>
    %240 = arith.cmpf ogt, %239, %235 : vector<8x128xf32>
    %241 = arith.select %240, %239, %235 : vector<8x128xi1>, vector<8x128xf32>
    %242 = arith.select %240, %2, %236 : vector<8x128xi1>, vector<8x128xi32>
    %c41 = arith.constant 41 : index
    %243 = memref.load %arg2[%c41] : memref<175xf32, #tpu.memory_space<smem>>
    %244 = vector.broadcast %243 : f32 to vector<8x128xf32>
    %245 = arith.addf %161, %244 : vector<8x128xf32>
    %246 = arith.cmpf ogt, %245, %241 : vector<8x128xf32>
    %247 = arith.select %246, %245, %241 : vector<8x128xi1>, vector<8x128xf32>
    %248 = arith.select %246, %3, %242 : vector<8x128xi1>, vector<8x128xi32>
    %c46 = arith.constant 46 : index
    %249 = memref.load %arg2[%c46] : memref<175xf32, #tpu.memory_space<smem>>
    %250 = vector.broadcast %249 : f32 to vector<8x128xf32>
    %251 = arith.addf %194, %250 : vector<8x128xf32>
    %252 = arith.cmpf ogt, %251, %247 : vector<8x128xf32>
    %253 = arith.select %252, %251, %247 : vector<8x128xi1>, vector<8x128xf32>
    %254 = arith.select %252, %4, %248 : vector<8x128xi1>, vector<8x128xi32>
    %c1_84 = arith.constant 1 : index
    %c1_85 = arith.constant 1 : index
    %c0_86 = arith.constant 0 : index
    %c0_87 = arith.constant 0 : index
    %255 = vector.load %arg8[%c1_84, %c1_85, %c0_86, %c0_87] : memref<7x5x8x128xi32, #tpu.memory_space<vmem>>, vector<1x1x8x128xi32>
    %256 = vector.shape_cast %255 : vector<1x1x8x128xi32> to vector<8x128xi32>
    %257 = vector.shape_cast %254 : vector<8x128xi32> to vector<1x1x8x128xi32>
    tpu.vector_store %arg8[%c1_84, %c1_85, %c0_86, %c0_87], %257 {strides = array<i32>} : memref<7x5x8x128xi32, #tpu.memory_space<vmem>>, vector<1x1x8x128xi32>,
    %c0_88 = arith.constant 0 : index
    %c2_89 = arith.constant 2 : index
    %c1_90 = arith.constant 1 : index
    %c0_91 = arith.constant 0 : index
    %c0_92 = arith.constant 0 : index
    %258 = vector.load %arg5[%c0_88, %c2_89, %c1_90, %c0_91, %c0_92] : memref<1x8x5x8x128xf32, #tpu.memory_space<vmem>>, vector<1x1x1x8x128xf32>
    %259 = vector.shape_cast %258 : vector<1x1x1x8x128xf32> to vector<8x128xf32>
    %260 = arith.addf %253, %259 : vector<8x128xf32>
    %c27 = arith.constant 27 : index
    %261 = memref.load %arg2[%c27] : memref<175xf32, #tpu.memory_space<smem>>
    %262 = vector.broadcast %261 : f32 to vector<8x128xf32>
    %263 = arith.addf %62, %262 : vector<8x128xf32>
    %c32 = arith.constant 32 : index
    %264 = memref.load %arg2[%c32] : memref<175xf32, #tpu.memory_space<smem>>
    %265 = vector.broadcast %264 : f32 to vector<8x128xf32>
    %266 = arith.addf %95, %265 : vector<8x128xf32>
    %267 = arith.cmpf ogt, %266, %263 : vector<8x128xf32>
    %268 = arith.select %267, %266, %263 : vector<8x128xi1>, vector<8x128xf32>
    %269 = arith.select %267, %1, %0 : vector<8x128xi1>, vector<8x128xi32>
    %c37 = arith.constant 37 : index
    %270 = memref.load %arg2[%c37] : memref<175xf32, #tpu.memory_space<smem>>
    %271 = vector.broadcast %270 : f32 to vector<8x128xf32>
    %272 = arith.addf %128, %271 : vector<8x128xf32>
    %273 = arith.cmpf ogt, %272, %268 : vector<8x128xf32>
    %274 = arith.select %273, %272, %268 : vector<8x128xi1>, vector<8x128xf32>
    %275 = arith.select %273, %2, %269 : vector<8x128xi1>, vector<8x128xi32>
    %c42 = arith.constant 42 : index
    %276 = memref.load %arg2[%c42] : memref<175xf32, #tpu.memory_space<smem>>
    %277 = vector.broadcast %276 : f32 to vector<8x128xf32>
    %278 = arith.addf %161, %277 : vector<8x128xf32>
    %279 = arith.cmpf ogt, %278, %274 : vector<8x128xf32>
    %280 = arith.select %279, %278, %274 : vector<8x128xi1>, vector<8x128xf32>
    %281 = arith.select %279, %3, %275 : vector<8x128xi1>, vector<8x128xi32>
    %c47 = arith.constant 47 : index
    %282 = memref.load %arg2[%c47] : memref<175xf32, #tpu.memory_space<smem>>
    %283 = vector.broadcast %282 : f32 to vector<8x128xf32>
    %284 = arith.addf %194, %283 : vector<8x128xf32>
    %285 = arith.cmpf ogt, %284, %280 : vector<8x128xf32>
    %286 = arith.select %285, %284, %280 : vector<8x128xi1>, vector<8x128xf32>
    %287 = arith.select %285, %4, %281 : vector<8x128xi1>, vector<8x128xi32>
    %c1_93 = arith.constant 1 : index
    %c2_94 = arith.constant 2 : index
    %c0_95 = arith.constant 0 : index
    %c0_96 = arith.constant 0 : index
    %288 = vector.load %arg8[%c1_93, %c2_94, %c0_95, %c0_96] : memref<7x5x8x128xi32, #tpu.memory_space<vmem>>, vector<1x1x8x128xi32>
    %289 = vector.shape_cast %288 : vector<1x1x8x128xi32> to vector<8x128xi32>
    %290 = vector.shape_cast %287 : vector<8x128xi32> to vector<1x1x8x128xi32>
    tpu.vector_store %arg8[%c1_93, %c2_94, %c0_95, %c0_96], %290 {strides = array<i32>} : memref<7x5x8x128xi32, #tpu.memory_space<vmem>>, vector<1x1x8x128xi32>,
    %c0_97 = arith.constant 0 : index
    %c2_98 = arith.constant 2 : index
    %c2_99 = arith.constant 2 : index
    %c0_100 = arith.constant 0 : index
    %c0_101 = arith.constant 0 : index
    %291 = vector.load %arg5[%c0_97, %c2_98, %c2_99, %c0_100, %c0_101] : memref<1x8x5x8x128xf32, #tpu.memory_space<vmem>>, vector<1x1x1x8x128xf32>
    %292 = vector.shape_cast %291 : vector<1x1x1x8x128xf32> to vector<8x128xf32>
    %293 = arith.addf %286, %292 : vector<8x128xf32>
    %c28 = arith.constant 28 : index
    %294 = memref.load %arg2[%c28] : memref<175xf32, #tpu.memory_space<smem>>
    %295 = vector.broadcast %294 : f32 to vector<8x128xf32>
    %296 = arith.addf %62, %295 : vector<8x128xf32>
    %c33 = arith.constant 33 : index
    %297 = memref.load %arg2[%c33] : memref<175xf32, #tpu.memory_space<smem>>
    %298 = vector.broadcast %297 : f32 to vector<8x128xf32>
    %299 = arith.addf %95, %298 : vector<8x128xf32>
    %300 = arith.cmpf ogt, %299, %296 : vector<8x128xf32>
    %301 = arith.select %300, %299, %296 : vector<8x128xi1>, vector<8x128xf32>
    %302 = arith.select %300, %1, %0 : vector<8x128xi1>, vector<8x128xi32>
    %c38 = arith.constant 38 : index
    %303 = memref.load %arg2[%c38] : memref<175xf32, #tpu.memory_space<smem>>
    %304 = vector.broadcast %303 : f32 to vector<8x128xf32>
    %305 = arith.addf %128, %304 : vector<8x128xf32>
    %306 = arith.cmpf ogt, %305, %301 : vector<8x128xf32>
    %307 = arith.select %306, %305, %301 : vector<8x128xi1>, vector<8x128xf32>
    %308 = arith.select %306, %2, %302 : vector<8x128xi1>, vector<8x128xi32>
    %c43 = arith.constant 43 : index
    %309 = memref.load %arg2[%c43] : memref<175xf32, #tpu.memory_space<smem>>
    %310 = vector.broadcast %309 : f32 to vector<8x128xf32>
    %311 = arith.addf %161, %310 : vector<8x128xf32>
    %312 = arith.cmpf ogt, %311, %307 : vector<8x128xf32>
    %313 = arith.select %312, %311, %307 : vector<8x128xi1>, vector<8x128xf32>
    %314 = arith.select %312, %3, %308 : vector<8x128xi1>, vector<8x128xi32>
    %c48 = arith.constant 48 : index
    %315 = memref.load %arg2[%c48] : memref<175xf32, #tpu.memory_space<smem>>
    %316 = vector.broadcast %315 : f32 to vector<8x128xf32>
    %317 = arith.addf %194, %316 : vector<8x128xf32>
    %318 = arith.cmpf ogt, %317, %313 : vector<8x128xf32>
    %319 = arith.select %318, %317, %313 : vector<8x128xi1>, vector<8x128xf32>
    %320 = arith.select %318, %4, %314 : vector<8x128xi1>, vector<8x128xi32>
    %c1_102 = arith.constant 1 : index
    %c3_103 = arith.constant 3 : index
    %c0_104 = arith.constant 0 : index
    %c0_105 = arith.constant 0 : index
    %321 = vector.load %arg8[%c1_102, %c3_103, %c0_104, %c0_105] : memref<7x5x8x128xi32, #tpu.memory_space<vmem>>, vector<1x1x8x128xi32>
    %322 = vector.shape_cast %321 : vector<1x1x8x128xi32> to vector<8x128xi32>
    %323 = vector.shape_cast %320 : vector<8x128xi32> to vector<1x1x8x128xi32>
    tpu.vector_store %arg8[%c1_102, %c3_103, %c0_104, %c0_105], %323 {strides = array<i32>} : memref<7x5x8x128xi32, #tpu.memory_space<vmem>>, vector<1x1x8x128xi32>,
    %c0_106 = arith.constant 0 : index
    %c2_107 = arith.constant 2 : index
    %c3_108 = arith.constant 3 : index
    %c0_109 = arith.constant 0 : index
    %c0_110 = arith.constant 0 : index
    %324 = vector.load %arg5[%c0_106, %c2_107, %c3_108, %c0_109, %c0_110] : memref<1x8x5x8x128xf32, #tpu.memory_space<vmem>>, vector<1x1x1x8x128xf32>
    %325 = vector.shape_cast %324 : vector<1x1x1x8x128xf32> to vector<8x128xf32>
    %326 = arith.addf %319, %325 : vector<8x128xf32>
    %c29 = arith.constant 29 : index
    %327 = memref.load %arg2[%c29] : memref<175xf32, #tpu.memory_space<smem>>
    %328 = vector.broadcast %327 : f32 to vector<8x128xf32>
    %329 = arith.addf %62, %328 : vector<8x128xf32>
    %c34 = arith.constant 34 : index
    %330 = memref.load %arg2[%c34] : memref<175xf32, #tpu.memory_space<smem>>
    %331 = vector.broadcast %330 : f32 to vector<8x128xf32>
    %332 = arith.addf %95, %331 : vector<8x128xf32>
    %333 = arith.cmpf ogt, %332, %329 : vector<8x128xf32>
    %334 = arith.select %333, %332, %329 : vector<8x128xi1>, vector<8x128xf32>
    %335 = arith.select %333, %1, %0 : vector<8x128xi1>, vector<8x128xi32>
    %c39 = arith.constant 39 : index
    %336 = memref.load %arg2[%c39] : memref<175xf32, #tpu.memory_space<smem>>
    %337 = vector.broadcast %336 : f32 to vector<8x128xf32>
    %338 = arith.addf %128, %337 : vector<8x128xf32>
    %339 = arith.cmpf ogt, %338, %334 : vector<8x128xf32>
    %340 = arith.select %339, %338, %334 : vector<8x128xi1>, vector<8x128xf32>
    %341 = arith.select %339, %2, %335 : vector<8x128xi1>, vector<8x128xi32>
    %c44 = arith.constant 44 : index
    %342 = memref.load %arg2[%c44] : memref<175xf32, #tpu.memory_space<smem>>
    %343 = vector.broadcast %342 : f32 to vector<8x128xf32>
    %344 = arith.addf %161, %343 : vector<8x128xf32>
    %345 = arith.cmpf ogt, %344, %340 : vector<8x128xf32>
    %346 = arith.select %345, %344, %340 : vector<8x128xi1>, vector<8x128xf32>
    %347 = arith.select %345, %3, %341 : vector<8x128xi1>, vector<8x128xi32>
    %c49 = arith.constant 49 : index
    %348 = memref.load %arg2[%c49] : memref<175xf32, #tpu.memory_space<smem>>
    %349 = vector.broadcast %348 : f32 to vector<8x128xf32>
    %350 = arith.addf %194, %349 : vector<8x128xf32>
    %351 = arith.cmpf ogt, %350, %346 : vector<8x128xf32>
    %352 = arith.select %351, %350, %346 : vector<8x128xi1>, vector<8x128xf32>
    %353 = arith.select %351, %4, %347 : vector<8x128xi1>, vector<8x128xi32>
    %c1_111 = arith.constant 1 : index
    %c4_112 = arith.constant 4 : index
    %c0_113 = arith.constant 0 : index
    %c0_114 = arith.constant 0 : index
    %354 = vector.load %arg8[%c1_111, %c4_112, %c0_113, %c0_114] : memref<7x5x8x128xi32, #tpu.memory_space<vmem>>, vector<1x1x8x128xi32>
    %355 = vector.shape_cast %354 : vector<1x1x8x128xi32> to vector<8x128xi32>
    %356 = vector.shape_cast %353 : vector<8x128xi32> to vector<1x1x8x128xi32>
    tpu.vector_store %arg8[%c1_111, %c4_112, %c0_113, %c0_114], %356 {strides = array<i32>} : memref<7x5x8x128xi32, #tpu.memory_space<vmem>>, vector<1x1x8x128xi32>,
    %c0_115 = arith.constant 0 : index
    %c2_116 = arith.constant 2 : index
    %c4_117 = arith.constant 4 : index
    %c0_118 = arith.constant 0 : index
    %c0_119 = arith.constant 0 : index
    %357 = vector.load %arg5[%c0_115, %c2_116, %c4_117, %c0_118, %c0_119] : memref<1x8x5x8x128xf32, #tpu.memory_space<vmem>>, vector<1x1x1x8x128xf32>
    %358 = vector.shape_cast %357 : vector<1x1x1x8x128xf32> to vector<8x128xf32>
    %359 = arith.addf %352, %358 : vector<8x128xf32>
    %c50 = arith.constant 50 : index
    %360 = memref.load %arg2[%c50] : memref<175xf32, #tpu.memory_space<smem>>
    %361 = vector.broadcast %360 : f32 to vector<8x128xf32>
    %362 = arith.addf %227, %361 : vector<8x128xf32>
    %c55 = arith.constant 55 : index
    %363 = memref.load %arg2[%c55] : memref<175xf32, #tpu.memory_space<smem>>
    %364 = vector.broadcast %363 : f32 to vector<8x128xf32>
    %365 = arith.addf %260, %364 : vector<8x128xf32>
    %366 = arith.cmpf ogt, %365, %362 : vector<8x128xf32>
    %367 = arith.select %366, %365, %362 : vector<8x128xi1>, vector<8x128xf32>
    %368 = arith.select %366, %1, %0 : vector<8x128xi1>, vector<8x128xi32>
    %c60 = arith.constant 60 : index
    %369 = memref.load %arg2[%c60] : memref<175xf32, #tpu.memory_space<smem>>
    %370 = vector.broadcast %369 : f32 to vector<8x128xf32>
    %371 = arith.addf %293, %370 : vector<8x128xf32>
    %372 = arith.cmpf ogt, %371, %367 : vector<8x128xf32>
    %373 = arith.select %372, %371, %367 : vector<8x128xi1>, vector<8x128xf32>
    %374 = arith.select %372, %2, %368 : vector<8x128xi1>, vector<8x128xi32>
    %c65 = arith.constant 65 : index
    %375 = memref.load %arg2[%c65] : memref<175xf32, #tpu.memory_space<smem>>
    %376 = vector.broadcast %375 : f32 to vector<8x128xf32>
    %377 = arith.addf %326, %376 : vector<8x128xf32>
    %378 = arith.cmpf ogt, %377, %373 : vector<8x128xf32>
    %379 = arith.select %378, %377, %373 : vector<8x128xi1>, vector<8x128xf32>
    %380 = arith.select %378, %3, %374 : vector<8x128xi1>, vector<8x128xi32>
    %c70 = arith.constant 70 : index
    %381 = memref.load %arg2[%c70] : memref<175xf32, #tpu.memory_space<smem>>
    %382 = vector.broadcast %381 : f32 to vector<8x128xf32>
    %383 = arith.addf %359, %382 : vector<8x128xf32>
    %384 = arith.cmpf ogt, %383, %379 : vector<8x128xf32>
    %385 = arith.select %384, %383, %379 : vector<8x128xi1>, vector<8x128xf32>
    %386 = arith.select %384, %4, %380 : vector<8x128xi1>, vector<8x128xi32>
    %c2_120 = arith.constant 2 : index
    %c0_121 = arith.constant 0 : index
    %c0_122 = arith.constant 0 : index
    %c0_123 = arith.constant 0 : index
    %387 = vector.load %arg8[%c2_120, %c0_121, %c0_122, %c0_123] : memref<7x5x8x128xi32, #tpu.memory_space<vmem>>, vector<1x1x8x128xi32>
    %388 = vector.shape_cast %387 : vector<1x1x8x128xi32> to vector<8x128xi32>
    %389 = vector.shape_cast %386 : vector<8x128xi32> to vector<1x1x8x128xi32>
    tpu.vector_store %arg8[%c2_120, %c0_121, %c0_122, %c0_123], %389 {strides = array<i32>} : memref<7x5x8x128xi32, #tpu.memory_space<vmem>>, vector<1x1x8x128xi32>,
    %c0_124 = arith.constant 0 : index
    %c3_125 = arith.constant 3 : index
    %c0_126 = arith.constant 0 : index
    %c0_127 = arith.constant 0 : index
    %c0_128 = arith.constant 0 : index
    %390 = vector.load %arg5[%c0_124, %c3_125, %c0_126, %c0_127, %c0_128] : memref<1x8x5x8x128xf32, #tpu.memory_space<vmem>>, vector<1x1x1x8x128xf32>
    %391 = vector.shape_cast %390 : vector<1x1x1x8x128xf32> to vector<8x128xf32>
    %392 = arith.addf %385, %391 : vector<8x128xf32>
    %c51 = arith.constant 51 : index
    %393 = memref.load %arg2[%c51] : memref<175xf32, #tpu.memory_space<smem>>
    %394 = vector.broadcast %393 : f32 to vector<8x128xf32>
    %395 = arith.addf %227, %394 : vector<8x128xf32>
    %c56 = arith.constant 56 : index
    %396 = memref.load %arg2[%c56] : memref<175xf32, #tpu.memory_space<smem>>
    %397 = vector.broadcast %396 : f32 to vector<8x128xf32>
    %398 = arith.addf %260, %397 : vector<8x128xf32>
    %399 = arith.cmpf ogt, %398, %395 : vector<8x128xf32>
    %400 = arith.select %399, %398, %395 : vector<8x128xi1>, vector<8x128xf32>
    %401 = arith.select %399, %1, %0 : vector<8x128xi1>, vector<8x128xi32>
    %c61 = arith.constant 61 : index
    %402 = memref.load %arg2[%c61] : memref<175xf32, #tpu.memory_space<smem>>
    %403 = vector.broadcast %402 : f32 to vector<8x128xf32>
    %404 = arith.addf %293, %403 : vector<8x128xf32>
    %405 = arith.cmpf ogt, %404, %400 : vector<8x128xf32>
    %406 = arith.select %405, %404, %400 : vector<8x128xi1>, vector<8x128xf32>
    %407 = arith.select %405, %2, %401 : vector<8x128xi1>, vector<8x128xi32>
    %c66 = arith.constant 66 : index
    %408 = memref.load %arg2[%c66] : memref<175xf32, #tpu.memory_space<smem>>
    %409 = vector.broadcast %408 : f32 to vector<8x128xf32>
    %410 = arith.addf %326, %409 : vector<8x128xf32>
    %411 = arith.cmpf ogt, %410, %406 : vector<8x128xf32>
    %412 = arith.select %411, %410, %406 : vector<8x128xi1>, vector<8x128xf32>
    %413 = arith.select %411, %3, %407 : vector<8x128xi1>, vector<8x128xi32>
    %c71 = arith.constant 71 : index
    %414 = memref.load %arg2[%c71] : memref<175xf32, #tpu.memory_space<smem>>
    %415 = vector.broadcast %414 : f32 to vector<8x128xf32>
    %416 = arith.addf %359, %415 : vector<8x128xf32>
    %417 = arith.cmpf ogt, %416, %412 : vector<8x128xf32>
    %418 = arith.select %417, %416, %412 : vector<8x128xi1>, vector<8x128xf32>
    %419 = arith.select %417, %4, %413 : vector<8x128xi1>, vector<8x128xi32>
    %c2_129 = arith.constant 2 : index
    %c1_130 = arith.constant 1 : index
    %c0_131 = arith.constant 0 : index
    %c0_132 = arith.constant 0 : index
    %420 = vector.load %arg8[%c2_129, %c1_130, %c0_131, %c0_132] : memref<7x5x8x128xi32, #tpu.memory_space<vmem>>, vector<1x1x8x128xi32>
    %421 = vector.shape_cast %420 : vector<1x1x8x128xi32> to vector<8x128xi32>
    %422 = vector.shape_cast %419 : vector<8x128xi32> to vector<1x1x8x128xi32>
    tpu.vector_store %arg8[%c2_129, %c1_130, %c0_131, %c0_132], %422 {strides = array<i32>} : memref<7x5x8x128xi32, #tpu.memory_space<vmem>>, vector<1x1x8x128xi32>,
    %c0_133 = arith.constant 0 : index
    %c3_134 = arith.constant 3 : index
    %c1_135 = arith.constant 1 : index
    %c0_136 = arith.constant 0 : index
    %c0_137 = arith.constant 0 : index
    %423 = vector.load %arg5[%c0_133, %c3_134, %c1_135, %c0_136, %c0_137] : memref<1x8x5x8x128xf32, #tpu.memory_space<vmem>>, vector<1x1x1x8x128xf32>
    %424 = vector.shape_cast %423 : vector<1x1x1x8x128xf32> to vector<8x128xf32>
    %425 = arith.addf %418, %424 : vector<8x128xf32>
    %c52 = arith.constant 52 : index
    %426 = memref.load %arg2[%c52] : memref<175xf32, #tpu.memory_space<smem>>
    %427 = vector.broadcast %426 : f32 to vector<8x128xf32>
    %428 = arith.addf %227, %427 : vector<8x128xf32>
    %c57 = arith.constant 57 : index
    %429 = memref.load %arg2[%c57] : memref<175xf32, #tpu.memory_space<smem>>
    %430 = vector.broadcast %429 : f32 to vector<8x128xf32>
    %431 = arith.addf %260, %430 : vector<8x128xf32>
    %432 = arith.cmpf ogt, %431, %428 : vector<8x128xf32>
    %433 = arith.select %432, %431, %428 : vector<8x128xi1>, vector<8x128xf32>
    %434 = arith.select %432, %1, %0 : vector<8x128xi1>, vector<8x128xi32>
    %c62 = arith.constant 62 : index
    %435 = memref.load %arg2[%c62] : memref<175xf32, #tpu.memory_space<smem>>
    %436 = vector.broadcast %435 : f32 to vector<8x128xf32>
    %437 = arith.addf %293, %436 : vector<8x128xf32>
    %438 = arith.cmpf ogt, %437, %433 : vector<8x128xf32>
    %439 = arith.select %438, %437, %433 : vector<8x128xi1>, vector<8x128xf32>
    %440 = arith.select %438, %2, %434 : vector<8x128xi1>, vector<8x128xi32>
    %c67 = arith.constant 67 : index
    %441 = memref.load %arg2[%c67] : memref<175xf32, #tpu.memory_space<smem>>
    %442 = vector.broadcast %441 : f32 to vector<8x128xf32>
    %443 = arith.addf %326, %442 : vector<8x128xf32>
    %444 = arith.cmpf ogt, %443, %439 : vector<8x128xf32>
    %445 = arith.select %444, %443, %439 : vector<8x128xi1>, vector<8x128xf32>
    %446 = arith.select %444, %3, %440 : vector<8x128xi1>, vector<8x128xi32>
    %c72 = arith.constant 72 : index
    %447 = memref.load %arg2[%c72] : memref<175xf32, #tpu.memory_space<smem>>
    %448 = vector.broadcast %447 : f32 to vector<8x128xf32>
    %449 = arith.addf %359, %448 : vector<8x128xf32>
    %450 = arith.cmpf ogt, %449, %445 : vector<8x128xf32>
    %451 = arith.select %450, %449, %445 : vector<8x128xi1>, vector<8x128xf32>
    %452 = arith.select %450, %4, %446 : vector<8x128xi1>, vector<8x128xi32>
    %c2_138 = arith.constant 2 : index
    %c2_139 = arith.constant 2 : index
    %c0_140 = arith.constant 0 : index
    %c0_141 = arith.constant 0 : index
    %453 = vector.load %arg8[%c2_138, %c2_139, %c0_140, %c0_141] : memref<7x5x8x128xi32, #tpu.memory_space<vmem>>, vector<1x1x8x128xi32>
    %454 = vector.shape_cast %453 : vector<1x1x8x128xi32> to vector<8x128xi32>
    %455 = vector.shape_cast %452 : vector<8x128xi32> to vector<1x1x8x128xi32>
    tpu.vector_store %arg8[%c2_138, %c2_139, %c0_140, %c0_141], %455 {strides = array<i32>} : memref<7x5x8x128xi32, #tpu.memory_space<vmem>>, vector<1x1x8x128xi32>,
    %c0_142 = arith.constant 0 : index
    %c3_143 = arith.constant 3 : index
    %c2_144 = arith.constant 2 : index
    %c0_145 = arith.constant 0 : index
    %c0_146 = arith.constant 0 : index
    %456 = vector.load %arg5[%c0_142, %c3_143, %c2_144, %c0_145, %c0_146] : memref<1x8x5x8x128xf32, #tpu.memory_space<vmem>>, vector<1x1x1x8x128xf32>
    %457 = vector.shape_cast %456 : vector<1x1x1x8x128xf32> to vector<8x128xf32>
    %458 = arith.addf %451, %457 : vector<8x128xf32>
    %c53 = arith.constant 53 : index
    %459 = memref.load %arg2[%c53] : memref<175xf32, #tpu.memory_space<smem>>
    %460 = vector.broadcast %459 : f32 to vector<8x128xf32>
    %461 = arith.addf %227, %460 : vector<8x128xf32>
    %c58 = arith.constant 58 : index
    %462 = memref.load %arg2[%c58] : memref<175xf32, #tpu.memory_space<smem>>
    %463 = vector.broadcast %462 : f32 to vector<8x128xf32>
    %464 = arith.addf %260, %463 : vector<8x128xf32>
    %465 = arith.cmpf ogt, %464, %461 : vector<8x128xf32>
    %466 = arith.select %465, %464, %461 : vector<8x128xi1>, vector<8x128xf32>
    %467 = arith.select %465, %1, %0 : vector<8x128xi1>, vector<8x128xi32>
    %c63 = arith.constant 63 : index
    %468 = memref.load %arg2[%c63] : memref<175xf32, #tpu.memory_space<smem>>
    %469 = vector.broadcast %468 : f32 to vector<8x128xf32>
    %470 = arith.addf %293, %469 : vector<8x128xf32>
    %471 = arith.cmpf ogt, %470, %466 : vector<8x128xf32>
    %472 = arith.select %471, %470, %466 : vector<8x128xi1>, vector<8x128xf32>
    %473 = arith.select %471, %2, %467 : vector<8x128xi1>, vector<8x128xi32>
    %c68 = arith.constant 68 : index
    %474 = memref.load %arg2[%c68] : memref<175xf32, #tpu.memory_space<smem>>
    %475 = vector.broadcast %474 : f32 to vector<8x128xf32>
    %476 = arith.addf %326, %475 : vector<8x128xf32>
    %477 = arith.cmpf ogt, %476, %472 : vector<8x128xf32>
    %478 = arith.select %477, %476, %472 : vector<8x128xi1>, vector<8x128xf32>
    %479 = arith.select %477, %3, %473 : vector<8x128xi1>, vector<8x128xi32>
    %c73 = arith.constant 73 : index
    %480 = memref.load %arg2[%c73] : memref<175xf32, #tpu.memory_space<smem>>
    %481 = vector.broadcast %480 : f32 to vector<8x128xf32>
    %482 = arith.addf %359, %481 : vector<8x128xf32>
    %483 = arith.cmpf ogt, %482, %478 : vector<8x128xf32>
    %484 = arith.select %483, %482, %478 : vector<8x128xi1>, vector<8x128xf32>
    %485 = arith.select %483, %4, %479 : vector<8x128xi1>, vector<8x128xi32>
    %c2_147 = arith.constant 2 : index
    %c3_148 = arith.constant 3 : index
    %c0_149 = arith.constant 0 : index
    %c0_150 = arith.constant 0 : index
    %486 = vector.load %arg8[%c2_147, %c3_148, %c0_149, %c0_150] : memref<7x5x8x128xi32, #tpu.memory_space<vmem>>, vector<1x1x8x128xi32>
    %487 = vector.shape_cast %486 : vector<1x1x8x128xi32> to vector<8x128xi32>
    %488 = vector.shape_cast %485 : vector<8x128xi32> to vector<1x1x8x128xi32>
    tpu.vector_store %arg8[%c2_147, %c3_148, %c0_149, %c0_150], %488 {strides = array<i32>} : memref<7x5x8x128xi32, #tpu.memory_space<vmem>>, vector<1x1x8x128xi32>,
    %c0_151 = arith.constant 0 : index
    %c3_152 = arith.constant 3 : index
    %c3_153 = arith.constant 3 : index
    %c0_154 = arith.constant 0 : index
    %c0_155 = arith.constant 0 : index
    %489 = vector.load %arg5[%c0_151, %c3_152, %c3_153, %c0_154, %c0_155] : memref<1x8x5x8x128xf32, #tpu.memory_space<vmem>>, vector<1x1x1x8x128xf32>
    %490 = vector.shape_cast %489 : vector<1x1x1x8x128xf32> to vector<8x128xf32>
    %491 = arith.addf %484, %490 : vector<8x128xf32>
    %c54 = arith.constant 54 : index
    %492 = memref.load %arg2[%c54] : memref<175xf32, #tpu.memory_space<smem>>
    %493 = vector.broadcast %492 : f32 to vector<8x128xf32>
    %494 = arith.addf %227, %493 : vector<8x128xf32>
    %c59 = arith.constant 59 : index
    %495 = memref.load %arg2[%c59] : memref<175xf32, #tpu.memory_space<smem>>
    %496 = vector.broadcast %495 : f32 to vector<8x128xf32>
    %497 = arith.addf %260, %496 : vector<8x128xf32>
    %498 = arith.cmpf ogt, %497, %494 : vector<8x128xf32>
    %499 = arith.select %498, %497, %494 : vector<8x128xi1>, vector<8x128xf32>
    %500 = arith.select %498, %1, %0 : vector<8x128xi1>, vector<8x128xi32>
    %c64 = arith.constant 64 : index
    %501 = memref.load %arg2[%c64] : memref<175xf32, #tpu.memory_space<smem>>
    %502 = vector.broadcast %501 : f32 to vector<8x128xf32>
    %503 = arith.addf %293, %502 : vector<8x128xf32>
    %504 = arith.cmpf ogt, %503, %499 : vector<8x128xf32>
    %505 = arith.select %504, %503, %499 : vector<8x128xi1>, vector<8x128xf32>
    %506 = arith.select %504, %2, %500 : vector<8x128xi1>, vector<8x128xi32>
    %c69 = arith.constant 69 : index
    %507 = memref.load %arg2[%c69] : memref<175xf32, #tpu.memory_space<smem>>
    %508 = vector.broadcast %507 : f32 to vector<8x128xf32>
    %509 = arith.addf %326, %508 : vector<8x128xf32>
    %510 = arith.cmpf ogt, %509, %505 : vector<8x128xf32>
    %511 = arith.select %510, %509, %505 : vector<8x128xi1>, vector<8x128xf32>
    %512 = arith.select %510, %3, %506 : vector<8x128xi1>, vector<8x128xi32>
    %c74 = arith.constant 74 : index
    %513 = memref.load %arg2[%c74] : memref<175xf32, #tpu.memory_space<smem>>
    %514 = vector.broadcast %513 : f32 to vector<8x128xf32>
    %515 = arith.addf %359, %514 : vector<8x128xf32>
    %516 = arith.cmpf ogt, %515, %511 : vector<8x128xf32>
    %517 = arith.select %516, %515, %511 : vector<8x128xi1>, vector<8x128xf32>
    %518 = arith.select %516, %4, %512 : vector<8x128xi1>, vector<8x128xi32>
    %c2_156 = arith.constant 2 : index
    %c4_157 = arith.constant 4 : index
    %c0_158 = arith.constant 0 : index
    %c0_159 = arith.constant 0 : index
    %519 = vector.load %arg8[%c2_156, %c4_157, %c0_158, %c0_159] : memref<7x5x8x128xi32, #tpu.memory_space<vmem>>, vector<1x1x8x128xi32>
    %520 = vector.shape_cast %519 : vector<1x1x8x128xi32> to vector<8x128xi32>
    %521 = vector.shape_cast %518 : vector<8x128xi32> to vector<1x1x8x128xi32>
    tpu.vector_store %arg8[%c2_156, %c4_157, %c0_158, %c0_159], %521 {strides = array<i32>} : memref<7x5x8x128xi32, #tpu.memory_space<vmem>>, vector<1x1x8x128xi32>,
    %c0_160 = arith.constant 0 : index
    %c3_161 = arith.constant 3 : index
    %c4_162 = arith.constant 4 : index
    %c0_163 = arith.constant 0 : index
    %c0_164 = arith.constant 0 : index
    %522 = vector.load %arg5[%c0_160, %c3_161, %c4_162, %c0_163, %c0_164] : memref<1x8x5x8x128xf32, #tpu.memory_space<vmem>>, vector<1x1x1x8x128xf32>
    %523 = vector.shape_cast %522 : vector<1x1x1x8x128xf32> to vector<8x128xf32>
    %524 = arith.addf %517, %523 : vector<8x128xf32>
    %c75 = arith.constant 75 : index
    %525 = memref.load %arg2[%c75] : memref<175xf32, #tpu.memory_space<smem>>
    %526 = vector.broadcast %525 : f32 to vector<8x128xf32>
    %527 = arith.addf %392, %526 : vector<8x128xf32>
    %c80 = arith.constant 80 : index
    %528 = memref.load %arg2[%c80] : memref<175xf32, #tpu.memory_space<smem>>
    %529 = vector.broadcast %528 : f32 to vector<8x128xf32>
    %530 = arith.addf %425, %529 : vector<8x128xf32>
    %531 = arith.cmpf ogt, %530, %527 : vector<8x128xf32>
    %532 = arith.select %531, %530, %527 : vector<8x128xi1>, vector<8x128xf32>
    %533 = arith.select %531, %1, %0 : vector<8x128xi1>, vector<8x128xi32>
    %c85 = arith.constant 85 : index
    %534 = memref.load %arg2[%c85] : memref<175xf32, #tpu.memory_space<smem>>
    %535 = vector.broadcast %534 : f32 to vector<8x128xf32>
    %536 = arith.addf %458, %535 : vector<8x128xf32>
    %537 = arith.cmpf ogt, %536, %532 : vector<8x128xf32>
    %538 = arith.select %537, %536, %532 : vector<8x128xi1>, vector<8x128xf32>
    %539 = arith.select %537, %2, %533 : vector<8x128xi1>, vector<8x128xi32>
    %c90 = arith.constant 90 : index
    %540 = memref.load %arg2[%c90] : memref<175xf32, #tpu.memory_space<smem>>
    %541 = vector.broadcast %540 : f32 to vector<8x128xf32>
    %542 = arith.addf %491, %541 : vector<8x128xf32>
    %543 = arith.cmpf ogt, %542, %538 : vector<8x128xf32>
    %544 = arith.select %543, %542, %538 : vector<8x128xi1>, vector<8x128xf32>
    %545 = arith.select %543, %3, %539 : vector<8x128xi1>, vector<8x128xi32>
    %c95 = arith.constant 95 : index
    %546 = memref.load %arg2[%c95] : memref<175xf32, #tpu.memory_space<smem>>
    %547 = vector.broadcast %546 : f32 to vector<8x128xf32>
    %548 = arith.addf %524, %547 : vector<8x128xf32>
    %549 = arith.cmpf ogt, %548, %544 : vector<8x128xf32>
    %550 = arith.select %549, %548, %544 : vector<8x128xi1>, vector<8x128xf32>
    %551 = arith.select %549, %4, %545 : vector<8x128xi1>, vector<8x128xi32>
    %c3_165 = arith.constant 3 : index
    %c0_166 = arith.constant 0 : index
    %c0_167 = arith.constant 0 : index
    %c0_168 = arith.constant 0 : index
    %552 = vector.load %arg8[%c3_165, %c0_166, %c0_167, %c0_168] : memref<7x5x8x128xi32, #tpu.memory_space<vmem>>, vector<1x1x8x128xi32>
    %553 = vector.shape_cast %552 : vector<1x1x8x128xi32> to vector<8x128xi32>
    %554 = vector.shape_cast %551 : vector<8x128xi32> to vector<1x1x8x128xi32>
    tpu.vector_store %arg8[%c3_165, %c0_166, %c0_167, %c0_168], %554 {strides = array<i32>} : memref<7x5x8x128xi32, #tpu.memory_space<vmem>>, vector<1x1x8x128xi32>,
    %c0_169 = arith.constant 0 : index
    %c4_170 = arith.constant 4 : index
    %c0_171 = arith.constant 0 : index
    %c0_172 = arith.constant 0 : index
    %c0_173 = arith.constant 0 : index
    %555 = vector.load %arg5[%c0_169, %c4_170, %c0_171, %c0_172, %c0_173] : memref<1x8x5x8x128xf32, #tpu.memory_space<vmem>>, vector<1x1x1x8x128xf32>
    %556 = vector.shape_cast %555 : vector<1x1x1x8x128xf32> to vector<8x128xf32>
    %557 = arith.addf %550, %556 : vector<8x128xf32>
    %c76 = arith.constant 76 : index
    %558 = memref.load %arg2[%c76] : memref<175xf32, #tpu.memory_space<smem>>
    %559 = vector.broadcast %558 : f32 to vector<8x128xf32>
    %560 = arith.addf %392, %559 : vector<8x128xf32>
    %c81 = arith.constant 81 : index
    %561 = memref.load %arg2[%c81] : memref<175xf32, #tpu.memory_space<smem>>
    %562 = vector.broadcast %561 : f32 to vector<8x128xf32>
    %563 = arith.addf %425, %562 : vector<8x128xf32>
    %564 = arith.cmpf ogt, %563, %560 : vector<8x128xf32>
    %565 = arith.select %564, %563, %560 : vector<8x128xi1>, vector<8x128xf32>
    %566 = arith.select %564, %1, %0 : vector<8x128xi1>, vector<8x128xi32>
    %c86 = arith.constant 86 : index
    %567 = memref.load %arg2[%c86] : memref<175xf32, #tpu.memory_space<smem>>
    %568 = vector.broadcast %567 : f32 to vector<8x128xf32>
    %569 = arith.addf %458, %568 : vector<8x128xf32>
    %570 = arith.cmpf ogt, %569, %565 : vector<8x128xf32>
    %571 = arith.select %570, %569, %565 : vector<8x128xi1>, vector<8x128xf32>
    %572 = arith.select %570, %2, %566 : vector<8x128xi1>, vector<8x128xi32>
    %c91 = arith.constant 91 : index
    %573 = memref.load %arg2[%c91] : memref<175xf32, #tpu.memory_space<smem>>
    %574 = vector.broadcast %573 : f32 to vector<8x128xf32>
    %575 = arith.addf %491, %574 : vector<8x128xf32>
    %576 = arith.cmpf ogt, %575, %571 : vector<8x128xf32>
    %577 = arith.select %576, %575, %571 : vector<8x128xi1>, vector<8x128xf32>
    %578 = arith.select %576, %3, %572 : vector<8x128xi1>, vector<8x128xi32>
    %c96 = arith.constant 96 : index
    %579 = memref.load %arg2[%c96] : memref<175xf32, #tpu.memory_space<smem>>
    %580 = vector.broadcast %579 : f32 to vector<8x128xf32>
    %581 = arith.addf %524, %580 : vector<8x128xf32>
    %582 = arith.cmpf ogt, %581, %577 : vector<8x128xf32>
    %583 = arith.select %582, %581, %577 : vector<8x128xi1>, vector<8x128xf32>
    %584 = arith.select %582, %4, %578 : vector<8x128xi1>, vector<8x128xi32>
    %c3_174 = arith.constant 3 : index
    %c1_175 = arith.constant 1 : index
    %c0_176 = arith.constant 0 : index
    %c0_177 = arith.constant 0 : index
    %585 = vector.load %arg8[%c3_174, %c1_175, %c0_176, %c0_177] : memref<7x5x8x128xi32, #tpu.memory_space<vmem>>, vector<1x1x8x128xi32>
    %586 = vector.shape_cast %585 : vector<1x1x8x128xi32> to vector<8x128xi32>
    %587 = vector.shape_cast %584 : vector<8x128xi32> to vector<1x1x8x128xi32>
    tpu.vector_store %arg8[%c3_174, %c1_175, %c0_176, %c0_177], %587 {strides = array<i32>} : memref<7x5x8x128xi32, #tpu.memory_space<vmem>>, vector<1x1x8x128xi32>,
    %c0_178 = arith.constant 0 : index
    %c4_179 = arith.constant 4 : index
    %c1_180 = arith.constant 1 : index
    %c0_181 = arith.constant 0 : index
    %c0_182 = arith.constant 0 : index
    %588 = vector.load %arg5[%c0_178, %c4_179, %c1_180, %c0_181, %c0_182] : memref<1x8x5x8x128xf32, #tpu.memory_space<vmem>>, vector<1x1x1x8x128xf32>
    %589 = vector.shape_cast %588 : vector<1x1x1x8x128xf32> to vector<8x128xf32>
    %590 = arith.addf %583, %589 : vector<8x128xf32>
    %c77 = arith.constant 77 : index
    %591 = memref.load %arg2[%c77] : memref<175xf32, #tpu.memory_space<smem>>
    %592 = vector.broadcast %591 : f32 to vector<8x128xf32>
    %593 = arith.addf %392, %592 : vector<8x128xf32>
    %c82 = arith.constant 82 : index
    %594 = memref.load %arg2[%c82] : memref<175xf32, #tpu.memory_space<smem>>
    %595 = vector.broadcast %594 : f32 to vector<8x128xf32>
    %596 = arith.addf %425, %595 : vector<8x128xf32>
    %597 = arith.cmpf ogt, %596, %593 : vector<8x128xf32>
    %598 = arith.select %597, %596, %593 : vector<8x128xi1>, vector<8x128xf32>
    %599 = arith.select %597, %1, %0 : vector<8x128xi1>, vector<8x128xi32>
    %c87 = arith.constant 87 : index
    %600 = memref.load %arg2[%c87] : memref<175xf32, #tpu.memory_space<smem>>
    %601 = vector.broadcast %600 : f32 to vector<8x128xf32>
    %602 = arith.addf %458, %601 : vector<8x128xf32>
    %603 = arith.cmpf ogt, %602, %598 : vector<8x128xf32>
    %604 = arith.select %603, %602, %598 : vector<8x128xi1>, vector<8x128xf32>
    %605 = arith.select %603, %2, %599 : vector<8x128xi1>, vector<8x128xi32>
    %c92 = arith.constant 92 : index
    %606 = memref.load %arg2[%c92] : memref<175xf32, #tpu.memory_space<smem>>
    %607 = vector.broadcast %606 : f32 to vector<8x128xf32>
    %608 = arith.addf %491, %607 : vector<8x128xf32>
    %609 = arith.cmpf ogt, %608, %604 : vector<8x128xf32>
    %610 = arith.select %609, %608, %604 : vector<8x128xi1>, vector<8x128xf32>
    %611 = arith.select %609, %3, %605 : vector<8x128xi1>, vector<8x128xi32>
    %c97 = arith.constant 97 : index
    %612 = memref.load %arg2[%c97] : memref<175xf32, #tpu.memory_space<smem>>
    %613 = vector.broadcast %612 : f32 to vector<8x128xf32>
    %614 = arith.addf %524, %613 : vector<8x128xf32>
    %615 = arith.cmpf ogt, %614, %610 : vector<8x128xf32>
    %616 = arith.select %615, %614, %610 : vector<8x128xi1>, vector<8x128xf32>
    %617 = arith.select %615, %4, %611 : vector<8x128xi1>, vector<8x128xi32>
    %c3_183 = arith.constant 3 : index
    %c2_184 = arith.constant 2 : index
    %c0_185 = arith.constant 0 : index
    %c0_186 = arith.constant 0 : index
    %618 = vector.load %arg8[%c3_183, %c2_184, %c0_185, %c0_186] : memref<7x5x8x128xi32, #tpu.memory_space<vmem>>, vector<1x1x8x128xi32>
    %619 = vector.shape_cast %618 : vector<1x1x8x128xi32> to vector<8x128xi32>
    %620 = vector.shape_cast %617 : vector<8x128xi32> to vector<1x1x8x128xi32>
    tpu.vector_store %arg8[%c3_183, %c2_184, %c0_185, %c0_186], %620 {strides = array<i32>} : memref<7x5x8x128xi32, #tpu.memory_space<vmem>>, vector<1x1x8x128xi32>,
    %c0_187 = arith.constant 0 : index
    %c4_188 = arith.constant 4 : index
    %c2_189 = arith.constant 2 : index
    %c0_190 = arith.constant 0 : index
    %c0_191 = arith.constant 0 : index
    %621 = vector.load %arg5[%c0_187, %c4_188, %c2_189, %c0_190, %c0_191] : memref<1x8x5x8x128xf32, #tpu.memory_space<vmem>>, vector<1x1x1x8x128xf32>
    %622 = vector.shape_cast %621 : vector<1x1x1x8x128xf32> to vector<8x128xf32>
    %623 = arith.addf %616, %622 : vector<8x128xf32>
    %c78 = arith.constant 78 : index
    %624 = memref.load %arg2[%c78] : memref<175xf32, #tpu.memory_space<smem>>
    %625 = vector.broadcast %624 : f32 to vector<8x128xf32>
    %626 = arith.addf %392, %625 : vector<8x128xf32>
    %c83 = arith.constant 83 : index
    %627 = memref.load %arg2[%c83] : memref<175xf32, #tpu.memory_space<smem>>
    %628 = vector.broadcast %627 : f32 to vector<8x128xf32>
    %629 = arith.addf %425, %628 : vector<8x128xf32>
    %630 = arith.cmpf ogt, %629, %626 : vector<8x128xf32>
    %631 = arith.select %630, %629, %626 : vector<8x128xi1>, vector<8x128xf32>
    %632 = arith.select %630, %1, %0 : vector<8x128xi1>, vector<8x128xi32>
    %c88 = arith.constant 88 : index
    %633 = memref.load %arg2[%c88] : memref<175xf32, #tpu.memory_space<smem>>
    %634 = vector.broadcast %633 : f32 to vector<8x128xf32>
    %635 = arith.addf %458, %634 : vector<8x128xf32>
    %636 = arith.cmpf ogt, %635, %631 : vector<8x128xf32>
    %637 = arith.select %636, %635, %631 : vector<8x128xi1>, vector<8x128xf32>
    %638 = arith.select %636, %2, %632 : vector<8x128xi1>, vector<8x128xi32>
    %c93 = arith.constant 93 : index
    %639 = memref.load %arg2[%c93] : memref<175xf32, #tpu.memory_space<smem>>
    %640 = vector.broadcast %639 : f32 to vector<8x128xf32>
    %641 = arith.addf %491, %640 : vector<8x128xf32>
    %642 = arith.cmpf ogt, %641, %637 : vector<8x128xf32>
    %643 = arith.select %642, %641, %637 : vector<8x128xi1>, vector<8x128xf32>
    %644 = arith.select %642, %3, %638 : vector<8x128xi1>, vector<8x128xi32>
    %c98 = arith.constant 98 : index
    %645 = memref.load %arg2[%c98] : memref<175xf32, #tpu.memory_space<smem>>
    %646 = vector.broadcast %645 : f32 to vector<8x128xf32>
    %647 = arith.addf %524, %646 : vector<8x128xf32>
    %648 = arith.cmpf ogt, %647, %643 : vector<8x128xf32>
    %649 = arith.select %648, %647, %643 : vector<8x128xi1>, vector<8x128xf32>
    %650 = arith.select %648, %4, %644 : vector<8x128xi1>, vector<8x128xi32>
    %c3_192 = arith.constant 3 : index
    %c3_193 = arith.constant 3 : index
    %c0_194 = arith.constant 0 : index
    %c0_195 = arith.constant 0 : index
    %651 = vector.load %arg8[%c3_192, %c3_193, %c0_194, %c0_195] : memref<7x5x8x128xi32, #tpu.memory_space<vmem>>, vector<1x1x8x128xi32>
    %652 = vector.shape_cast %651 : vector<1x1x8x128xi32> to vector<8x128xi32>
    %653 = vector.shape_cast %650 : vector<8x128xi32> to vector<1x1x8x128xi32>
    tpu.vector_store %arg8[%c3_192, %c3_193, %c0_194, %c0_195], %653 {strides = array<i32>} : memref<7x5x8x128xi32, #tpu.memory_space<vmem>>, vector<1x1x8x128xi32>,
    %c0_196 = arith.constant 0 : index
    %c4_197 = arith.constant 4 : index
    %c3_198 = arith.constant 3 : index
    %c0_199 = arith.constant 0 : index
    %c0_200 = arith.constant 0 : index
    %654 = vector.load %arg5[%c0_196, %c4_197, %c3_198, %c0_199, %c0_200] : memref<1x8x5x8x128xf32, #tpu.memory_space<vmem>>, vector<1x1x1x8x128xf32>
    %655 = vector.shape_cast %654 : vector<1x1x1x8x128xf32> to vector<8x128xf32>
    %656 = arith.addf %649, %655 : vector<8x128xf32>
    %c79 = arith.constant 79 : index
    %657 = memref.load %arg2[%c79] : memref<175xf32, #tpu.memory_space<smem>>
    %658 = vector.broadcast %657 : f32 to vector<8x128xf32>
    %659 = arith.addf %392, %658 : vector<8x128xf32>
    %c84 = arith.constant 84 : index
    %660 = memref.load %arg2[%c84] : memref<175xf32, #tpu.memory_space<smem>>
    %661 = vector.broadcast %660 : f32 to vector<8x128xf32>
    %662 = arith.addf %425, %661 : vector<8x128xf32>
    %663 = arith.cmpf ogt, %662, %659 : vector<8x128xf32>
    %664 = arith.select %663, %662, %659 : vector<8x128xi1>, vector<8x128xf32>
    %665 = arith.select %663, %1, %0 : vector<8x128xi1>, vector<8x128xi32>
    %c89 = arith.constant 89 : index
    %666 = memref.load %arg2[%c89] : memref<175xf32, #tpu.memory_space<smem>>
    %667 = vector.broadcast %666 : f32 to vector<8x128xf32>
    %668 = arith.addf %458, %667 : vector<8x128xf32>
    %669 = arith.cmpf ogt, %668, %664 : vector<8x128xf32>
    %670 = arith.select %669, %668, %664 : vector<8x128xi1>, vector<8x128xf32>
    %671 = arith.select %669, %2, %665 : vector<8x128xi1>, vector<8x128xi32>
    %c94 = arith.constant 94 : index
    %672 = memref.load %arg2[%c94] : memref<175xf32, #tpu.memory_space<smem>>
    %673 = vector.broadcast %672 : f32 to vector<8x128xf32>
    %674 = arith.addf %491, %673 : vector<8x128xf32>
    %675 = arith.cmpf ogt, %674, %670 : vector<8x128xf32>
    %676 = arith.select %675, %674, %670 : vector<8x128xi1>, vector<8x128xf32>
    %677 = arith.select %675, %3, %671 : vector<8x128xi1>, vector<8x128xi32>
    %c99 = arith.constant 99 : index
    %678 = memref.load %arg2[%c99] : memref<175xf32, #tpu.memory_space<smem>>
    %679 = vector.broadcast %678 : f32 to vector<8x128xf32>
    %680 = arith.addf %524, %679 : vector<8x128xf32>
    %681 = arith.cmpf ogt, %680, %676 : vector<8x128xf32>
    %682 = arith.select %681, %680, %676 : vector<8x128xi1>, vector<8x128xf32>
    %683 = arith.select %681, %4, %677 : vector<8x128xi1>, vector<8x128xi32>
    %c3_201 = arith.constant 3 : index
    %c4_202 = arith.constant 4 : index
    %c0_203 = arith.constant 0 : index
    %c0_204 = arith.constant 0 : index
    %684 = vector.load %arg8[%c3_201, %c4_202, %c0_203, %c0_204] : memref<7x5x8x128xi32, #tpu.memory_space<vmem>>, vector<1x1x8x128xi32>
    %685 = vector.shape_cast %684 : vector<1x1x8x128xi32> to vector<8x128xi32>
    %686 = vector.shape_cast %683 : vector<8x128xi32> to vector<1x1x8x128xi32>
    tpu.vector_store %arg8[%c3_201, %c4_202, %c0_203, %c0_204], %686 {strides = array<i32>} : memref<7x5x8x128xi32, #tpu.memory_space<vmem>>, vector<1x1x8x128xi32>,
    %c0_205 = arith.constant 0 : index
    %c4_206 = arith.constant 4 : index
    %c4_207 = arith.constant 4 : index
    %c0_208 = arith.constant 0 : index
    %c0_209 = arith.constant 0 : index
    %687 = vector.load %arg5[%c0_205, %c4_206, %c4_207, %c0_208, %c0_209] : memref<1x8x5x8x128xf32, #tpu.memory_space<vmem>>, vector<1x1x1x8x128xf32>
    %688 = vector.shape_cast %687 : vector<1x1x1x8x128xf32> to vector<8x128xf32>
    %689 = arith.addf %682, %688 : vector<8x128xf32>
    %c100 = arith.constant 100 : index
    %690 = memref.load %arg2[%c100] : memref<175xf32, #tpu.memory_space<smem>>
    %691 = vector.broadcast %690 : f32 to vector<8x128xf32>
    %692 = arith.addf %557, %691 : vector<8x128xf32>
    %c105 = arith.constant 105 : index
    %693 = memref.load %arg2[%c105] : memref<175xf32, #tpu.memory_space<smem>>
    %694 = vector.broadcast %693 : f32 to vector<8x128xf32>
    %695 = arith.addf %590, %694 : vector<8x128xf32>
    %696 = arith.cmpf ogt, %695, %692 : vector<8x128xf32>
    %697 = arith.select %696, %695, %692 : vector<8x128xi1>, vector<8x128xf32>
    %698 = arith.select %696, %1, %0 : vector<8x128xi1>, vector<8x128xi32>
    %c110 = arith.constant 110 : index
    %699 = memref.load %arg2[%c110] : memref<175xf32, #tpu.memory_space<smem>>
    %700 = vector.broadcast %699 : f32 to vector<8x128xf32>
    %701 = arith.addf %623, %700 : vector<8x128xf32>
    %702 = arith.cmpf ogt, %701, %697 : vector<8x128xf32>
    %703 = arith.select %702, %701, %697 : vector<8x128xi1>, vector<8x128xf32>
    %704 = arith.select %702, %2, %698 : vector<8x128xi1>, vector<8x128xi32>
    %c115 = arith.constant 115 : index
    %705 = memref.load %arg2[%c115] : memref<175xf32, #tpu.memory_space<smem>>
    %706 = vector.broadcast %705 : f32 to vector<8x128xf32>
    %707 = arith.addf %656, %706 : vector<8x128xf32>
    %708 = arith.cmpf ogt, %707, %703 : vector<8x128xf32>
    %709 = arith.select %708, %707, %703 : vector<8x128xi1>, vector<8x128xf32>
    %710 = arith.select %708, %3, %704 : vector<8x128xi1>, vector<8x128xi32>
    %c120 = arith.constant 120 : index
    %711 = memref.load %arg2[%c120] : memref<175xf32, #tpu.memory_space<smem>>
    %712 = vector.broadcast %711 : f32 to vector<8x128xf32>
    %713 = arith.addf %689, %712 : vector<8x128xf32>
    %714 = arith.cmpf ogt, %713, %709 : vector<8x128xf32>
    %715 = arith.select %714, %713, %709 : vector<8x128xi1>, vector<8x128xf32>
    %716 = arith.select %714, %4, %710 : vector<8x128xi1>, vector<8x128xi32>
    %c4_210 = arith.constant 4 : index
    %c0_211 = arith.constant 0 : index
    %c0_212 = arith.constant 0 : index
    %c0_213 = arith.constant 0 : index
    %717 = vector.load %arg8[%c4_210, %c0_211, %c0_212, %c0_213] : memref<7x5x8x128xi32, #tpu.memory_space<vmem>>, vector<1x1x8x128xi32>
    %718 = vector.shape_cast %717 : vector<1x1x8x128xi32> to vector<8x128xi32>
    %719 = vector.shape_cast %716 : vector<8x128xi32> to vector<1x1x8x128xi32>
    tpu.vector_store %arg8[%c4_210, %c0_211, %c0_212, %c0_213], %719 {strides = array<i32>} : memref<7x5x8x128xi32, #tpu.memory_space<vmem>>, vector<1x1x8x128xi32>,
    %c0_214 = arith.constant 0 : index
    %c5_215 = arith.constant 5 : index
    %c0_216 = arith.constant 0 : index
    %c0_217 = arith.constant 0 : index
    %c0_218 = arith.constant 0 : index
    %720 = vector.load %arg5[%c0_214, %c5_215, %c0_216, %c0_217, %c0_218] : memref<1x8x5x8x128xf32, #tpu.memory_space<vmem>>, vector<1x1x1x8x128xf32>
    %721 = vector.shape_cast %720 : vector<1x1x1x8x128xf32> to vector<8x128xf32>
    %722 = arith.addf %715, %721 : vector<8x128xf32>
    %c101 = arith.constant 101 : index
    %723 = memref.load %arg2[%c101] : memref<175xf32, #tpu.memory_space<smem>>
    %724 = vector.broadcast %723 : f32 to vector<8x128xf32>
    %725 = arith.addf %557, %724 : vector<8x128xf32>
    %c106 = arith.constant 106 : index
    %726 = memref.load %arg2[%c106] : memref<175xf32, #tpu.memory_space<smem>>
    %727 = vector.broadcast %726 : f32 to vector<8x128xf32>
    %728 = arith.addf %590, %727 : vector<8x128xf32>
    %729 = arith.cmpf ogt, %728, %725 : vector<8x128xf32>
    %730 = arith.select %729, %728, %725 : vector<8x128xi1>, vector<8x128xf32>
    %731 = arith.select %729, %1, %0 : vector<8x128xi1>, vector<8x128xi32>
    %c111 = arith.constant 111 : index
    %732 = memref.load %arg2[%c111] : memref<175xf32, #tpu.memory_space<smem>>
    %733 = vector.broadcast %732 : f32 to vector<8x128xf32>
    %734 = arith.addf %623, %733 : vector<8x128xf32>
    %735 = arith.cmpf ogt, %734, %730 : vector<8x128xf32>
    %736 = arith.select %735, %734, %730 : vector<8x128xi1>, vector<8x128xf32>
    %737 = arith.select %735, %2, %731 : vector<8x128xi1>, vector<8x128xi32>
    %c116 = arith.constant 116 : index
    %738 = memref.load %arg2[%c116] : memref<175xf32, #tpu.memory_space<smem>>
    %739 = vector.broadcast %738 : f32 to vector<8x128xf32>
    %740 = arith.addf %656, %739 : vector<8x128xf32>
    %741 = arith.cmpf ogt, %740, %736 : vector<8x128xf32>
    %742 = arith.select %741, %740, %736 : vector<8x128xi1>, vector<8x128xf32>
    %743 = arith.select %741, %3, %737 : vector<8x128xi1>, vector<8x128xi32>
    %c121 = arith.constant 121 : index
    %744 = memref.load %arg2[%c121] : memref<175xf32, #tpu.memory_space<smem>>
    %745 = vector.broadcast %744 : f32 to vector<8x128xf32>
    %746 = arith.addf %689, %745 : vector<8x128xf32>
    %747 = arith.cmpf ogt, %746, %742 : vector<8x128xf32>
    %748 = arith.select %747, %746, %742 : vector<8x128xi1>, vector<8x128xf32>
    %749 = arith.select %747, %4, %743 : vector<8x128xi1>, vector<8x128xi32>
    %c4_219 = arith.constant 4 : index
    %c1_220 = arith.constant 1 : index
    %c0_221 = arith.constant 0 : index
    %c0_222 = arith.constant 0 : index
    %750 = vector.load %arg8[%c4_219, %c1_220, %c0_221, %c0_222] : memref<7x5x8x128xi32, #tpu.memory_space<vmem>>, vector<1x1x8x128xi32>
    %751 = vector.shape_cast %750 : vector<1x1x8x128xi32> to vector<8x128xi32>
    %752 = vector.shape_cast %749 : vector<8x128xi32> to vector<1x1x8x128xi32>
    tpu.vector_store %arg8[%c4_219, %c1_220, %c0_221, %c0_222], %752 {strides = array<i32>} : memref<7x5x8x128xi32, #tpu.memory_space<vmem>>, vector<1x1x8x128xi32>,
    %c0_223 = arith.constant 0 : index
    %c5_224 = arith.constant 5 : index
    %c1_225 = arith.constant 1 : index
    %c0_226 = arith.constant 0 : index
    %c0_227 = arith.constant 0 : index
    %753 = vector.load %arg5[%c0_223, %c5_224, %c1_225, %c0_226, %c0_227] : memref<1x8x5x8x128xf32, #tpu.memory_space<vmem>>, vector<1x1x1x8x128xf32>
    %754 = vector.shape_cast %753 : vector<1x1x1x8x128xf32> to vector<8x128xf32>
    %755 = arith.addf %748, %754 : vector<8x128xf32>
    %c102 = arith.constant 102 : index
    %756 = memref.load %arg2[%c102] : memref<175xf32, #tpu.memory_space<smem>>
    %757 = vector.broadcast %756 : f32 to vector<8x128xf32>
    %758 = arith.addf %557, %757 : vector<8x128xf32>
    %c107 = arith.constant 107 : index
    %759 = memref.load %arg2[%c107] : memref<175xf32, #tpu.memory_space<smem>>
    %760 = vector.broadcast %759 : f32 to vector<8x128xf32>
    %761 = arith.addf %590, %760 : vector<8x128xf32>
    %762 = arith.cmpf ogt, %761, %758 : vector<8x128xf32>
    %763 = arith.select %762, %761, %758 : vector<8x128xi1>, vector<8x128xf32>
    %764 = arith.select %762, %1, %0 : vector<8x128xi1>, vector<8x128xi32>
    %c112 = arith.constant 112 : index
    %765 = memref.load %arg2[%c112] : memref<175xf32, #tpu.memory_space<smem>>
    %766 = vector.broadcast %765 : f32 to vector<8x128xf32>
    %767 = arith.addf %623, %766 : vector<8x128xf32>
    %768 = arith.cmpf ogt, %767, %763 : vector<8x128xf32>
    %769 = arith.select %768, %767, %763 : vector<8x128xi1>, vector<8x128xf32>
    %770 = arith.select %768, %2, %764 : vector<8x128xi1>, vector<8x128xi32>
    %c117 = arith.constant 117 : index
    %771 = memref.load %arg2[%c117] : memref<175xf32, #tpu.memory_space<smem>>
    %772 = vector.broadcast %771 : f32 to vector<8x128xf32>
    %773 = arith.addf %656, %772 : vector<8x128xf32>
    %774 = arith.cmpf ogt, %773, %769 : vector<8x128xf32>
    %775 = arith.select %774, %773, %769 : vector<8x128xi1>, vector<8x128xf32>
    %776 = arith.select %774, %3, %770 : vector<8x128xi1>, vector<8x128xi32>
    %c122 = arith.constant 122 : index
    %777 = memref.load %arg2[%c122] : memref<175xf32, #tpu.memory_space<smem>>
    %778 = vector.broadcast %777 : f32 to vector<8x128xf32>
    %779 = arith.addf %689, %778 : vector<8x128xf32>
    %780 = arith.cmpf ogt, %779, %775 : vector<8x128xf32>
    %781 = arith.select %780, %779, %775 : vector<8x128xi1>, vector<8x128xf32>
    %782 = arith.select %780, %4, %776 : vector<8x128xi1>, vector<8x128xi32>
    %c4_228 = arith.constant 4 : index
    %c2_229 = arith.constant 2 : index
    %c0_230 = arith.constant 0 : index
    %c0_231 = arith.constant 0 : index
    %783 = vector.load %arg8[%c4_228, %c2_229, %c0_230, %c0_231] : memref<7x5x8x128xi32, #tpu.memory_space<vmem>>, vector<1x1x8x128xi32>
    %784 = vector.shape_cast %783 : vector<1x1x8x128xi32> to vector<8x128xi32>
    %785 = vector.shape_cast %782 : vector<8x128xi32> to vector<1x1x8x128xi32>
    tpu.vector_store %arg8[%c4_228, %c2_229, %c0_230, %c0_231], %785 {strides = array<i32>} : memref<7x5x8x128xi32, #tpu.memory_space<vmem>>, vector<1x1x8x128xi32>,
    %c0_232 = arith.constant 0 : index
    %c5_233 = arith.constant 5 : index
    %c2_234 = arith.constant 2 : index
    %c0_235 = arith.constant 0 : index
    %c0_236 = arith.constant 0 : index
    %786 = vector.load %arg5[%c0_232, %c5_233, %c2_234, %c0_235, %c0_236] : memref<1x8x5x8x128xf32, #tpu.memory_space<vmem>>, vector<1x1x1x8x128xf32>
    %787 = vector.shape_cast %786 : vector<1x1x1x8x128xf32> to vector<8x128xf32>
    %788 = arith.addf %781, %787 : vector<8x128xf32>
    %c103 = arith.constant 103 : index
    %789 = memref.load %arg2[%c103] : memref<175xf32, #tpu.memory_space<smem>>
    %790 = vector.broadcast %789 : f32 to vector<8x128xf32>
    %791 = arith.addf %557, %790 : vector<8x128xf32>
    %c108 = arith.constant 108 : index
    %792 = memref.load %arg2[%c108] : memref<175xf32, #tpu.memory_space<smem>>
    %793 = vector.broadcast %792 : f32 to vector<8x128xf32>
    %794 = arith.addf %590, %793 : vector<8x128xf32>
    %795 = arith.cmpf ogt, %794, %791 : vector<8x128xf32>
    %796 = arith.select %795, %794, %791 : vector<8x128xi1>, vector<8x128xf32>
    %797 = arith.select %795, %1, %0 : vector<8x128xi1>, vector<8x128xi32>
    %c113 = arith.constant 113 : index
    %798 = memref.load %arg2[%c113] : memref<175xf32, #tpu.memory_space<smem>>
    %799 = vector.broadcast %798 : f32 to vector<8x128xf32>
    %800 = arith.addf %623, %799 : vector<8x128xf32>
    %801 = arith.cmpf ogt, %800, %796 : vector<8x128xf32>
    %802 = arith.select %801, %800, %796 : vector<8x128xi1>, vector<8x128xf32>
    %803 = arith.select %801, %2, %797 : vector<8x128xi1>, vector<8x128xi32>
    %c118 = arith.constant 118 : index
    %804 = memref.load %arg2[%c118] : memref<175xf32, #tpu.memory_space<smem>>
    %805 = vector.broadcast %804 : f32 to vector<8x128xf32>
    %806 = arith.addf %656, %805 : vector<8x128xf32>
    %807 = arith.cmpf ogt, %806, %802 : vector<8x128xf32>
    %808 = arith.select %807, %806, %802 : vector<8x128xi1>, vector<8x128xf32>
    %809 = arith.select %807, %3, %803 : vector<8x128xi1>, vector<8x128xi32>
    %c123 = arith.constant 123 : index
    %810 = memref.load %arg2[%c123] : memref<175xf32, #tpu.memory_space<smem>>
    %811 = vector.broadcast %810 : f32 to vector<8x128xf32>
    %812 = arith.addf %689, %811 : vector<8x128xf32>
    %813 = arith.cmpf ogt, %812, %808 : vector<8x128xf32>
    %814 = arith.select %813, %812, %808 : vector<8x128xi1>, vector<8x128xf32>
    %815 = arith.select %813, %4, %809 : vector<8x128xi1>, vector<8x128xi32>
    %c4_237 = arith.constant 4 : index
    %c3_238 = arith.constant 3 : index
    %c0_239 = arith.constant 0 : index
    %c0_240 = arith.constant 0 : index
    %816 = vector.load %arg8[%c4_237, %c3_238, %c0_239, %c0_240] : memref<7x5x8x128xi32, #tpu.memory_space<vmem>>, vector<1x1x8x128xi32>
    %817 = vector.shape_cast %816 : vector<1x1x8x128xi32> to vector<8x128xi32>
    %818 = vector.shape_cast %815 : vector<8x128xi32> to vector<1x1x8x128xi32>
    tpu.vector_store %arg8[%c4_237, %c3_238, %c0_239, %c0_240], %818 {strides = array<i32>} : memref<7x5x8x128xi32, #tpu.memory_space<vmem>>, vector<1x1x8x128xi32>,
    %c0_241 = arith.constant 0 : index
    %c5_242 = arith.constant 5 : index
    %c3_243 = arith.constant 3 : index
    %c0_244 = arith.constant 0 : index
    %c0_245 = arith.constant 0 : index
    %819 = vector.load %arg5[%c0_241, %c5_242, %c3_243, %c0_244, %c0_245] : memref<1x8x5x8x128xf32, #tpu.memory_space<vmem>>, vector<1x1x1x8x128xf32>
    %820 = vector.shape_cast %819 : vector<1x1x1x8x128xf32> to vector<8x128xf32>
    %821 = arith.addf %814, %820 : vector<8x128xf32>
    %c104 = arith.constant 104 : index
    %822 = memref.load %arg2[%c104] : memref<175xf32, #tpu.memory_space<smem>>
    %823 = vector.broadcast %822 : f32 to vector<8x128xf32>
    %824 = arith.addf %557, %823 : vector<8x128xf32>
    %c109 = arith.constant 109 : index
    %825 = memref.load %arg2[%c109] : memref<175xf32, #tpu.memory_space<smem>>
    %826 = vector.broadcast %825 : f32 to vector<8x128xf32>
    %827 = arith.addf %590, %826 : vector<8x128xf32>
    %828 = arith.cmpf ogt, %827, %824 : vector<8x128xf32>
    %829 = arith.select %828, %827, %824 : vector<8x128xi1>, vector<8x128xf32>
    %830 = arith.select %828, %1, %0 : vector<8x128xi1>, vector<8x128xi32>
    %c114 = arith.constant 114 : index
    %831 = memref.load %arg2[%c114] : memref<175xf32, #tpu.memory_space<smem>>
    %832 = vector.broadcast %831 : f32 to vector<8x128xf32>
    %833 = arith.addf %623, %832 : vector<8x128xf32>
    %834 = arith.cmpf ogt, %833, %829 : vector<8x128xf32>
    %835 = arith.select %834, %833, %829 : vector<8x128xi1>, vector<8x128xf32>
    %836 = arith.select %834, %2, %830 : vector<8x128xi1>, vector<8x128xi32>
    %c119 = arith.constant 119 : index
    %837 = memref.load %arg2[%c119] : memref<175xf32, #tpu.memory_space<smem>>
    %838 = vector.broadcast %837 : f32 to vector<8x128xf32>
    %839 = arith.addf %656, %838 : vector<8x128xf32>
    %840 = arith.cmpf ogt, %839, %835 : vector<8x128xf32>
    %841 = arith.select %840, %839, %835 : vector<8x128xi1>, vector<8x128xf32>
    %842 = arith.select %840, %3, %836 : vector<8x128xi1>, vector<8x128xi32>
    %c124 = arith.constant 124 : index
    %843 = memref.load %arg2[%c124] : memref<175xf32, #tpu.memory_space<smem>>
    %844 = vector.broadcast %843 : f32 to vector<8x128xf32>
    %845 = arith.addf %689, %844 : vector<8x128xf32>
    %846 = arith.cmpf ogt, %845, %841 : vector<8x128xf32>
    %847 = arith.select %846, %845, %841 : vector<8x128xi1>, vector<8x128xf32>
    %848 = arith.select %846, %4, %842 : vector<8x128xi1>, vector<8x128xi32>
    %c4_246 = arith.constant 4 : index
    %c4_247 = arith.constant 4 : index
    %c0_248 = arith.constant 0 : index
    %c0_249 = arith.constant 0 : index
    %849 = vector.load %arg8[%c4_246, %c4_247, %c0_248, %c0_249] : memref<7x5x8x128xi32, #tpu.memory_space<vmem>>, vector<1x1x8x128xi32>
    %850 = vector.shape_cast %849 : vector<1x1x8x128xi32> to vector<8x128xi32>
    %851 = vector.shape_cast %848 : vector<8x128xi32> to vector<1x1x8x128xi32>
    tpu.vector_store %arg8[%c4_246, %c4_247, %c0_248, %c0_249], %851 {strides = array<i32>} : memref<7x5x8x128xi32, #tpu.memory_space<vmem>>, vector<1x1x8x128xi32>,
    %c0_250 = arith.constant 0 : index
    %c5_251 = arith.constant 5 : index
    %c4_252 = arith.constant 4 : index
    %c0_253 = arith.constant 0 : index
    %c0_254 = arith.constant 0 : index
    %852 = vector.load %arg5[%c0_250, %c5_251, %c4_252, %c0_253, %c0_254] : memref<1x8x5x8x128xf32, #tpu.memory_space<vmem>>, vector<1x1x1x8x128xf32>
    %853 = vector.shape_cast %852 : vector<1x1x1x8x128xf32> to vector<8x128xf32>
    %854 = arith.addf %847, %853 : vector<8x128xf32>
    %c125 = arith.constant 125 : index
    %855 = memref.load %arg2[%c125] : memref<175xf32, #tpu.memory_space<smem>>
    %856 = vector.broadcast %855 : f32 to vector<8x128xf32>
    %857 = arith.addf %722, %856 : vector<8x128xf32>
    %c130 = arith.constant 130 : index
    %858 = memref.load %arg2[%c130] : memref<175xf32, #tpu.memory_space<smem>>
    %859 = vector.broadcast %858 : f32 to vector<8x128xf32>
    %860 = arith.addf %755, %859 : vector<8x128xf32>
    %861 = arith.cmpf ogt, %860, %857 : vector<8x128xf32>
    %862 = arith.select %861, %860, %857 : vector<8x128xi1>, vector<8x128xf32>
    %863 = arith.select %861, %1, %0 : vector<8x128xi1>, vector<8x128xi32>
    %c135 = arith.constant 135 : index
    %864 = memref.load %arg2[%c135] : memref<175xf32, #tpu.memory_space<smem>>
    %865 = vector.broadcast %864 : f32 to vector<8x128xf32>
    %866 = arith.addf %788, %865 : vector<8x128xf32>
    %867 = arith.cmpf ogt, %866, %862 : vector<8x128xf32>
    %868 = arith.select %867, %866, %862 : vector<8x128xi1>, vector<8x128xf32>
    %869 = arith.select %867, %2, %863 : vector<8x128xi1>, vector<8x128xi32>
    %c140 = arith.constant 140 : index
    %870 = memref.load %arg2[%c140] : memref<175xf32, #tpu.memory_space<smem>>
    %871 = vector.broadcast %870 : f32 to vector<8x128xf32>
    %872 = arith.addf %821, %871 : vector<8x128xf32>
    %873 = arith.cmpf ogt, %872, %868 : vector<8x128xf32>
    %874 = arith.select %873, %872, %868 : vector<8x128xi1>, vector<8x128xf32>
    %875 = arith.select %873, %3, %869 : vector<8x128xi1>, vector<8x128xi32>
    %c145 = arith.constant 145 : index
    %876 = memref.load %arg2[%c145] : memref<175xf32, #tpu.memory_space<smem>>
    %877 = vector.broadcast %876 : f32 to vector<8x128xf32>
    %878 = arith.addf %854, %877 : vector<8x128xf32>
    %879 = arith.cmpf ogt, %878, %874 : vector<8x128xf32>
    %880 = arith.select %879, %878, %874 : vector<8x128xi1>, vector<8x128xf32>
    %881 = arith.select %879, %4, %875 : vector<8x128xi1>, vector<8x128xi32>
    %c5_255 = arith.constant 5 : index
    %c0_256 = arith.constant 0 : index
    %c0_257 = arith.constant 0 : index
    %c0_258 = arith.constant 0 : index
    %882 = vector.load %arg8[%c5_255, %c0_256, %c0_257, %c0_258] : memref<7x5x8x128xi32, #tpu.memory_space<vmem>>, vector<1x1x8x128xi32>
    %883 = vector.shape_cast %882 : vector<1x1x8x128xi32> to vector<8x128xi32>
    %884 = vector.shape_cast %881 : vector<8x128xi32> to vector<1x1x8x128xi32>
    tpu.vector_store %arg8[%c5_255, %c0_256, %c0_257, %c0_258], %884 {strides = array<i32>} : memref<7x5x8x128xi32, #tpu.memory_space<vmem>>, vector<1x1x8x128xi32>,
    %c0_259 = arith.constant 0 : index
    %c6_260 = arith.constant 6 : index
    %c0_261 = arith.constant 0 : index
    %c0_262 = arith.constant 0 : index
    %c0_263 = arith.constant 0 : index
    %885 = vector.load %arg5[%c0_259, %c6_260, %c0_261, %c0_262, %c0_263] : memref<1x8x5x8x128xf32, #tpu.memory_space<vmem>>, vector<1x1x1x8x128xf32>
    %886 = vector.shape_cast %885 : vector<1x1x1x8x128xf32> to vector<8x128xf32>
    %887 = arith.addf %880, %886 : vector<8x128xf32>
    %c126 = arith.constant 126 : index
    %888 = memref.load %arg2[%c126] : memref<175xf32, #tpu.memory_space<smem>>
    %889 = vector.broadcast %888 : f32 to vector<8x128xf32>
    %890 = arith.addf %722, %889 : vector<8x128xf32>
    %c131 = arith.constant 131 : index
    %891 = memref.load %arg2[%c131] : memref<175xf32, #tpu.memory_space<smem>>
    %892 = vector.broadcast %891 : f32 to vector<8x128xf32>
    %893 = arith.addf %755, %892 : vector<8x128xf32>
    %894 = arith.cmpf ogt, %893, %890 : vector<8x128xf32>
    %895 = arith.select %894, %893, %890 : vector<8x128xi1>, vector<8x128xf32>
    %896 = arith.select %894, %1, %0 : vector<8x128xi1>, vector<8x128xi32>
    %c136 = arith.constant 136 : index
    %897 = memref.load %arg2[%c136] : memref<175xf32, #tpu.memory_space<smem>>
    %898 = vector.broadcast %897 : f32 to vector<8x128xf32>
    %899 = arith.addf %788, %898 : vector<8x128xf32>
    %900 = arith.cmpf ogt, %899, %895 : vector<8x128xf32>
    %901 = arith.select %900, %899, %895 : vector<8x128xi1>, vector<8x128xf32>
    %902 = arith.select %900, %2, %896 : vector<8x128xi1>, vector<8x128xi32>
    %c141 = arith.constant 141 : index
    %903 = memref.load %arg2[%c141] : memref<175xf32, #tpu.memory_space<smem>>
    %904 = vector.broadcast %903 : f32 to vector<8x128xf32>
    %905 = arith.addf %821, %904 : vector<8x128xf32>
    %906 = arith.cmpf ogt, %905, %901 : vector<8x128xf32>
    %907 = arith.select %906, %905, %901 : vector<8x128xi1>, vector<8x128xf32>
    %908 = arith.select %906, %3, %902 : vector<8x128xi1>, vector<8x128xi32>
    %c146 = arith.constant 146 : index
    %909 = memref.load %arg2[%c146] : memref<175xf32, #tpu.memory_space<smem>>
    %910 = vector.broadcast %909 : f32 to vector<8x128xf32>
    %911 = arith.addf %854, %910 : vector<8x128xf32>
    %912 = arith.cmpf ogt, %911, %907 : vector<8x128xf32>
    %913 = arith.select %912, %911, %907 : vector<8x128xi1>, vector<8x128xf32>
    %914 = arith.select %912, %4, %908 : vector<8x128xi1>, vector<8x128xi32>
    %c5_264 = arith.constant 5 : index
    %c1_265 = arith.constant 1 : index
    %c0_266 = arith.constant 0 : index
    %c0_267 = arith.constant 0 : index
    %915 = vector.load %arg8[%c5_264, %c1_265, %c0_266, %c0_267] : memref<7x5x8x128xi32, #tpu.memory_space<vmem>>, vector<1x1x8x128xi32>
    %916 = vector.shape_cast %915 : vector<1x1x8x128xi32> to vector<8x128xi32>
    %917 = vector.shape_cast %914 : vector<8x128xi32> to vector<1x1x8x128xi32>
    tpu.vector_store %arg8[%c5_264, %c1_265, %c0_266, %c0_267], %917 {strides = array<i32>} : memref<7x5x8x128xi32, #tpu.memory_space<vmem>>, vector<1x1x8x128xi32>,
    %c0_268 = arith.constant 0 : index
    %c6_269 = arith.constant 6 : index
    %c1_270 = arith.constant 1 : index
    %c0_271 = arith.constant 0 : index
    %c0_272 = arith.constant 0 : index
    %918 = vector.load %arg5[%c0_268, %c6_269, %c1_270, %c0_271, %c0_272] : memref<1x8x5x8x128xf32, #tpu.memory_space<vmem>>, vector<1x1x1x8x128xf32>
    %919 = vector.shape_cast %918 : vector<1x1x1x8x128xf32> to vector<8x128xf32>
    %920 = arith.addf %913, %919 : vector<8x128xf32>
    %c127 = arith.constant 127 : index
    %921 = memref.load %arg2[%c127] : memref<175xf32, #tpu.memory_space<smem>>
    %922 = vector.broadcast %921 : f32 to vector<8x128xf32>
    %923 = arith.addf %722, %922 : vector<8x128xf32>
    %c132 = arith.constant 132 : index
    %924 = memref.load %arg2[%c132] : memref<175xf32, #tpu.memory_space<smem>>
    %925 = vector.broadcast %924 : f32 to vector<8x128xf32>
    %926 = arith.addf %755, %925 : vector<8x128xf32>
    %927 = arith.cmpf ogt, %926, %923 : vector<8x128xf32>
    %928 = arith.select %927, %926, %923 : vector<8x128xi1>, vector<8x128xf32>
    %929 = arith.select %927, %1, %0 : vector<8x128xi1>, vector<8x128xi32>
    %c137 = arith.constant 137 : index
    %930 = memref.load %arg2[%c137] : memref<175xf32, #tpu.memory_space<smem>>
    %931 = vector.broadcast %930 : f32 to vector<8x128xf32>
    %932 = arith.addf %788, %931 : vector<8x128xf32>
    %933 = arith.cmpf ogt, %932, %928 : vector<8x128xf32>
    %934 = arith.select %933, %932, %928 : vector<8x128xi1>, vector<8x128xf32>
    %935 = arith.select %933, %2, %929 : vector<8x128xi1>, vector<8x128xi32>
    %c142 = arith.constant 142 : index
    %936 = memref.load %arg2[%c142] : memref<175xf32, #tpu.memory_space<smem>>
    %937 = vector.broadcast %936 : f32 to vector<8x128xf32>
    %938 = arith.addf %821, %937 : vector<8x128xf32>
    %939 = arith.cmpf ogt, %938, %934 : vector<8x128xf32>
    %940 = arith.select %939, %938, %934 : vector<8x128xi1>, vector<8x128xf32>
    %941 = arith.select %939, %3, %935 : vector<8x128xi1>, vector<8x128xi32>
    %c147 = arith.constant 147 : index
    %942 = memref.load %arg2[%c147] : memref<175xf32, #tpu.memory_space<smem>>
    %943 = vector.broadcast %942 : f32 to vector<8x128xf32>
    %944 = arith.addf %854, %943 : vector<8x128xf32>
    %945 = arith.cmpf ogt, %944, %940 : vector<8x128xf32>
    %946 = arith.select %945, %944, %940 : vector<8x128xi1>, vector<8x128xf32>
    %947 = arith.select %945, %4, %941 : vector<8x128xi1>, vector<8x128xi32>
    %c5_273 = arith.constant 5 : index
    %c2_274 = arith.constant 2 : index
    %c0_275 = arith.constant 0 : index
    %c0_276 = arith.constant 0 : index
    %948 = vector.load %arg8[%c5_273, %c2_274, %c0_275, %c0_276] : memref<7x5x8x128xi32, #tpu.memory_space<vmem>>, vector<1x1x8x128xi32>
    %949 = vector.shape_cast %948 : vector<1x1x8x128xi32> to vector<8x128xi32>
    %950 = vector.shape_cast %947 : vector<8x128xi32> to vector<1x1x8x128xi32>
    tpu.vector_store %arg8[%c5_273, %c2_274, %c0_275, %c0_276], %950 {strides = array<i32>} : memref<7x5x8x128xi32, #tpu.memory_space<vmem>>, vector<1x1x8x128xi32>,
    %c0_277 = arith.constant 0 : index
    %c6_278 = arith.constant 6 : index
    %c2_279 = arith.constant 2 : index
    %c0_280 = arith.constant 0 : index
    %c0_281 = arith.constant 0 : index
    %951 = vector.load %arg5[%c0_277, %c6_278, %c2_279, %c0_280, %c0_281] : memref<1x8x5x8x128xf32, #tpu.memory_space<vmem>>, vector<1x1x1x8x128xf32>
    %952 = vector.shape_cast %951 : vector<1x1x1x8x128xf32> to vector<8x128xf32>
    %953 = arith.addf %946, %952 : vector<8x128xf32>
    %c128 = arith.constant 128 : index
    %954 = memref.load %arg2[%c128] : memref<175xf32, #tpu.memory_space<smem>>
    %955 = vector.broadcast %954 : f32 to vector<8x128xf32>
    %956 = arith.addf %722, %955 : vector<8x128xf32>
    %c133 = arith.constant 133 : index
    %957 = memref.load %arg2[%c133] : memref<175xf32, #tpu.memory_space<smem>>
    %958 = vector.broadcast %957 : f32 to vector<8x128xf32>
    %959 = arith.addf %755, %958 : vector<8x128xf32>
    %960 = arith.cmpf ogt, %959, %956 : vector<8x128xf32>
    %961 = arith.select %960, %959, %956 : vector<8x128xi1>, vector<8x128xf32>
    %962 = arith.select %960, %1, %0 : vector<8x128xi1>, vector<8x128xi32>
    %c138 = arith.constant 138 : index
    %963 = memref.load %arg2[%c138] : memref<175xf32, #tpu.memory_space<smem>>
    %964 = vector.broadcast %963 : f32 to vector<8x128xf32>
    %965 = arith.addf %788, %964 : vector<8x128xf32>
    %966 = arith.cmpf ogt, %965, %961 : vector<8x128xf32>
    %967 = arith.select %966, %965, %961 : vector<8x128xi1>, vector<8x128xf32>
    %968 = arith.select %966, %2, %962 : vector<8x128xi1>, vector<8x128xi32>
    %c143 = arith.constant 143 : index
    %969 = memref.load %arg2[%c143] : memref<175xf32, #tpu.memory_space<smem>>
    %970 = vector.broadcast %969 : f32 to vector<8x128xf32>
    %971 = arith.addf %821, %970 : vector<8x128xf32>
    %972 = arith.cmpf ogt, %971, %967 : vector<8x128xf32>
    %973 = arith.select %972, %971, %967 : vector<8x128xi1>, vector<8x128xf32>
    %974 = arith.select %972, %3, %968 : vector<8x128xi1>, vector<8x128xi32>
    %c148 = arith.constant 148 : index
    %975 = memref.load %arg2[%c148] : memref<175xf32, #tpu.memory_space<smem>>
    %976 = vector.broadcast %975 : f32 to vector<8x128xf32>
    %977 = arith.addf %854, %976 : vector<8x128xf32>
    %978 = arith.cmpf ogt, %977, %973 : vector<8x128xf32>
    %979 = arith.select %978, %977, %973 : vector<8x128xi1>, vector<8x128xf32>
    %980 = arith.select %978, %4, %974 : vector<8x128xi1>, vector<8x128xi32>
    %c5_282 = arith.constant 5 : index
    %c3_283 = arith.constant 3 : index
    %c0_284 = arith.constant 0 : index
    %c0_285 = arith.constant 0 : index
    %981 = vector.load %arg8[%c5_282, %c3_283, %c0_284, %c0_285] : memref<7x5x8x128xi32, #tpu.memory_space<vmem>>, vector<1x1x8x128xi32>
    %982 = vector.shape_cast %981 : vector<1x1x8x128xi32> to vector<8x128xi32>
    %983 = vector.shape_cast %980 : vector<8x128xi32> to vector<1x1x8x128xi32>
    tpu.vector_store %arg8[%c5_282, %c3_283, %c0_284, %c0_285], %983 {strides = array<i32>} : memref<7x5x8x128xi32, #tpu.memory_space<vmem>>, vector<1x1x8x128xi32>,
    %c0_286 = arith.constant 0 : index
    %c6_287 = arith.constant 6 : index
    %c3_288 = arith.constant 3 : index
    %c0_289 = arith.constant 0 : index
    %c0_290 = arith.constant 0 : index
    %984 = vector.load %arg5[%c0_286, %c6_287, %c3_288, %c0_289, %c0_290] : memref<1x8x5x8x128xf32, #tpu.memory_space<vmem>>, vector<1x1x1x8x128xf32>
    %985 = vector.shape_cast %984 : vector<1x1x1x8x128xf32> to vector<8x128xf32>
    %986 = arith.addf %979, %985 : vector<8x128xf32>
    %c129 = arith.constant 129 : index
    %987 = memref.load %arg2[%c129] : memref<175xf32, #tpu.memory_space<smem>>
    %988 = vector.broadcast %987 : f32 to vector<8x128xf32>
    %989 = arith.addf %722, %988 : vector<8x128xf32>
    %c134 = arith.constant 134 : index
    %990 = memref.load %arg2[%c134] : memref<175xf32, #tpu.memory_space<smem>>
    %991 = vector.broadcast %990 : f32 to vector<8x128xf32>
    %992 = arith.addf %755, %991 : vector<8x128xf32>
    %993 = arith.cmpf ogt, %992, %989 : vector<8x128xf32>
    %994 = arith.select %993, %992, %989 : vector<8x128xi1>, vector<8x128xf32>
    %995 = arith.select %993, %1, %0 : vector<8x128xi1>, vector<8x128xi32>
    %c139 = arith.constant 139 : index
    %996 = memref.load %arg2[%c139] : memref<175xf32, #tpu.memory_space<smem>>
    %997 = vector.broadcast %996 : f32 to vector<8x128xf32>
    %998 = arith.addf %788, %997 : vector<8x128xf32>
    %999 = arith.cmpf ogt, %998, %994 : vector<8x128xf32>
    %1000 = arith.select %999, %998, %994 : vector<8x128xi1>, vector<8x128xf32>
    %1001 = arith.select %999, %2, %995 : vector<8x128xi1>, vector<8x128xi32>
    %c144 = arith.constant 144 : index
    %1002 = memref.load %arg2[%c144] : memref<175xf32, #tpu.memory_space<smem>>
    %1003 = vector.broadcast %1002 : f32 to vector<8x128xf32>
    %1004 = arith.addf %821, %1003 : vector<8x128xf32>
    %1005 = arith.cmpf ogt, %1004, %1000 : vector<8x128xf32>
    %1006 = arith.select %1005, %1004, %1000 : vector<8x128xi1>, vector<8x128xf32>
    %1007 = arith.select %1005, %3, %1001 : vector<8x128xi1>, vector<8x128xi32>
    %c149 = arith.constant 149 : index
    %1008 = memref.load %arg2[%c149] : memref<175xf32, #tpu.memory_space<smem>>
    %1009 = vector.broadcast %1008 : f32 to vector<8x128xf32>
    %1010 = arith.addf %854, %1009 : vector<8x128xf32>
    %1011 = arith.cmpf ogt, %1010, %1006 : vector<8x128xf32>
    %1012 = arith.select %1011, %1010, %1006 : vector<8x128xi1>, vector<8x128xf32>
    %1013 = arith.select %1011, %4, %1007 : vector<8x128xi1>, vector<8x128xi32>
    %c5_291 = arith.constant 5 : index
    %c4_292 = arith.constant 4 : index
    %c0_293 = arith.constant 0 : index
    %c0_294 = arith.constant 0 : index
    %1014 = vector.load %arg8[%c5_291, %c4_292, %c0_293, %c0_294] : memref<7x5x8x128xi32, #tpu.memory_space<vmem>>, vector<1x1x8x128xi32>
    %1015 = vector.shape_cast %1014 : vector<1x1x8x128xi32> to vector<8x128xi32>
    %1016 = vector.shape_cast %1013 : vector<8x128xi32> to vector<1x1x8x128xi32>
    tpu.vector_store %arg8[%c5_291, %c4_292, %c0_293, %c0_294], %1016 {strides = array<i32>} : memref<7x5x8x128xi32, #tpu.memory_space<vmem>>, vector<1x1x8x128xi32>,
    %c0_295 = arith.constant 0 : index
    %c6_296 = arith.constant 6 : index
    %c4_297 = arith.constant 4 : index
    %c0_298 = arith.constant 0 : index
    %c0_299 = arith.constant 0 : index
    %1017 = vector.load %arg5[%c0_295, %c6_296, %c4_297, %c0_298, %c0_299] : memref<1x8x5x8x128xf32, #tpu.memory_space<vmem>>, vector<1x1x1x8x128xf32>
    %1018 = vector.shape_cast %1017 : vector<1x1x1x8x128xf32> to vector<8x128xf32>
    %1019 = arith.addf %1012, %1018 : vector<8x128xf32>
    %c150 = arith.constant 150 : index
    %1020 = memref.load %arg2[%c150] : memref<175xf32, #tpu.memory_space<smem>>
    %1021 = vector.broadcast %1020 : f32 to vector<8x128xf32>
    %1022 = arith.addf %887, %1021 : vector<8x128xf32>
    %c155 = arith.constant 155 : index
    %1023 = memref.load %arg2[%c155] : memref<175xf32, #tpu.memory_space<smem>>
    %1024 = vector.broadcast %1023 : f32 to vector<8x128xf32>
    %1025 = arith.addf %920, %1024 : vector<8x128xf32>
    %1026 = arith.cmpf ogt, %1025, %1022 : vector<8x128xf32>
    %1027 = arith.select %1026, %1025, %1022 : vector<8x128xi1>, vector<8x128xf32>
    %1028 = arith.select %1026, %1, %0 : vector<8x128xi1>, vector<8x128xi32>
    %c160 = arith.constant 160 : index
    %1029 = memref.load %arg2[%c160] : memref<175xf32, #tpu.memory_space<smem>>
    %1030 = vector.broadcast %1029 : f32 to vector<8x128xf32>
    %1031 = arith.addf %953, %1030 : vector<8x128xf32>
    %1032 = arith.cmpf ogt, %1031, %1027 : vector<8x128xf32>
    %1033 = arith.select %1032, %1031, %1027 : vector<8x128xi1>, vector<8x128xf32>
    %1034 = arith.select %1032, %2, %1028 : vector<8x128xi1>, vector<8x128xi32>
    %c165 = arith.constant 165 : index
    %1035 = memref.load %arg2[%c165] : memref<175xf32, #tpu.memory_space<smem>>
    %1036 = vector.broadcast %1035 : f32 to vector<8x128xf32>
    %1037 = arith.addf %986, %1036 : vector<8x128xf32>
    %1038 = arith.cmpf ogt, %1037, %1033 : vector<8x128xf32>
    %1039 = arith.select %1038, %1037, %1033 : vector<8x128xi1>, vector<8x128xf32>
    %1040 = arith.select %1038, %3, %1034 : vector<8x128xi1>, vector<8x128xi32>
    %c170 = arith.constant 170 : index
    %1041 = memref.load %arg2[%c170] : memref<175xf32, #tpu.memory_space<smem>>
    %1042 = vector.broadcast %1041 : f32 to vector<8x128xf32>
    %1043 = arith.addf %1019, %1042 : vector<8x128xf32>
    %1044 = arith.cmpf ogt, %1043, %1039 : vector<8x128xf32>
    %1045 = arith.select %1044, %1043, %1039 : vector<8x128xi1>, vector<8x128xf32>
    %1046 = arith.select %1044, %4, %1040 : vector<8x128xi1>, vector<8x128xi32>
    %c6_300 = arith.constant 6 : index
    %c0_301 = arith.constant 0 : index
    %c0_302 = arith.constant 0 : index
    %c0_303 = arith.constant 0 : index
    %1047 = vector.load %arg8[%c6_300, %c0_301, %c0_302, %c0_303] : memref<7x5x8x128xi32, #tpu.memory_space<vmem>>, vector<1x1x8x128xi32>
    %1048 = vector.shape_cast %1047 : vector<1x1x8x128xi32> to vector<8x128xi32>
    %1049 = vector.shape_cast %1046 : vector<8x128xi32> to vector<1x1x8x128xi32>
    tpu.vector_store %arg8[%c6_300, %c0_301, %c0_302, %c0_303], %1049 {strides = array<i32>} : memref<7x5x8x128xi32, #tpu.memory_space<vmem>>, vector<1x1x8x128xi32>,
    %c0_304 = arith.constant 0 : index
    %c7_305 = arith.constant 7 : index
    %c0_306 = arith.constant 0 : index
    %c0_307 = arith.constant 0 : index
    %c0_308 = arith.constant 0 : index
    %1050 = vector.load %arg5[%c0_304, %c7_305, %c0_306, %c0_307, %c0_308] : memref<1x8x5x8x128xf32, #tpu.memory_space<vmem>>, vector<1x1x1x8x128xf32>
    %1051 = vector.shape_cast %1050 : vector<1x1x1x8x128xf32> to vector<8x128xf32>
    %1052 = arith.addf %1045, %1051 : vector<8x128xf32>
    %c151 = arith.constant 151 : index
    %1053 = memref.load %arg2[%c151] : memref<175xf32, #tpu.memory_space<smem>>
    %1054 = vector.broadcast %1053 : f32 to vector<8x128xf32>
    %1055 = arith.addf %887, %1054 : vector<8x128xf32>
    %c156 = arith.constant 156 : index
    %1056 = memref.load %arg2[%c156] : memref<175xf32, #tpu.memory_space<smem>>
    %1057 = vector.broadcast %1056 : f32 to vector<8x128xf32>
    %1058 = arith.addf %920, %1057 : vector<8x128xf32>
    %1059 = arith.cmpf ogt, %1058, %1055 : vector<8x128xf32>
    %1060 = arith.select %1059, %1058, %1055 : vector<8x128xi1>, vector<8x128xf32>
    %1061 = arith.select %1059, %1, %0 : vector<8x128xi1>, vector<8x128xi32>
    %c161 = arith.constant 161 : index
    %1062 = memref.load %arg2[%c161] : memref<175xf32, #tpu.memory_space<smem>>
    %1063 = vector.broadcast %1062 : f32 to vector<8x128xf32>
    %1064 = arith.addf %953, %1063 : vector<8x128xf32>
    %1065 = arith.cmpf ogt, %1064, %1060 : vector<8x128xf32>
    %1066 = arith.select %1065, %1064, %1060 : vector<8x128xi1>, vector<8x128xf32>
    %1067 = arith.select %1065, %2, %1061 : vector<8x128xi1>, vector<8x128xi32>
    %c166 = arith.constant 166 : index
    %1068 = memref.load %arg2[%c166] : memref<175xf32, #tpu.memory_space<smem>>
    %1069 = vector.broadcast %1068 : f32 to vector<8x128xf32>
    %1070 = arith.addf %986, %1069 : vector<8x128xf32>
    %1071 = arith.cmpf ogt, %1070, %1066 : vector<8x128xf32>
    %1072 = arith.select %1071, %1070, %1066 : vector<8x128xi1>, vector<8x128xf32>
    %1073 = arith.select %1071, %3, %1067 : vector<8x128xi1>, vector<8x128xi32>
    %c171 = arith.constant 171 : index
    %1074 = memref.load %arg2[%c171] : memref<175xf32, #tpu.memory_space<smem>>
    %1075 = vector.broadcast %1074 : f32 to vector<8x128xf32>
    %1076 = arith.addf %1019, %1075 : vector<8x128xf32>
    %1077 = arith.cmpf ogt, %1076, %1072 : vector<8x128xf32>
    %1078 = arith.select %1077, %1076, %1072 : vector<8x128xi1>, vector<8x128xf32>
    %1079 = arith.select %1077, %4, %1073 : vector<8x128xi1>, vector<8x128xi32>
    %c6_309 = arith.constant 6 : index
    %c1_310 = arith.constant 1 : index
    %c0_311 = arith.constant 0 : index
    %c0_312 = arith.constant 0 : index
    %1080 = vector.load %arg8[%c6_309, %c1_310, %c0_311, %c0_312] : memref<7x5x8x128xi32, #tpu.memory_space<vmem>>, vector<1x1x8x128xi32>
    %1081 = vector.shape_cast %1080 : vector<1x1x8x128xi32> to vector<8x128xi32>
    %1082 = vector.shape_cast %1079 : vector<8x128xi32> to vector<1x1x8x128xi32>
    tpu.vector_store %arg8[%c6_309, %c1_310, %c0_311, %c0_312], %1082 {strides = array<i32>} : memref<7x5x8x128xi32, #tpu.memory_space<vmem>>, vector<1x1x8x128xi32>,
    %c0_313 = arith.constant 0 : index
    %c7_314 = arith.constant 7 : index
    %c1_315 = arith.constant 1 : index
    %c0_316 = arith.constant 0 : index
    %c0_317 = arith.constant 0 : index
    %1083 = vector.load %arg5[%c0_313, %c7_314, %c1_315, %c0_316, %c0_317] : memref<1x8x5x8x128xf32, #tpu.memory_space<vmem>>, vector<1x1x1x8x128xf32>
    %1084 = vector.shape_cast %1083 : vector<1x1x1x8x128xf32> to vector<8x128xf32>
    %1085 = arith.addf %1078, %1084 : vector<8x128xf32>
    %c152 = arith.constant 152 : index
    %1086 = memref.load %arg2[%c152] : memref<175xf32, #tpu.memory_space<smem>>
    %1087 = vector.broadcast %1086 : f32 to vector<8x128xf32>
    %1088 = arith.addf %887, %1087 : vector<8x128xf32>
    %c157 = arith.constant 157 : index
    %1089 = memref.load %arg2[%c157] : memref<175xf32, #tpu.memory_space<smem>>
    %1090 = vector.broadcast %1089 : f32 to vector<8x128xf32>
    %1091 = arith.addf %920, %1090 : vector<8x128xf32>
    %1092 = arith.cmpf ogt, %1091, %1088 : vector<8x128xf32>
    %1093 = arith.select %1092, %1091, %1088 : vector<8x128xi1>, vector<8x128xf32>
    %1094 = arith.select %1092, %1, %0 : vector<8x128xi1>, vector<8x128xi32>
    %c162 = arith.constant 162 : index
    %1095 = memref.load %arg2[%c162] : memref<175xf32, #tpu.memory_space<smem>>
    %1096 = vector.broadcast %1095 : f32 to vector<8x128xf32>
    %1097 = arith.addf %953, %1096 : vector<8x128xf32>
    %1098 = arith.cmpf ogt, %1097, %1093 : vector<8x128xf32>
    %1099 = arith.select %1098, %1097, %1093 : vector<8x128xi1>, vector<8x128xf32>
    %1100 = arith.select %1098, %2, %1094 : vector<8x128xi1>, vector<8x128xi32>
    %c167 = arith.constant 167 : index
    %1101 = memref.load %arg2[%c167] : memref<175xf32, #tpu.memory_space<smem>>
    %1102 = vector.broadcast %1101 : f32 to vector<8x128xf32>
    %1103 = arith.addf %986, %1102 : vector<8x128xf32>
    %1104 = arith.cmpf ogt, %1103, %1099 : vector<8x128xf32>
    %1105 = arith.select %1104, %1103, %1099 : vector<8x128xi1>, vector<8x128xf32>
    %1106 = arith.select %1104, %3, %1100 : vector<8x128xi1>, vector<8x128xi32>
    %c172 = arith.constant 172 : index
    %1107 = memref.load %arg2[%c172] : memref<175xf32, #tpu.memory_space<smem>>
    %1108 = vector.broadcast %1107 : f32 to vector<8x128xf32>
    %1109 = arith.addf %1019, %1108 : vector<8x128xf32>
    %1110 = arith.cmpf ogt, %1109, %1105 : vector<8x128xf32>
    %1111 = arith.select %1110, %1109, %1105 : vector<8x128xi1>, vector<8x128xf32>
    %1112 = arith.select %1110, %4, %1106 : vector<8x128xi1>, vector<8x128xi32>
    %c6_318 = arith.constant 6 : index
    %c2_319 = arith.constant 2 : index
    %c0_320 = arith.constant 0 : index
    %c0_321 = arith.constant 0 : index
    %1113 = vector.load %arg8[%c6_318, %c2_319, %c0_320, %c0_321] : memref<7x5x8x128xi32, #tpu.memory_space<vmem>>, vector<1x1x8x128xi32>
    %1114 = vector.shape_cast %1113 : vector<1x1x8x128xi32> to vector<8x128xi32>
    %1115 = vector.shape_cast %1112 : vector<8x128xi32> to vector<1x1x8x128xi32>
    tpu.vector_store %arg8[%c6_318, %c2_319, %c0_320, %c0_321], %1115 {strides = array<i32>} : memref<7x5x8x128xi32, #tpu.memory_space<vmem>>, vector<1x1x8x128xi32>,
    %c0_322 = arith.constant 0 : index
    %c7_323 = arith.constant 7 : index
    %c2_324 = arith.constant 2 : index
    %c0_325 = arith.constant 0 : index
    %c0_326 = arith.constant 0 : index
    %1116 = vector.load %arg5[%c0_322, %c7_323, %c2_324, %c0_325, %c0_326] : memref<1x8x5x8x128xf32, #tpu.memory_space<vmem>>, vector<1x1x1x8x128xf32>
    %1117 = vector.shape_cast %1116 : vector<1x1x1x8x128xf32> to vector<8x128xf32>
    %1118 = arith.addf %1111, %1117 : vector<8x128xf32>
    %c153 = arith.constant 153 : index
    %1119 = memref.load %arg2[%c153] : memref<175xf32, #tpu.memory_space<smem>>
    %1120 = vector.broadcast %1119 : f32 to vector<8x128xf32>
    %1121 = arith.addf %887, %1120 : vector<8x128xf32>
    %c158 = arith.constant 158 : index
    %1122 = memref.load %arg2[%c158] : memref<175xf32, #tpu.memory_space<smem>>
    %1123 = vector.broadcast %1122 : f32 to vector<8x128xf32>
    %1124 = arith.addf %920, %1123 : vector<8x128xf32>
    %1125 = arith.cmpf ogt, %1124, %1121 : vector<8x128xf32>
    %1126 = arith.select %1125, %1124, %1121 : vector<8x128xi1>, vector<8x128xf32>
    %1127 = arith.select %1125, %1, %0 : vector<8x128xi1>, vector<8x128xi32>
    %c163 = arith.constant 163 : index
    %1128 = memref.load %arg2[%c163] : memref<175xf32, #tpu.memory_space<smem>>
    %1129 = vector.broadcast %1128 : f32 to vector<8x128xf32>
    %1130 = arith.addf %953, %1129 : vector<8x128xf32>
    %1131 = arith.cmpf ogt, %1130, %1126 : vector<8x128xf32>
    %1132 = arith.select %1131, %1130, %1126 : vector<8x128xi1>, vector<8x128xf32>
    %1133 = arith.select %1131, %2, %1127 : vector<8x128xi1>, vector<8x128xi32>
    %c168 = arith.constant 168 : index
    %1134 = memref.load %arg2[%c168] : memref<175xf32, #tpu.memory_space<smem>>
    %1135 = vector.broadcast %1134 : f32 to vector<8x128xf32>
    %1136 = arith.addf %986, %1135 : vector<8x128xf32>
    %1137 = arith.cmpf ogt, %1136, %1132 : vector<8x128xf32>
    %1138 = arith.select %1137, %1136, %1132 : vector<8x128xi1>, vector<8x128xf32>
    %1139 = arith.select %1137, %3, %1133 : vector<8x128xi1>, vector<8x128xi32>
    %c173 = arith.constant 173 : index
    %1140 = memref.load %arg2[%c173] : memref<175xf32, #tpu.memory_space<smem>>
    %1141 = vector.broadcast %1140 : f32 to vector<8x128xf32>
    %1142 = arith.addf %1019, %1141 : vector<8x128xf32>
    %1143 = arith.cmpf ogt, %1142, %1138 : vector<8x128xf32>
    %1144 = arith.select %1143, %1142, %1138 : vector<8x128xi1>, vector<8x128xf32>
    %1145 = arith.select %1143, %4, %1139 : vector<8x128xi1>, vector<8x128xi32>
    %c6_327 = arith.constant 6 : index
    %c3_328 = arith.constant 3 : index
    %c0_329 = arith.constant 0 : index
    %c0_330 = arith.constant 0 : index
    %1146 = vector.load %arg8[%c6_327, %c3_328, %c0_329, %c0_330] : memref<7x5x8x128xi32, #tpu.memory_space<vmem>>, vector<1x1x8x128xi32>
    %1147 = vector.shape_cast %1146 : vector<1x1x8x128xi32> to vector<8x128xi32>
    %1148 = vector.shape_cast %1145 : vector<8x128xi32> to vector<1x1x8x128xi32>
    tpu.vector_store %arg8[%c6_327, %c3_328, %c0_329, %c0_330], %1148 {strides = array<i32>} : memref<7x5x8x128xi32, #tpu.memory_space<vmem>>, vector<1x1x8x128xi32>,
    %c0_331 = arith.constant 0 : index
    %c7_332 = arith.constant 7 : index
    %c3_333 = arith.constant 3 : index
    %c0_334 = arith.constant 0 : index
    %c0_335 = arith.constant 0 : index
    %1149 = vector.load %arg5[%c0_331, %c7_332, %c3_333, %c0_334, %c0_335] : memref<1x8x5x8x128xf32, #tpu.memory_space<vmem>>, vector<1x1x1x8x128xf32>
    %1150 = vector.shape_cast %1149 : vector<1x1x1x8x128xf32> to vector<8x128xf32>
    %1151 = arith.addf %1144, %1150 : vector<8x128xf32>
    %c154 = arith.constant 154 : index
    %1152 = memref.load %arg2[%c154] : memref<175xf32, #tpu.memory_space<smem>>
    %1153 = vector.broadcast %1152 : f32 to vector<8x128xf32>
    %1154 = arith.addf %887, %1153 : vector<8x128xf32>
    %c159 = arith.constant 159 : index
    %1155 = memref.load %arg2[%c159] : memref<175xf32, #tpu.memory_space<smem>>
    %1156 = vector.broadcast %1155 : f32 to vector<8x128xf32>
    %1157 = arith.addf %920, %1156 : vector<8x128xf32>
    %1158 = arith.cmpf ogt, %1157, %1154 : vector<8x128xf32>
    %1159 = arith.select %1158, %1157, %1154 : vector<8x128xi1>, vector<8x128xf32>
    %1160 = arith.select %1158, %1, %0 : vector<8x128xi1>, vector<8x128xi32>
    %c164 = arith.constant 164 : index
    %1161 = memref.load %arg2[%c164] : memref<175xf32, #tpu.memory_space<smem>>
    %1162 = vector.broadcast %1161 : f32 to vector<8x128xf32>
    %1163 = arith.addf %953, %1162 : vector<8x128xf32>
    %1164 = arith.cmpf ogt, %1163, %1159 : vector<8x128xf32>
    %1165 = arith.select %1164, %1163, %1159 : vector<8x128xi1>, vector<8x128xf32>
    %1166 = arith.select %1164, %2, %1160 : vector<8x128xi1>, vector<8x128xi32>
    %c169 = arith.constant 169 : index
    %1167 = memref.load %arg2[%c169] : memref<175xf32, #tpu.memory_space<smem>>
    %1168 = vector.broadcast %1167 : f32 to vector<8x128xf32>
    %1169 = arith.addf %986, %1168 : vector<8x128xf32>
    %1170 = arith.cmpf ogt, %1169, %1165 : vector<8x128xf32>
    %1171 = arith.select %1170, %1169, %1165 : vector<8x128xi1>, vector<8x128xf32>
    %1172 = arith.select %1170, %3, %1166 : vector<8x128xi1>, vector<8x128xi32>
    %c174 = arith.constant 174 : index
    %1173 = memref.load %arg2[%c174] : memref<175xf32, #tpu.memory_space<smem>>
    %1174 = vector.broadcast %1173 : f32 to vector<8x128xf32>
    %1175 = arith.addf %1019, %1174 : vector<8x128xf32>
    %1176 = arith.cmpf ogt, %1175, %1171 : vector<8x128xf32>
    %1177 = arith.select %1176, %1175, %1171 : vector<8x128xi1>, vector<8x128xf32>
    %1178 = arith.select %1176, %4, %1172 : vector<8x128xi1>, vector<8x128xi32>
    %c6_336 = arith.constant 6 : index
    %c4_337 = arith.constant 4 : index
    %c0_338 = arith.constant 0 : index
    %c0_339 = arith.constant 0 : index
    %1179 = vector.load %arg8[%c6_336, %c4_337, %c0_338, %c0_339] : memref<7x5x8x128xi32, #tpu.memory_space<vmem>>, vector<1x1x8x128xi32>
    %1180 = vector.shape_cast %1179 : vector<1x1x8x128xi32> to vector<8x128xi32>
    %1181 = vector.shape_cast %1178 : vector<8x128xi32> to vector<1x1x8x128xi32>
    tpu.vector_store %arg8[%c6_336, %c4_337, %c0_338, %c0_339], %1181 {strides = array<i32>} : memref<7x5x8x128xi32, #tpu.memory_space<vmem>>, vector<1x1x8x128xi32>,
    %c0_340 = arith.constant 0 : index
    %c7_341 = arith.constant 7 : index
    %c4_342 = arith.constant 4 : index
    %c0_343 = arith.constant 0 : index
    %c0_344 = arith.constant 0 : index
    %1182 = vector.load %arg5[%c0_340, %c7_341, %c4_342, %c0_343, %c0_344] : memref<1x8x5x8x128xf32, #tpu.memory_space<vmem>>, vector<1x1x1x8x128xf32>
    %1183 = vector.shape_cast %1182 : vector<1x1x1x8x128xf32> to vector<8x128xf32>
    %1184 = arith.addf %1177, %1183 : vector<8x128xf32>
    %c0_345 = arith.constant 0 : index
    %1185 = memref.load %arg4[%c0_345] : memref<5xf32, #tpu.memory_space<smem>>
    %1186 = vector.broadcast %1185 : f32 to vector<8x128xf32>
    %1187 = arith.addf %1052, %1186 : vector<8x128xf32>
    %c1_346 = arith.constant 1 : index
    %1188 = memref.load %arg4[%c1_346] : memref<5xf32, #tpu.memory_space<smem>>
    %1189 = vector.broadcast %1188 : f32 to vector<8x128xf32>
    %1190 = arith.addf %1085, %1189 : vector<8x128xf32>
    %c2_347 = arith.constant 2 : index
    %1191 = memref.load %arg4[%c2_347] : memref<5xf32, #tpu.memory_space<smem>>
    %1192 = vector.broadcast %1191 : f32 to vector<8x128xf32>
    %1193 = arith.addf %1118, %1192 : vector<8x128xf32>
    %c3_348 = arith.constant 3 : index
    %1194 = memref.load %arg4[%c3_348] : memref<5xf32, #tpu.memory_space<smem>>
    %1195 = vector.broadcast %1194 : f32 to vector<8x128xf32>
    %1196 = arith.addf %1151, %1195 : vector<8x128xf32>
    %c4_349 = arith.constant 4 : index
    %1197 = memref.load %arg4[%c4_349] : memref<5xf32, #tpu.memory_space<smem>>
    %1198 = vector.broadcast %1197 : f32 to vector<8x128xf32>
    %1199 = arith.addf %1184, %1198 : vector<8x128xf32>
    %1200 = arith.cmpf ogt, %1190, %1187 : vector<8x128xf32>
    %1201 = arith.select %1200, %1190, %1187 : vector<8x128xi1>, vector<8x128xf32>
    %1202 = arith.select %1200, %1, %0 : vector<8x128xi1>, vector<8x128xi32>
    %1203 = arith.cmpf ogt, %1193, %1201 : vector<8x128xf32>
    %1204 = arith.select %1203, %1193, %1201 : vector<8x128xi1>, vector<8x128xf32>
    %1205 = arith.select %1203, %2, %1202 : vector<8x128xi1>, vector<8x128xi32>
    %1206 = arith.cmpf ogt, %1196, %1204 : vector<8x128xf32>
    %1207 = arith.select %1206, %1196, %1204 : vector<8x128xi1>, vector<8x128xf32>
    %1208 = arith.select %1206, %3, %1205 : vector<8x128xi1>, vector<8x128xi32>
    %1209 = arith.cmpf ogt, %1199, %1207 : vector<8x128xf32>
    %1210 = arith.select %1209, %4, %1208 : vector<8x128xi1>, vector<8x128xi32>
    %c0_350 = arith.constant 0 : index
    %c0_351 = arith.constant 0 : index
    %c0_352 = arith.constant 0 : index
    %c0_353 = arith.constant 0 : index
    %1211 = vector.load %arg7[%c0_350, %c0_351, %c0_352, %c0_353] : memref<1x5x8x128xf32, #tpu.memory_space<vmem>>, vector<1x1x8x128xf32>
    %1212 = vector.shape_cast %1211 : vector<1x1x8x128xf32> to vector<8x128xf32>
    %1213 = vector.shape_cast %1187 : vector<8x128xf32> to vector<1x1x8x128xf32>
    tpu.vector_store %arg7[%c0_350, %c0_351, %c0_352, %c0_353], %1213 {strides = array<i32>} : memref<1x5x8x128xf32, #tpu.memory_space<vmem>>, vector<1x1x8x128xf32>,
    %c0_354 = arith.constant 0 : index
    %c1_355 = arith.constant 1 : index
    %c0_356 = arith.constant 0 : index
    %c0_357 = arith.constant 0 : index
    %1214 = vector.load %arg7[%c0_354, %c1_355, %c0_356, %c0_357] : memref<1x5x8x128xf32, #tpu.memory_space<vmem>>, vector<1x1x8x128xf32>
    %1215 = vector.shape_cast %1214 : vector<1x1x8x128xf32> to vector<8x128xf32>
    %1216 = vector.shape_cast %1190 : vector<8x128xf32> to vector<1x1x8x128xf32>
    tpu.vector_store %arg7[%c0_354, %c1_355, %c0_356, %c0_357], %1216 {strides = array<i32>} : memref<1x5x8x128xf32, #tpu.memory_space<vmem>>, vector<1x1x8x128xf32>,
    %c0_358 = arith.constant 0 : index
    %c2_359 = arith.constant 2 : index
    %c0_360 = arith.constant 0 : index
    %c0_361 = arith.constant 0 : index
    %1217 = vector.load %arg7[%c0_358, %c2_359, %c0_360, %c0_361] : memref<1x5x8x128xf32, #tpu.memory_space<vmem>>, vector<1x1x8x128xf32>
    %1218 = vector.shape_cast %1217 : vector<1x1x8x128xf32> to vector<8x128xf32>
    %1219 = vector.shape_cast %1193 : vector<8x128xf32> to vector<1x1x8x128xf32>
    tpu.vector_store %arg7[%c0_358, %c2_359, %c0_360, %c0_361], %1219 {strides = array<i32>} : memref<1x5x8x128xf32, #tpu.memory_space<vmem>>, vector<1x1x8x128xf32>,
    %c0_362 = arith.constant 0 : index
    %c3_363 = arith.constant 3 : index
    %c0_364 = arith.constant 0 : index
    %c0_365 = arith.constant 0 : index
    %1220 = vector.load %arg7[%c0_362, %c3_363, %c0_364, %c0_365] : memref<1x5x8x128xf32, #tpu.memory_space<vmem>>, vector<1x1x8x128xf32>
    %1221 = vector.shape_cast %1220 : vector<1x1x8x128xf32> to vector<8x128xf32>
    %1222 = vector.shape_cast %1196 : vector<8x128xf32> to vector<1x1x8x128xf32>
    tpu.vector_store %arg7[%c0_362, %c3_363, %c0_364, %c0_365], %1222 {strides = array<i32>} : memref<1x5x8x128xf32, #tpu.memory_space<vmem>>, vector<1x1x8x128xf32>,
    %c0_366 = arith.constant 0 : index
    %c4_367 = arith.constant 4 : index
    %c0_368 = arith.constant 0 : index
    %c0_369 = arith.constant 0 : index
    %1223 = vector.load %arg7[%c0_366, %c4_367, %c0_368, %c0_369] : memref<1x5x8x128xf32, #tpu.memory_space<vmem>>, vector<1x1x8x128xf32>
    %1224 = vector.shape_cast %1223 : vector<1x1x8x128xf32> to vector<8x128xf32>
    %1225 = vector.shape_cast %1199 : vector<8x128xf32> to vector<1x1x8x128xf32>
    tpu.vector_store %arg7[%c0_366, %c4_367, %c0_368, %c0_369], %1225 {strides = array<i32>} : memref<1x5x8x128xf32, #tpu.memory_space<vmem>>, vector<1x1x8x128xf32>,
    %c0_370 = arith.constant 0 : index
    %c7_371 = arith.constant 7 : index
    %c0_372 = arith.constant 0 : index
    %c0_373 = arith.constant 0 : index
    %1226 = vector.load %arg6[%c0_370, %c7_371, %c0_372, %c0_373] : memref<1x8x8x128xi32, #tpu.memory_space<vmem>>, vector<1x1x8x128xi32>
    %1227 = vector.shape_cast %1226 : vector<1x1x8x128xi32> to vector<8x128xi32>
    %1228 = vector.shape_cast %1210 : vector<8x128xi32> to vector<1x1x8x128xi32>
    tpu.vector_store %arg6[%c0_370, %c7_371, %c0_372, %c0_373], %1228 {strides = array<i32>} : memref<1x8x8x128xi32, #tpu.memory_space<vmem>>, vector<1x1x8x128xi32>,
    %c6_374 = arith.constant 6 : index
    %c0_375 = arith.constant 0 : index
    %c0_376 = arith.constant 0 : index
    %c0_377 = arith.constant 0 : index
    %1229 = vector.load %arg8[%c6_374, %c0_375, %c0_376, %c0_377] : memref<7x5x8x128xi32, #tpu.memory_space<vmem>>, vector<1x1x8x128xi32>
    %1230 = vector.shape_cast %1229 : vector<1x1x8x128xi32> to vector<8x128xi32>
    %1231 = arith.cmpi eq, %1210, %1 : vector<8x128xi32>
    %c6_378 = arith.constant 6 : index
    %c1_379 = arith.constant 1 : index
    %c0_380 = arith.constant 0 : index
    %c0_381 = arith.constant 0 : index
    %1232 = vector.load %arg8[%c6_378, %c1_379, %c0_380, %c0_381] : memref<7x5x8x128xi32, #tpu.memory_space<vmem>>, vector<1x1x8x128xi32>
    %1233 = vector.shape_cast %1232 : vector<1x1x8x128xi32> to vector<8x128xi32>
    %1234 = arith.select %1231, %1233, %1230 : vector<8x128xi1>, vector<8x128xi32>
    %1235 = arith.cmpi eq, %1210, %2 : vector<8x128xi32>
    %c6_382 = arith.constant 6 : index
    %c2_383 = arith.constant 2 : index
    %c0_384 = arith.constant 0 : index
    %c0_385 = arith.constant 0 : index
    %1236 = vector.load %arg8[%c6_382, %c2_383, %c0_384, %c0_385] : memref<7x5x8x128xi32, #tpu.memory_space<vmem>>, vector<1x1x8x128xi32>
    %1237 = vector.shape_cast %1236 : vector<1x1x8x128xi32> to vector<8x128xi32>
    %1238 = arith.select %1235, %1237, %1234 : vector<8x128xi1>, vector<8x128xi32>
    %1239 = arith.cmpi eq, %1210, %3 : vector<8x128xi32>
    %c6_386 = arith.constant 6 : index
    %c3_387 = arith.constant 3 : index
    %c0_388 = arith.constant 0 : index
    %c0_389 = arith.constant 0 : index
    %1240 = vector.load %arg8[%c6_386, %c3_387, %c0_388, %c0_389] : memref<7x5x8x128xi32, #tpu.memory_space<vmem>>, vector<1x1x8x128xi32>
    %1241 = vector.shape_cast %1240 : vector<1x1x8x128xi32> to vector<8x128xi32>
    %1242 = arith.select %1239, %1241, %1238 : vector<8x128xi1>, vector<8x128xi32>
    %1243 = arith.cmpi eq, %1210, %4 : vector<8x128xi32>
    %c6_390 = arith.constant 6 : index
    %c4_391 = arith.constant 4 : index
    %c0_392 = arith.constant 0 : index
    %c0_393 = arith.constant 0 : index
    %1244 = vector.load %arg8[%c6_390, %c4_391, %c0_392, %c0_393] : memref<7x5x8x128xi32, #tpu.memory_space<vmem>>, vector<1x1x8x128xi32>
    %1245 = vector.shape_cast %1244 : vector<1x1x8x128xi32> to vector<8x128xi32>
    %1246 = arith.select %1243, %1245, %1242 : vector<8x128xi1>, vector<8x128xi32>
    %c0_394 = arith.constant 0 : index
    %c6_395 = arith.constant 6 : index
    %c0_396 = arith.constant 0 : index
    %c0_397 = arith.constant 0 : index
    %1247 = vector.load %arg6[%c0_394, %c6_395, %c0_396, %c0_397] : memref<1x8x8x128xi32, #tpu.memory_space<vmem>>, vector<1x1x8x128xi32>
    %1248 = vector.shape_cast %1247 : vector<1x1x8x128xi32> to vector<8x128xi32>
    %1249 = vector.shape_cast %1246 : vector<8x128xi32> to vector<1x1x8x128xi32>
    tpu.vector_store %arg6[%c0_394, %c6_395, %c0_396, %c0_397], %1249 {strides = array<i32>} : memref<1x8x8x128xi32, #tpu.memory_space<vmem>>, vector<1x1x8x128xi32>,
    %c5_398 = arith.constant 5 : index
    %c0_399 = arith.constant 0 : index
    %c0_400 = arith.constant 0 : index
    %c0_401 = arith.constant 0 : index
    %1250 = vector.load %arg8[%c5_398, %c0_399, %c0_400, %c0_401] : memref<7x5x8x128xi32, #tpu.memory_space<vmem>>, vector<1x1x8x128xi32>
    %1251 = vector.shape_cast %1250 : vector<1x1x8x128xi32> to vector<8x128xi32>
    %1252 = arith.cmpi eq, %1246, %1 : vector<8x128xi32>
    %c5_402 = arith.constant 5 : index
    %c1_403 = arith.constant 1 : index
    %c0_404 = arith.constant 0 : index
    %c0_405 = arith.constant 0 : index
    %1253 = vector.load %arg8[%c5_402, %c1_403, %c0_404, %c0_405] : memref<7x5x8x128xi32, #tpu.memory_space<vmem>>, vector<1x1x8x128xi32>
    %1254 = vector.shape_cast %1253 : vector<1x1x8x128xi32> to vector<8x128xi32>
    %1255 = arith.select %1252, %1254, %1251 : vector<8x128xi1>, vector<8x128xi32>
    %1256 = arith.cmpi eq, %1246, %2 : vector<8x128xi32>
    %c5_406 = arith.constant 5 : index
    %c2_407 = arith.constant 2 : index
    %c0_408 = arith.constant 0 : index
    %c0_409 = arith.constant 0 : index
    %1257 = vector.load %arg8[%c5_406, %c2_407, %c0_408, %c0_409] : memref<7x5x8x128xi32, #tpu.memory_space<vmem>>, vector<1x1x8x128xi32>
    %1258 = vector.shape_cast %1257 : vector<1x1x8x128xi32> to vector<8x128xi32>
    %1259 = arith.select %1256, %1258, %1255 : vector<8x128xi1>, vector<8x128xi32>
    %1260 = arith.cmpi eq, %1246, %3 : vector<8x128xi32>
    %c5_410 = arith.constant 5 : index
    %c3_411 = arith.constant 3 : index
    %c0_412 = arith.constant 0 : index
    %c0_413 = arith.constant 0 : index
    %1261 = vector.load %arg8[%c5_410, %c3_411, %c0_412, %c0_413] : memref<7x5x8x128xi32, #tpu.memory_space<vmem>>, vector<1x1x8x128xi32>
    %1262 = vector.shape_cast %1261 : vector<1x1x8x128xi32> to vector<8x128xi32>
    %1263 = arith.select %1260, %1262, %1259 : vector<8x128xi1>, vector<8x128xi32>
    %1264 = arith.cmpi eq, %1246, %4 : vector<8x128xi32>
    %c5_414 = arith.constant 5 : index
    %c4_415 = arith.constant 4 : index
    %c0_416 = arith.constant 0 : index
    %c0_417 = arith.constant 0 : index
    %1265 = vector.load %arg8[%c5_414, %c4_415, %c0_416, %c0_417] : memref<7x5x8x128xi32, #tpu.memory_space<vmem>>, vector<1x1x8x128xi32>
    %1266 = vector.shape_cast %1265 : vector<1x1x8x128xi32> to vector<8x128xi32>
    %1267 = arith.select %1264, %1266, %1263 : vector<8x128xi1>, vector<8x128xi32>
    %c0_418 = arith.constant 0 : index
    %c5_419 = arith.constant 5 : index
    %c0_420 = arith.constant 0 : index
    %c0_421 = arith.constant 0 : index
    %1268 = vector.load %arg6[%c0_418, %c5_419, %c0_420, %c0_421] : memref<1x8x8x128xi32, #tpu.memory_space<vmem>>, vector<1x1x8x128xi32>
    %1269 = vector.shape_cast %1268 : vector<1x1x8x128xi32> to vector<8x128xi32>
    %1270 = vector.shape_cast %1267 : vector<8x128xi32> to vector<1x1x8x128xi32>
    tpu.vector_store %arg6[%c0_418, %c5_419, %c0_420, %c0_421], %1270 {strides = array<i32>} : memref<1x8x8x128xi32, #tpu.memory_space<vmem>>, vector<1x1x8x128xi32>,
    %c4_422 = arith.constant 4 : index
    %c0_423 = arith.constant 0 : index
    %c0_424 = arith.constant 0 : index
    %c0_425 = arith.constant 0 : index
    %1271 = vector.load %arg8[%c4_422, %c0_423, %c0_424, %c0_425] : memref<7x5x8x128xi32, #tpu.memory_space<vmem>>, vector<1x1x8x128xi32>
    %1272 = vector.shape_cast %1271 : vector<1x1x8x128xi32> to vector<8x128xi32>
    %1273 = arith.cmpi eq, %1267, %1 : vector<8x128xi32>
    %c4_426 = arith.constant 4 : index
    %c1_427 = arith.constant 1 : index
    %c0_428 = arith.constant 0 : index
    %c0_429 = arith.constant 0 : index
    %1274 = vector.load %arg8[%c4_426, %c1_427, %c0_428, %c0_429] : memref<7x5x8x128xi32, #tpu.memory_space<vmem>>, vector<1x1x8x128xi32>
    %1275 = vector.shape_cast %1274 : vector<1x1x8x128xi32> to vector<8x128xi32>
    %1276 = arith.select %1273, %1275, %1272 : vector<8x128xi1>, vector<8x128xi32>
    %1277 = arith.cmpi eq, %1267, %2 : vector<8x128xi32>
    %c4_430 = arith.constant 4 : index
    %c2_431 = arith.constant 2 : index
    %c0_432 = arith.constant 0 : index
    %c0_433 = arith.constant 0 : index
    %1278 = vector.load %arg8[%c4_430, %c2_431, %c0_432, %c0_433] : memref<7x5x8x128xi32, #tpu.memory_space<vmem>>, vector<1x1x8x128xi32>
    %1279 = vector.shape_cast %1278 : vector<1x1x8x128xi32> to vector<8x128xi32>
    %1280 = arith.select %1277, %1279, %1276 : vector<8x128xi1>, vector<8x128xi32>
    %1281 = arith.cmpi eq, %1267, %3 : vector<8x128xi32>
    %c4_434 = arith.constant 4 : index
    %c3_435 = arith.constant 3 : index
    %c0_436 = arith.constant 0 : index
    %c0_437 = arith.constant 0 : index
    %1282 = vector.load %arg8[%c4_434, %c3_435, %c0_436, %c0_437] : memref<7x5x8x128xi32, #tpu.memory_space<vmem>>, vector<1x1x8x128xi32>
    %1283 = vector.shape_cast %1282 : vector<1x1x8x128xi32> to vector<8x128xi32>
    %1284 = arith.select %1281, %1283, %1280 : vector<8x128xi1>, vector<8x128xi32>
    %1285 = arith.cmpi eq, %1267, %4 : vector<8x128xi32>
    %c4_438 = arith.constant 4 : index
    %c4_439 = arith.constant 4 : index
    %c0_440 = arith.constant 0 : index
    %c0_441 = arith.constant 0 : index
    %1286 = vector.load %arg8[%c4_438, %c4_439, %c0_440, %c0_441] : memref<7x5x8x128xi32, #tpu.memory_space<vmem>>, vector<1x1x8x128xi32>
    %1287 = vector.shape_cast %1286 : vector<1x1x8x128xi32> to vector<8x128xi32>
    %1288 = arith.select %1285, %1287, %1284 : vector<8x128xi1>, vector<8x128xi32>
    %c0_442 = arith.constant 0 : index
    %c4_443 = arith.constant 4 : index
    %c0_444 = arith.constant 0 : index
    %c0_445 = arith.constant 0 : index
    %1289 = vector.load %arg6[%c0_442, %c4_443, %c0_444, %c0_445] : memref<1x8x8x128xi32, #tpu.memory_space<vmem>>, vector<1x1x8x128xi32>
    %1290 = vector.shape_cast %1289 : vector<1x1x8x128xi32> to vector<8x128xi32>
    %1291 = vector.shape_cast %1288 : vector<8x128xi32> to vector<1x1x8x128xi32>
    tpu.vector_store %arg6[%c0_442, %c4_443, %c0_444, %c0_445], %1291 {strides = array<i32>} : memref<1x8x8x128xi32, #tpu.memory_space<vmem>>, vector<1x1x8x128xi32>,
    %c3_446 = arith.constant 3 : index
    %c0_447 = arith.constant 0 : index
    %c0_448 = arith.constant 0 : index
    %c0_449 = arith.constant 0 : index
    %1292 = vector.load %arg8[%c3_446, %c0_447, %c0_448, %c0_449] : memref<7x5x8x128xi32, #tpu.memory_space<vmem>>, vector<1x1x8x128xi32>
    %1293 = vector.shape_cast %1292 : vector<1x1x8x128xi32> to vector<8x128xi32>
    %1294 = arith.cmpi eq, %1288, %1 : vector<8x128xi32>
    %c3_450 = arith.constant 3 : index
    %c1_451 = arith.constant 1 : index
    %c0_452 = arith.constant 0 : index
    %c0_453 = arith.constant 0 : index
    %1295 = vector.load %arg8[%c3_450, %c1_451, %c0_452, %c0_453] : memref<7x5x8x128xi32, #tpu.memory_space<vmem>>, vector<1x1x8x128xi32>
    %1296 = vector.shape_cast %1295 : vector<1x1x8x128xi32> to vector<8x128xi32>
    %1297 = arith.select %1294, %1296, %1293 : vector<8x128xi1>, vector<8x128xi32>
    %1298 = arith.cmpi eq, %1288, %2 : vector<8x128xi32>
    %c3_454 = arith.constant 3 : index
    %c2_455 = arith.constant 2 : index
    %c0_456 = arith.constant 0 : index
    %c0_457 = arith.constant 0 : index
    %1299 = vector.load %arg8[%c3_454, %c2_455, %c0_456, %c0_457] : memref<7x5x8x128xi32, #tpu.memory_space<vmem>>, vector<1x1x8x128xi32>
    %1300 = vector.shape_cast %1299 : vector<1x1x8x128xi32> to vector<8x128xi32>
    %1301 = arith.select %1298, %1300, %1297 : vector<8x128xi1>, vector<8x128xi32>
    %1302 = arith.cmpi eq, %1288, %3 : vector<8x128xi32>
    %c3_458 = arith.constant 3 : index
    %c3_459 = arith.constant 3 : index
    %c0_460 = arith.constant 0 : index
    %c0_461 = arith.constant 0 : index
    %1303 = vector.load %arg8[%c3_458, %c3_459, %c0_460, %c0_461] : memref<7x5x8x128xi32, #tpu.memory_space<vmem>>, vector<1x1x8x128xi32>
    %1304 = vector.shape_cast %1303 : vector<1x1x8x128xi32> to vector<8x128xi32>
    %1305 = arith.select %1302, %1304, %1301 : vector<8x128xi1>, vector<8x128xi32>
    %1306 = arith.cmpi eq, %1288, %4 : vector<8x128xi32>
    %c3_462 = arith.constant 3 : index
    %c4_463 = arith.constant 4 : index
    %c0_464 = arith.constant 0 : index
    %c0_465 = arith.constant 0 : index
    %1307 = vector.load %arg8[%c3_462, %c4_463, %c0_464, %c0_465] : memref<7x5x8x128xi32, #tpu.memory_space<vmem>>, vector<1x1x8x128xi32>
    %1308 = vector.shape_cast %1307 : vector<1x1x8x128xi32> to vector<8x128xi32>
    %1309 = arith.select %1306, %1308, %1305 : vector<8x128xi1>, vector<8x128xi32>
    %c0_466 = arith.constant 0 : index
    %c3_467 = arith.constant 3 : index
    %c0_468 = arith.constant 0 : index
    %c0_469 = arith.constant 0 : index
    %1310 = vector.load %arg6[%c0_466, %c3_467, %c0_468, %c0_469] : memref<1x8x8x128xi32, #tpu.memory_space<vmem>>, vector<1x1x8x128xi32>
    %1311 = vector.shape_cast %1310 : vector<1x1x8x128xi32> to vector<8x128xi32>
    %1312 = vector.shape_cast %1309 : vector<8x128xi32> to vector<1x1x8x128xi32>
    tpu.vector_store %arg6[%c0_466, %c3_467, %c0_468, %c0_469], %1312 {strides = array<i32>} : memref<1x8x8x128xi32, #tpu.memory_space<vmem>>, vector<1x1x8x128xi32>,
    %c2_470 = arith.constant 2 : index
    %c0_471 = arith.constant 0 : index
    %c0_472 = arith.constant 0 : index
    %c0_473 = arith.constant 0 : index
    %1313 = vector.load %arg8[%c2_470, %c0_471, %c0_472, %c0_473] : memref<7x5x8x128xi32, #tpu.memory_space<vmem>>, vector<1x1x8x128xi32>
    %1314 = vector.shape_cast %1313 : vector<1x1x8x128xi32> to vector<8x128xi32>
    %1315 = arith.cmpi eq, %1309, %1 : vector<8x128xi32>
    %c2_474 = arith.constant 2 : index
    %c1_475 = arith.constant 1 : index
    %c0_476 = arith.constant 0 : index
    %c0_477 = arith.constant 0 : index
    %1316 = vector.load %arg8[%c2_474, %c1_475, %c0_476, %c0_477] : memref<7x5x8x128xi32, #tpu.memory_space<vmem>>, vector<1x1x8x128xi32>
    %1317 = vector.shape_cast %1316 : vector<1x1x8x128xi32> to vector<8x128xi32>
    %1318 = arith.select %1315, %1317, %1314 : vector<8x128xi1>, vector<8x128xi32>
    %1319 = arith.cmpi eq, %1309, %2 : vector<8x128xi32>
    %c2_478 = arith.constant 2 : index
    %c2_479 = arith.constant 2 : index
    %c0_480 = arith.constant 0 : index
    %c0_481 = arith.constant 0 : index
    %1320 = vector.load %arg8[%c2_478, %c2_479, %c0_480, %c0_481] : memref<7x5x8x128xi32, #tpu.memory_space<vmem>>, vector<1x1x8x128xi32>
    %1321 = vector.shape_cast %1320 : vector<1x1x8x128xi32> to vector<8x128xi32>
    %1322 = arith.select %1319, %1321, %1318 : vector<8x128xi1>, vector<8x128xi32>
    %1323 = arith.cmpi eq, %1309, %3 : vector<8x128xi32>
    %c2_482 = arith.constant 2 : index
    %c3_483 = arith.constant 3 : index
    %c0_484 = arith.constant 0 : index
    %c0_485 = arith.constant 0 : index
    %1324 = vector.load %arg8[%c2_482, %c3_483, %c0_484, %c0_485] : memref<7x5x8x128xi32, #tpu.memory_space<vmem>>, vector<1x1x8x128xi32>
    %1325 = vector.shape_cast %1324 : vector<1x1x8x128xi32> to vector<8x128xi32>
    %1326 = arith.select %1323, %1325, %1322 : vector<8x128xi1>, vector<8x128xi32>
    %1327 = arith.cmpi eq, %1309, %4 : vector<8x128xi32>
    %c2_486 = arith.constant 2 : index
    %c4_487 = arith.constant 4 : index
    %c0_488 = arith.constant 0 : index
    %c0_489 = arith.constant 0 : index
    %1328 = vector.load %arg8[%c2_486, %c4_487, %c0_488, %c0_489] : memref<7x5x8x128xi32, #tpu.memory_space<vmem>>, vector<1x1x8x128xi32>
    %1329 = vector.shape_cast %1328 : vector<1x1x8x128xi32> to vector<8x128xi32>
    %1330 = arith.select %1327, %1329, %1326 : vector<8x128xi1>, vector<8x128xi32>
    %c0_490 = arith.constant 0 : index
    %c2_491 = arith.constant 2 : index
    %c0_492 = arith.constant 0 : index
    %c0_493 = arith.constant 0 : index
    %1331 = vector.load %arg6[%c0_490, %c2_491, %c0_492, %c0_493] : memref<1x8x8x128xi32, #tpu.memory_space<vmem>>, vector<1x1x8x128xi32>
    %1332 = vector.shape_cast %1331 : vector<1x1x8x128xi32> to vector<8x128xi32>
    %1333 = vector.shape_cast %1330 : vector<8x128xi32> to vector<1x1x8x128xi32>
    tpu.vector_store %arg6[%c0_490, %c2_491, %c0_492, %c0_493], %1333 {strides = array<i32>} : memref<1x8x8x128xi32, #tpu.memory_space<vmem>>, vector<1x1x8x128xi32>,
    %c1_494 = arith.constant 1 : index
    %c0_495 = arith.constant 0 : index
    %c0_496 = arith.constant 0 : index
    %c0_497 = arith.constant 0 : index
    %1334 = vector.load %arg8[%c1_494, %c0_495, %c0_496, %c0_497] : memref<7x5x8x128xi32, #tpu.memory_space<vmem>>, vector<1x1x8x128xi32>
    %1335 = vector.shape_cast %1334 : vector<1x1x8x128xi32> to vector<8x128xi32>
    %1336 = arith.cmpi eq, %1330, %1 : vector<8x128xi32>
    %c1_498 = arith.constant 1 : index
    %c1_499 = arith.constant 1 : index
    %c0_500 = arith.constant 0 : index
    %c0_501 = arith.constant 0 : index
    %1337 = vector.load %arg8[%c1_498, %c1_499, %c0_500, %c0_501] : memref<7x5x8x128xi32, #tpu.memory_space<vmem>>, vector<1x1x8x128xi32>
    %1338 = vector.shape_cast %1337 : vector<1x1x8x128xi32> to vector<8x128xi32>
    %1339 = arith.select %1336, %1338, %1335 : vector<8x128xi1>, vector<8x128xi32>
    %1340 = arith.cmpi eq, %1330, %2 : vector<8x128xi32>
    %c1_502 = arith.constant 1 : index
    %c2_503 = arith.constant 2 : index
    %c0_504 = arith.constant 0 : index
    %c0_505 = arith.constant 0 : index
    %1341 = vector.load %arg8[%c1_502, %c2_503, %c0_504, %c0_505] : memref<7x5x8x128xi32, #tpu.memory_space<vmem>>, vector<1x1x8x128xi32>
    %1342 = vector.shape_cast %1341 : vector<1x1x8x128xi32> to vector<8x128xi32>
    %1343 = arith.select %1340, %1342, %1339 : vector<8x128xi1>, vector<8x128xi32>
    %1344 = arith.cmpi eq, %1330, %3 : vector<8x128xi32>
    %c1_506 = arith.constant 1 : index
    %c3_507 = arith.constant 3 : index
    %c0_508 = arith.constant 0 : index
    %c0_509 = arith.constant 0 : index
    %1345 = vector.load %arg8[%c1_506, %c3_507, %c0_508, %c0_509] : memref<7x5x8x128xi32, #tpu.memory_space<vmem>>, vector<1x1x8x128xi32>
    %1346 = vector.shape_cast %1345 : vector<1x1x8x128xi32> to vector<8x128xi32>
    %1347 = arith.select %1344, %1346, %1343 : vector<8x128xi1>, vector<8x128xi32>
    %1348 = arith.cmpi eq, %1330, %4 : vector<8x128xi32>
    %c1_510 = arith.constant 1 : index
    %c4_511 = arith.constant 4 : index
    %c0_512 = arith.constant 0 : index
    %c0_513 = arith.constant 0 : index
    %1349 = vector.load %arg8[%c1_510, %c4_511, %c0_512, %c0_513] : memref<7x5x8x128xi32, #tpu.memory_space<vmem>>, vector<1x1x8x128xi32>
    %1350 = vector.shape_cast %1349 : vector<1x1x8x128xi32> to vector<8x128xi32>
    %1351 = arith.select %1348, %1350, %1347 : vector<8x128xi1>, vector<8x128xi32>
    %c0_514 = arith.constant 0 : index
    %c1_515 = arith.constant 1 : index
    %c0_516 = arith.constant 0 : index
    %c0_517 = arith.constant 0 : index
    %1352 = vector.load %arg6[%c0_514, %c1_515, %c0_516, %c0_517] : memref<1x8x8x128xi32, #tpu.memory_space<vmem>>, vector<1x1x8x128xi32>
    %1353 = vector.shape_cast %1352 : vector<1x1x8x128xi32> to vector<8x128xi32>
    %1354 = vector.shape_cast %1351 : vector<8x128xi32> to vector<1x1x8x128xi32>
    tpu.vector_store %arg6[%c0_514, %c1_515, %c0_516, %c0_517], %1354 {strides = array<i32>} : memref<1x8x8x128xi32, #tpu.memory_space<vmem>>, vector<1x1x8x128xi32>,
    %c0_518 = arith.constant 0 : index
    %c0_519 = arith.constant 0 : index
    %c0_520 = arith.constant 0 : index
    %c0_521 = arith.constant 0 : index
    %1355 = vector.load %arg8[%c0_518, %c0_519, %c0_520, %c0_521] : memref<7x5x8x128xi32, #tpu.memory_space<vmem>>, vector<1x1x8x128xi32>
    %1356 = vector.shape_cast %1355 : vector<1x1x8x128xi32> to vector<8x128xi32>
    %1357 = arith.cmpi eq, %1351, %1 : vector<8x128xi32>
    %c0_522 = arith.constant 0 : index
    %c1_523 = arith.constant 1 : index
    %c0_524 = arith.constant 0 : index
    %c0_525 = arith.constant 0 : index
    %1358 = vector.load %arg8[%c0_522, %c1_523, %c0_524, %c0_525] : memref<7x5x8x128xi32, #tpu.memory_space<vmem>>, vector<1x1x8x128xi32>
    %1359 = vector.shape_cast %1358 : vector<1x1x8x128xi32> to vector<8x128xi32>
    %1360 = arith.select %1357, %1359, %1356 : vector<8x128xi1>, vector<8x128xi32>
    %1361 = arith.cmpi eq, %1351, %2 : vector<8x128xi32>
    %c0_526 = arith.constant 0 : index
    %c2_527 = arith.constant 2 : index
    %c0_528 = arith.constant 0 : index
    %c0_529 = arith.constant 0 : index
    %1362 = vector.load %arg8[%c0_526, %c2_527, %c0_528, %c0_529] : memref<7x5x8x128xi32, #tpu.memory_space<vmem>>, vector<1x1x8x128xi32>
    %1363 = vector.shape_cast %1362 : vector<1x1x8x128xi32> to vector<8x128xi32>
    %1364 = arith.select %1361, %1363, %1360 : vector<8x128xi1>, vector<8x128xi32>
    %1365 = arith.cmpi eq, %1351, %3 : vector<8x128xi32>
    %c0_530 = arith.constant 0 : index
    %c3_531 = arith.constant 3 : index
    %c0_532 = arith.constant 0 : index
    %c0_533 = arith.constant 0 : index
    %1366 = vector.load %arg8[%c0_530, %c3_531, %c0_532, %c0_533] : memref<7x5x8x128xi32, #tpu.memory_space<vmem>>, vector<1x1x8x128xi32>
    %1367 = vector.shape_cast %1366 : vector<1x1x8x128xi32> to vector<8x128xi32>
    %1368 = arith.select %1365, %1367, %1364 : vector<8x128xi1>, vector<8x128xi32>
    %1369 = arith.cmpi eq, %1351, %4 : vector<8x128xi32>
    %c0_534 = arith.constant 0 : index
    %c4_535 = arith.constant 4 : index
    %c0_536 = arith.constant 0 : index
    %c0_537 = arith.constant 0 : index
    %1370 = vector.load %arg8[%c0_534, %c4_535, %c0_536, %c0_537] : memref<7x5x8x128xi32, #tpu.memory_space<vmem>>, vector<1x1x8x128xi32>
    %1371 = vector.shape_cast %1370 : vector<1x1x8x128xi32> to vector<8x128xi32>
    %1372 = arith.select %1369, %1371, %1368 : vector<8x128xi1>, vector<8x128xi32>
    %c0_538 = arith.constant 0 : index
    %c0_539 = arith.constant 0 : index
    %c0_540 = arith.constant 0 : index
    %c0_541 = arith.constant 0 : index
    %1373 = vector.load %arg6[%c0_538, %c0_539, %c0_540, %c0_541] : memref<1x8x8x128xi32, #tpu.memory_space<vmem>>, vector<1x1x8x128xi32>
    %1374 = vector.shape_cast %1373 : vector<1x1x8x128xi32> to vector<8x128xi32>
    %1375 = vector.shape_cast %1372 : vector<8x128xi32> to vector<1x1x8x128xi32>
    tpu.vector_store %arg6[%c0_538, %c0_539, %c0_540, %c0_541], %1375 {strides = array<i32>} : memref<1x8x8x128xi32, #tpu.memory_space<vmem>>, vector<1x1x8x128xi32>,
    return
  }
  func.func @transform_0(%arg0: i32, %arg1: i32) -> i32 {
    %c0_i32 = arith.constant 0 : i32
    %c0_i32_0 = arith.constant 0 : i32
    return %c0_i32 : i32
  }
  func.func @transform_1(%arg0: i32, %arg1: i32) -> i32 {
    %c0_i32 = arith.constant 0 : i32
    %c0_i32_0 = arith.constant 0 : i32
    return %c0_i32 : i32
  }
  func.func @transform_2(%arg0: i32, %arg1: i32) -> i32 {
    %c0_i32 = arith.constant 0 : i32
    %c0_i32_0 = arith.constant 0 : i32
    return %c0_i32 : i32
  }
  func.func @transform_3(%arg0: i32, %arg1: i32) -> (i32, i32, i32, i32, i32) {
    %c0_i32 = arith.constant 0 : i32
    %c0_i32_0 = arith.constant 0 : i32
    %c0_i32_1 = arith.constant 0 : i32
    %c0_i32_2 = arith.constant 0 : i32
    return %arg0, %c0_i32, %c0_i32_0, %arg1, %c0_i32_1 : i32, i32, i32, i32, i32
  }
  func.func @transform_4(%arg0: i32, %arg1: i32) -> (i32, i32, i32, i32) {
    %c0_i32 = arith.constant 0 : i32
    %c0_i32_0 = arith.constant 0 : i32
    %c0_i32_1 = arith.constant 0 : i32
    return %arg0, %c0_i32, %arg1, %c0_i32_0 : i32, i32, i32, i32
  }
  func.func @transform_5(%arg0: i32, %arg1: i32) -> (i32, i32, i32, i32) {
    %c0_i32 = arith.constant 0 : i32
    %c0_i32_0 = arith.constant 0 : i32
    %c0_i32_1 = arith.constant 0 : i32
    return %arg0, %c0_i32, %arg1, %c0_i32_0 : i32, i32, i32, i32
  }
}

</mosaic_0001>

<llo_original>
// kernel: tpu_custom_call.1
$region0: #{tpu_custom_call.1}
  #allocation0 [shape = 'u32[]', space=smem, size = 0x4, offset = 0x4, fixed_abs, tag = 'smem constant byte address 0x4 - core index']
  #allocation1 [shape = 'u32[144,128]{1,0:T(1,128)}', space=vmem, size = 0x12000, scoped, tag = 'internal scratch']
  #allocation2 [shape = 's32[7,5,8,128]{3,2,1,0:T(8,128)}', space=vmem, size = 0x23000, scoped, tag = 'scratch operand']
  %s0 = inlined_call_operand.hbm [shape: f32[175], index: 0, kind: input, shape index: {}]
  %s1 = inlined_call_operand.vmem [shape: f32[5], index: 1, kind: input, shape index: {}]
  %s2 = inlined_call_operand.vmem [shape: f32[5], index: 2, kind: input, shape index: {}]
  %s3 = inlined_call_operand.hbm [shape: f32[2,8,5,8,128], index: 3, kind: input, shape index: {}]
  %s4 = inlined_call_operand.hbm [shape: s32[2,8,8,128], index: 4, kind: output, shape index: {0}]
  %s5 = inlined_call_operand.hbm [shape: f32[2,5,8,128], index: 5, kind: output, shape index: {1}]
  %6 = xla_tuple %s4, %s5
  %s7 = sld [smem:[#allocation0]]
  $region73: #{tpu_custom_call.1} parent=0
    _
  %s9 = ssub.s32 1, %s7
  %s10 = scalar_select 0, %s9, %s7
  $region1: #{tpu_custom_call.1} parent=0
    #allocation3 [shape = 'u8[1024]{0}', space=smem, size = 0x400, scoped, tag = 'input window, operand 0, single buffered']
    #allocation4 [shape = 's32[2]{0}', space=sflag, size = 0x8, scoped, tag = 'scoped memory for tpu_custom_call.1']
    #allocation5 [shape = 's32[2]{0}', space=sflag, size = 0x8, scoped, tag = 'scoped memory for tpu_custom_call.1']
    #allocation6 [shape = 's32[2]{0}', space=sflag, size = 0x8, scoped, tag = 'scoped memory for tpu_custom_call.1']
    #allocation7 [shape = 's32[2]{0}', space=sflag, size = 0x8, scoped, tag = 'scoped memory for tpu_custom_call.1']
    #allocation8 [shape = 'u8[512]{0}', space=smem, size = 0x200, scoped, tag = 'input window, operand 1, single buffered']
    #allocation9 [shape = 'u8[512]{0}', space=smem, size = 0x200, scoped, tag = 'input window, operand 2, single buffered']
    #allocation10 [shape = 's32[1]{0}', space=sflag, size = 0x4, scoped, tag = 'scoped memory for tpu_custom_call.1']
    #allocation11 [shape = 'u8[327680]{0}', space=vmem, size = 0x50000, scoped, tag = 'input window, operand 3']
    #allocation12 [shape = 'u8[65536]{0}', space=vmem, size = 0x10000, scoped, tag = 'output window, operand 0']
    #allocation13 [shape = 'u8[40960]{0}', space=vmem, size = 0xa000, scoped, tag = 'output window, operand 1']
    #allocation14 [shape = 's32[2]{0}', space=sflag, size = 0x8, scoped, tag = 'scoped memory for tpu_custom_call.1']
    %11 = vsyncpa [#allocation6], 0
    %12 = vsyncpa [#allocation7], 0
    %13 = vsyncpa [#allocation10], 0
    %14 = vsyncpa [#allocation4], 0
    %s15 = scalar_lea.sflag [#allocation4], 1
    %16 = vsyncpa %s15, 0
    %17 = vsyncpa [#allocation5], 0
    %s18 = scalar_lea.sflag [#allocation5], 1
    %19 = vsyncpa %s18, 0
    %20 = vsyncpa [#allocation14], 0
    %s21 = scalar_lea.sflag [#allocation14], 1
    %22 = vsyncpa %s21, 0
    loop: start=0, step=1, limit=4
    $region2: #{tpu_custom_call.1} parent=1 // loop_pre_header
      _
    $region3: #{tpu_custom_call.1} parent=1 // loop_header
      %s24 = sphi 0, %s28
      %p25 = scmp.ge.s32.totalorder %s24, 4
      %s31 = sphi 0, %s43
      %s32 = sphi 0, %s39
      %s33 = sphi 0, %s31
      %s34 = sphi 0, %s32
      %s35 = sphi 0, %s33
      %s36 = sphi 0, %s34
      %s44 = sphi 0, %s44
      %s46 = sphi 0, %s44
      %s47 = sphi 0, %s46
      %s61 = sphi 0, %s47
      %s65 = sphi 0, %s65
      %s67 = sphi 0, %s65
      %s68 = sphi 0, %s67
      %s82 = sphi 0, %s68
      %s86 = sphi 0, %s86
      %s88 = sphi 0, %s86
      %s89 = sphi 0, %s88
      %s103 = sphi 0, %s89
      %s111 = sphi 0, %s113
      %s114 = sphi 0, %s111
      %s115 = sphi 0, %s114
      %s131 = sphi 0, %s115
      %s139 = sphi 0, %s141
      %s142 = sphi 0, %s139
      %s143 = sphi 0, %s142
      %s159 = sphi 0, %s143
      %s167 = sphi 0, %s169
      %s170 = sphi 0, %s167
      %s171 = sphi 0, %s170
      %s187 = sphi 0, %s171
    $region4: #{tpu_custom_call.1} parent=1 // loop_header_branch
      %27 = sbr.rel (%p25) target = $region8
    $region5: #{tpu_custom_call.1} parent=1 // loop_body
      %s29 = ssub.s32 %s24, 1
      %s30 = ssub.s32 %s24, 2
      %s37 = sadd.s32 1, %s32
      %p38 = scmp.ge.s32.totalorder %s37, 1
      %s39 = scalar_select %p38, 0, %s37
      %s40 = sadd.s32 1, %s31
      %s41 = scalar_select %p38, %s40, %s31
      %p42 = scmp.ge.s32.totalorder %s41, 2
      %s43 = scalar_select %p42, 0, %s41
      %s45 = sadd.s32 %s44, 1
      %p48 = scmp.eq.s32.totalorder %s24, 1
      %p49 = scmp.ne.s32.totalorder %s44, %s46
      %p50 = scmp.eq.s32.totalorder %s24, 0
      %p51 = por %p49, %p50
      %p52 = scmp.ne.s32.totalorder %s44, %s46
      %p53 = scmp.eq.s32.totalorder %s29, 1
      %p54 = por %p52, %p53
      %p55 = scmp.ne.s32.totalorder %s46, %s47
      %p56 = scmp.eq.s32.totalorder %s29, 0
      %p57 = por %p55, %p56
      %p58 = scmp.ne.s32.totalorder %s46, %s47
      %p59 = scmp.eq.s32.totalorder %s30, 1
      %p60 = por %p58, %p59
      %p62 = scmp.ne.s32.totalorder %s47, %s61
      %p63 = scmp.eq.s32.totalorder %s30, 0
      %p64 = por %p62, %p63
      %s66 = sadd.s32 %s65, 1
      %p69 = scmp.eq.s32.totalorder %s24, 1
      %p70 = scmp.ne.s32.totalorder %s65, %s67
      %p71 = scmp.eq.s32.totalorder %s24, 0
      %p72 = por %p70, %p71
      %p73 = scmp.ne.s32.totalorder %s65, %s67
      %p74 = scmp.eq.s32.totalorder %s29, 1
      %p75 = por %p73, %p74
      %p76 = scmp.ne.s32.totalorder %s67, %s68
      %p77 = scmp.eq.s32.totalorder %s29, 0
      %p78 = por %p76, %p77
      %p79 = scmp.ne.s32.totalorder %s67, %s68
      %p80 = scmp.eq.s32.totalorder %s30, 1
      %p81 = por %p79, %p80
      %p83 = scmp.ne.s32.totalorder %s68, %s82
      %p84 = scmp.eq.s32.totalorder %s30, 0
      %p85 = por %p83, %p84
      %s87 = sadd.s32 %s86, 1
      %p90 = scmp.eq.s32.totalorder %s24, 1
      %p91 = scmp.ne.s32.totalorder %s86, %s88
      %p92 = scmp.eq.s32.totalorder %s24, 0
      %p93 = por %p91, %p92
      %p94 = scmp.ne.s32.totalorder %s86, %s88
      %p95 = scmp.eq.s32.totalorder %s29, 1
      %p96 = por %p94, %p95
      %p97 = scmp.ne.s32.totalorder %s88, %s89
      %p98 = scmp.eq.s32.totalorder %s29, 0
      %p99 = por %p97, %p98
      %p100 = scmp.ne.s32.totalorder %s88, %s89
      %p101 = scmp.eq.s32.totalorder %s30, 1
      %p102 = por %p100, %p101
      %p104 = scmp.ne.s32.totalorder %s89, %s103
      %p105 = scmp.eq.s32.totalorder %s30, 0
      %p106 = por %p104, %p105
      %s107 = ssub.s32 %s31, %s43
      %s108 = ssub.s32 %s32, %s39
      %s109 = sor.u32 %s107, %s108
      %p110 = scmp.eq.s32.totalorder %s109, 0
      %s112 = sadd.s32 %s111, 1
      %s113 = scalar_select %p110, %s111, %s112
      %p116 = pneg %p110
      %p117 = scmp.eq.s32.totalorder %s24, 1
      %p118 = por %p116, %p117
      %p119 = scmp.ne.s32.totalorder %s111, %s114
      %p120 = scmp.eq.s32.totalorder %s24, 0
      %p121 = por %p119, %p120
      %p122 = scmp.ne.s32.totalorder %s111, %s114
      %p123 = scmp.eq.s32.totalorder %s29, 1
      %p124 = por %p122, %p123
      %p125 = scmp.ne.s32.totalorder %s114, %s115
      %p126 = scmp.eq.s32.totalorder %s29, 0
      %p127 = por %p125, %p126
      %p128 = scmp.ne.s32.totalorder %s114, %s115
      %p129 = scmp.eq.s32.totalorder %s30, 1
      %p130 = por %p128, %p129
      %p132 = scmp.ne.s32.totalorder %s115, %s131
      %p133 = scmp.eq.s32.totalorder %s30, 0
      %p134 = por %p132, %p133
      %s135 = ssub.s32 %s31, %s43
      %s136 = ssub.s32 %s32, %s39
      %s137 = sor.u32 %s135, %s136
      %p138 = scmp.eq.s32.totalorder %s137, 0
      %s140 = sadd.s32 %s139, 1
      %s141 = scalar_select %p138, %s139, %s140
      %p144 = pneg %p138
      %p145 = scmp.eq.s32.totalorder %s24, 1
      %p146 = por %p144, %p145
      %p147 = scmp.ne.s32.totalorder %s139, %s142
      %p148 = scmp.eq.s32.totalorder %s24, 0
      %p149 = por %p147, %p148
      %p150 = scmp.ne.s32.totalorder %s139, %s142
      %p151 = scmp.eq.s32.totalorder %s29, 1
      %p152 = por %p150, %p151
      %p153 = scmp.ne.s32.totalorder %s142, %s143
      %p154 = scmp.eq.s32.totalorder %s29, 0
      %p155 = por %p153, %p154
      %p156 = scmp.ne.s32.totalorder %s142, %s143
      %p157 = scmp.eq.s32.totalorder %s30, 1
      %p158 = por %p156, %p157
      %p160 = scmp.ne.s32.totalorder %s143, %s159
      %p161 = scmp.eq.s32.totalorder %s30, 0
      %p162 = por %p160, %p161
      %s163 = ssub.s32 %s31, %s43
      %s164 = ssub.s32 %s32, %s39
      %s165 = sor.u32 %s163, %s164
      %p166 = scmp.eq.s32.totalorder %s165, 0
      %s168 = sadd.s32 %s167, 1
      %s169 = scalar_select %p166, %s167, %s168
      %p172 = pneg %p166
      %p173 = scmp.eq.s32.totalorder %s24, 1
      %p174 = por %p172, %p173
      %p175 = scmp.ne.s32.totalorder %s167, %s170
      %p176 = scmp.eq.s32.totalorder %s24, 0
      %p177 = por %p175, %p176
      %p178 = scmp.ne.s32.totalorder %s167, %s170
      %p179 = scmp.eq.s32.totalorder %s29, 1
      %p180 = por %p178, %p179
      %p181 = scmp.ne.s32.totalorder %s170, %s171
      %p182 = scmp.eq.s32.totalorder %s29, 0
      %p183 = por %p181, %p182
      %p184 = scmp.ne.s32.totalorder %s170, %s171
      %p185 = scmp.eq.s32.totalorder %s30, 1
      %p186 = por %p184, %p185
      %p188 = scmp.ne.s32.totalorder %s171, %s187
      %p189 = scmp.eq.s32.totalorder %s30, 0
      %p190 = por %p188, %p189
      %p191 = scmp.le.s32.totalorder 1, %s24
      %p192 = scmp.lt.s32.totalorder %s24, 3
      %p193 = pnand %p191, %p192
      %p194 = pneg %p193
      // Predicated region
      $region9: #{tpu_custom_call.1} parent=5 // pred_check
        _
      $region10: #{tpu_custom_call.1} parent=5 // pred_check_branch
        %196 = sbr.rel (%p193) target = $region12
      $region11: #{tpu_custom_call.1} parent=5 // pred_region
        %s197 = ssub.s32 %s24, 1
        // Predicated region
        $region13: #{tpu_custom_call.1} parent=11 // pred_check
          %p198 = pneg %p57
        $region14: #{tpu_custom_call.1} parent=11 // pred_check_branch
          %200 = sbr.rel (%p198) target = $region16
        $region15: #{tpu_custom_call.1} parent=11 // pred_region
          %s202 = ssub.s32 32, 32
          %203 = vsyncadd [#allocation6], %s202
          %206 = dma.hbm_to_smem %s0, 32, [#allocation3], [#allocation6]
        $region16: #{tpu_custom_call.1} parent=11 // pred_fallthru
          _
        // Predicated region
        $region17: #{tpu_custom_call.1} parent=11 // pred_check
          %p207 = pneg %p78
        $region18: #{tpu_custom_call.1} parent=11 // pred_check_branch
          %209 = sbr.rel (%p207) target = $region20
        $region19: #{tpu_custom_call.1} parent=11 // pred_region
          %s211 = ssub.s32 16, 16
          %212 = vsyncadd [#allocation7], %s211
          %s214 = sshll.u32 %s1, 4
          %s215 = int_to_ptr.vmem [resolvable:$true] %s214
          %217 = dma.vmem_to_smem %s215, 16, [#allocation8], [#allocation7]
        $region20: #{tpu_custom_call.1} parent=11 // pred_fallthru
          _
        // Predicated region
        $region21: #{tpu_custom_call.1} parent=11 // pred_check
          %p218 = pneg %p99
        $region22: #{tpu_custom_call.1} parent=11 // pred_check_branch
          %220 = sbr.rel (%p218) target = $region24
        $region23: #{tpu_custom_call.1} parent=11 // pred_region
          %s222 = ssub.s32 16, 16
          %223 = vsyncadd [#allocation10], %s222
          %s225 = sshll.u32 %s2, 4
          %s226 = int_to_ptr.vmem [resolvable:$true] %s225
          %228 = dma.vmem_to_smem %s226, 16, [#allocation9], [#allocation10]
        $region24: #{tpu_custom_call.1} parent=11 // pred_fallthru
          _
      $region12: #{tpu_custom_call.1} parent=5 // pred_fallthru
        _
      %p229 = scmp.lt.s32.totalorder %s24, 2
      // Predicated region
      $region25: #{tpu_custom_call.1} parent=5 // pred_check
        %p230 = pneg %p229
      $region26: #{tpu_custom_call.1} parent=5 // pred_check_branch
        %232 = sbr.rel (%p230) target = $region28
      $region27: #{tpu_custom_call.1} parent=5 // pred_region
        // Predicated region
        $region29: #{tpu_custom_call.1} parent=27 // pred_check
          %p233 = pneg %p121
        $region30: #{tpu_custom_call.1} parent=27 // pred_check_branch
          %235 = sbr.rel (%p233) target = $region32
        $region31: #{tpu_custom_call.1} parent=27 // pred_region
          %s236 = sand.u32 %s111, 1
          %s237 = scalar_lea.sflag [#allocation4], %s236
          %s238 = sand.u32 %s111, 1
          %s239 = smul.addr %s238, 320
          %s240 = scalar_lea.vmem [#allocation11], %s239
          %s242 = ssub.s32 5120, 5120
          %243 = vsyncadd %s237, %s242
          %s244 = smul.addr %s31, 40
          %s245 = sadd.s32 %s32, %s244
          %s246 = smul.addr %s245, 128
          %s247 = scalar_lea.hbm %s3, %s246
          %s248 = sshll.u32 %s240, 4
          %s249 = int_to_ptr.vmem [resolvable:$true] %s248
          %254 = dma.hbm_to_vmem [thread:$0]  %s247, 5120, %s249, %s237, 128, 128, 8
        $region32: #{tpu_custom_call.1} parent=27 // pred_fallthru
          _
      $region28: #{tpu_custom_call.1} parent=5 // pred_fallthru
        _
      %p255 = scmp.le.s32.totalorder 1, %s24
      %p256 = scmp.lt.s32.totalorder %s24, 3
      %p257 = pnand %p255, %p256
      %p258 = pneg %p257
      // Predicated region
      $region33: #{tpu_custom_call.1} parent=5 // pred_check
        _
      $region34: #{tpu_custom_call.1} parent=5 // pred_check_branch
        %260 = sbr.rel (%p257) target = $region36
      $region35: #{tpu_custom_call.1} parent=5 // pred_region
        %s261 = ssub.s32 %s24, 1
        // Predicated region
        $region37: #{tpu_custom_call.1} parent=35 // pred_check
          %p262 = pneg %p57
        $region38: #{tpu_custom_call.1} parent=35 // pred_check_branch
          %264 = sbr.rel (%p262) target = $region40
        $region39: #{tpu_custom_call.1} parent=35 // pred_region
          %265 = dma.done [#allocation6], 32
        $region40: #{tpu_custom_call.1} parent=35 // pred_fallthru
          _
        // Predicated region
        $region41: #{tpu_custom_call.1} parent=35 // pred_check
          %p266 = pneg %p78
        $region42: #{tpu_custom_call.1} parent=35 // pred_check_branch
          %268 = sbr.rel (%p266) target = $region44
        $region43: #{tpu_custom_call.1} parent=35 // pred_region
          %269 = dma.done [#allocation7], 16
        $region44: #{tpu_custom_call.1} parent=35 // pred_fallthru
          _
        // Predicated region
        $region45: #{tpu_custom_call.1} parent=35 // pred_check
          %p270 = pneg %p99
        $region46: #{tpu_custom_call.1} parent=35 // pred_check_branch
          %272 = sbr.rel (%p270) target = $region48
        $region47: #{tpu_custom_call.1} parent=35 // pred_region
          %273 = dma.done [#allocation10], 16
        $region48: #{tpu_custom_call.1} parent=35 // pred_fallthru
          _
        %s274 = sand.u32 %s114, 1
        %s275 = scalar_lea.sflag [#allocation4], %s274
        %s276 = sand.u32 %s114, 1
        %s277 = smul.addr %s276, 320
        %s278 = scalar_lea.vmem [#allocation11], %s277
        // Predicated region
        $region49: #{tpu_custom_call.1} parent=35 // pred_check
          %p279 = pneg %p127
        $region50: #{tpu_custom_call.1} parent=35 // pred_check_branch
          %281 = sbr.rel (%p279) target = $region52
        $region51: #{tpu_custom_call.1} parent=35 // pred_region
          %282 = dma.done %s275, 5120
        $region52: #{tpu_custom_call.1} parent=35 // pred_fallthru
          _
        %283 = sfence
        %p284 = pneg %p57
        %p285 = pneg %p54
        %p286 = pneg %p78
        %p287 = pneg %p75
        %p288 = pneg %p99
        %p289 = pneg %p96
        %s290 = sand.u32 %s114, 1
        %s291 = scalar_lea.sflag [#allocation4], %s290
        %s292 = sand.u32 %s114, 1
        %s293 = smul.addr %s292, 320
        %s294 = scalar_lea.vmem [#allocation11], %s293
        %p295 = pneg %p127
        %p296 = pneg %p124
        %p297 = pneg %p155
        %p298 = pneg %p152
        %s299 = sand.u32 %s142, 1
        %s300 = scalar_lea.sflag [#allocation5], %s299
        %s301 = sand.u32 %s142, 1
        %s302 = smul.addr %s301, 64
        %s303 = scalar_lea.vmem [#allocation12], %s302
        %p304 = pneg %p183
        %p305 = pneg %p180
        %s306 = sand.u32 %s170, 1
        %s307 = scalar_lea.sflag [#allocation14], %s306
        %s308 = sand.u32 %s170, 1
        %s309 = smul.addr %s308, 40
        %s310 = scalar_lea.vmem [#allocation13], %s309
        %v311 = vld [vmem:[%s278] sm:$0xff]
        %s312 = sld [smem:[#allocation8]]
        %v313 = vstv %s312
        %v314 = vadd.f32 %v311, %v313
        %s315 = scalar_lea.vmem %s278, 8 [#allocation11]
        %v316 = vld [vmem:[%s315] sm:$0xff]
        %s317 = sld [smem:[#allocation8 + $0x1]]
        %v318 = vstv %s317
        %v319 = vadd.f32 %v316, %v318
        %s320 = scalar_lea.vmem %s278, 16 [#allocation11]
        %v321 = vld [vmem:[%s320] sm:$0xff]
        %s322 = sld [smem:[#allocation8 + $0x2]]
        %v323 = vstv %s322
        %v324 = vadd.f32 %v321, %v323
        %s325 = scalar_lea.vmem %s278, 24 [#allocation11]
        %v326 = vld [vmem:[%s325] sm:$0xff]
        %s327 = sld [smem:[#allocation8 + $0x3]]
        %v328 = vstv %s327
        %v329 = vadd.f32 %v326, %v328
        %s330 = scalar_lea.vmem %s278, 32 [#allocation11]
        %v331 = vld [vmem:[%s330] sm:$0xff]
        %s332 = sld [smem:[#allocation8 + $0x4]]
        %v333 = vstv %s332
        %v334 = vadd.f32 %v331, %v333
        %s335 = sld [smem:[#allocation3]]
        %v336 = vstv %s335
        %v337 = vadd.f32 %v314, %v336
        %s338 = sld [smem:[#allocation3 + $0x5]]
        %v339 = vstv %s338
        %v340 = vadd.f32 %v319, %v339
        %vm341 = vcmp.gt.f32.partialorder %v340, %v337
        %v342 = vsel %vm341, %v340, %v337
        %v343 = vsel %vm341, 1, 0
        %s344 = sld [smem:[#allocation3 + $0xa]]
        %v345 = vstv %s344
        %v346 = vadd.f32 %v324, %v345
        %vm347 = vcmp.gt.f32.partialorder %v346, %v342
        %v348 = vsel %vm347, %v346, %v342
        %v349 = vsel %vm347, 2, %v343
        %s350 = sld [smem:[#allocation3 + $0xf]]
        %v351 = vstv %s350
        %v352 = vadd.f32 %v329, %v351
        %vm353 = vcmp.gt.f32.partialorder %v352, %v348
        %v354 = vsel %vm353, %v352, %v348
        %v355 = vsel %vm353, 3, %v349
        %s356 = sld [smem:[#allocation3 + $0x14]]
        %v357 = vstv %s356
        %v358 = vadd.f32 %v334, %v357
        %vm359 = vcmp.gt.f32.partialorder %v358, %v354
        %v360 = vsel %vm359, %v358, %v354
        %v361 = vsel %vm359, 4, %v355
        %362 = vst [vmem:[#allocation2] sm:$0xff] %v361
        %s363 = scalar_lea.vmem %s278, 40 [#allocation11]
        %v364 = vld [vmem:[%s363] sm:$0xff]
        %v365 = vadd.f32 %v360, %v364
        %s366 = sld [smem:[#allocation3 + $0x1]]
        %v367 = vstv %s366
        %v368 = vadd.f32 %v314, %v367
        %s369 = sld [smem:[#allocation3 + $0x6]]
        %v370 = vstv %s369
        %v371 = vadd.f32 %v319, %v370
        %vm372 = vcmp.gt.f32.partialorder %v371, %v368
        %v373 = vsel %vm372, %v371, %v368
        %v374 = vsel %vm372, 1, 0
        %s375 = sld [smem:[#allocation3 + $0xb]]
        %v376 = vstv %s375
        %v377 = vadd.f32 %v324, %v376
        %vm378 = vcmp.gt.f32.partialorder %v377, %v373
        %v379 = vsel %vm378, %v377, %v373
        %v380 = vsel %vm378, 2, %v374
        %s381 = sld [smem:[#allocation3 + $0x10]]
        %v382 = vstv %s381
        %v383 = vadd.f32 %v329, %v382
        %vm384 = vcmp.gt.f32.partialorder %v383, %v379
        %v385 = vsel %vm384, %v383, %v379
        %v386 = vsel %vm384, 3, %v380
        %s387 = sld [smem:[#allocation3 + $0x15]]
        %v388 = vstv %s387
        %v389 = vadd.f32 %v334, %v388
        %vm390 = vcmp.gt.f32.partialorder %v389, %v385
        %v391 = vsel %vm390, %v389, %v385
        %v392 = vsel %vm390, 4, %v386
        %s393 = scalar_lea.vmem [#allocation2], 8
        %394 = vst [vmem:[%s393] sm:$0xff] %v392
        %s395 = scalar_lea.vmem %s278, 48 [#allocation11]
        %v396 = vld [vmem:[%s395] sm:$0xff]
        %v397 = vadd.f32 %v391, %v396
        %s398 = sld [smem:[#allocation3 + $0x2]]
        %v399 = vstv %s398
        %v400 = vadd.f32 %v314, %v399
        %s401 = sld [smem:[#allocation3 + $0x7]]
        %v402 = vstv %s401
        %v403 = vadd.f32 %v319, %v402
        %vm404 = vcmp.gt.f32.partialorder %v403, %v400
        %v405 = vsel %vm404, %v403, %v400
        %v406 = vsel %vm404, 1, 0
        %s407 = sld [smem:[#allocation3 + $0xc]]
        %v408 = vstv %s407
        %v409 = vadd.f32 %v324, %v408
        %vm410 = vcmp.gt.f32.partialorder %v409, %v405
        %v411 = vsel %vm410, %v409, %v405
        %v412 = vsel %vm410, 2, %v406
        %s413 = sld [smem:[#allocation3 + $0x11]]
        %v414 = vstv %s413
        %v415 = vadd.f32 %v329, %v414
        %vm416 = vcmp.gt.f32.partialorder %v415, %v411
        %v417 = vsel %vm416, %v415, %v411
        %v418 = vsel %vm416, 3, %v412
        %s419 = sld [smem:[#allocation3 + $0x16]]
        %v420 = vstv %s419
        %v421 = vadd.f32 %v334, %v420
        %vm422 = vcmp.gt.f32.partialorder %v421, %v417
        %v423 = vsel %vm422, %v421, %v417
        %v424 = vsel %vm422, 4, %v418
        %s425 = scalar_lea.vmem [#allocation2], 16
        %426 = vst [vmem:[%s425] sm:$0xff] %v424
        %s427 = scalar_lea.vmem %s278, 56 [#allocation11]
        %v428 = vld [vmem:[%s427] sm:$0xff]
        %v429 = vadd.f32 %v423, %v428
        %s430 = sld [smem:[#allocation3 + $0x3]]
        %v431 = vstv %s430
        %v432 = vadd.f32 %v314, %v431
        %s433 = sld [smem:[#allocation3 + $0x8]]
        %v434 = vstv %s433
        %v435 = vadd.f32 %v319, %v434
        %vm436 = vcmp.gt.f32.partialorder %v435, %v432
        %v437 = vsel %vm436, %v435, %v432
        %v438 = vsel %vm436, 1, 0
        %s439 = sld [smem:[#allocation3 + $0xd]]
        %v440 = vstv %s439
        %v441 = vadd.f32 %v324, %v440
        %vm442 = vcmp.gt.f32.partialorder %v441, %v437
        %v443 = vsel %vm442, %v441, %v437
        %v444 = vsel %vm442, 2, %v438
        %s445 = sld [smem:[#allocation3 + $0x12]]
        %v446 = vstv %s445
        %v447 = vadd.f32 %v329, %v446
        %vm448 = vcmp.gt.f32.partialorder %v447, %v443
        %v449 = vsel %vm448, %v447, %v443
        %v450 = vsel %vm448, 3, %v444
        %s451 = sld [smem:[#allocation3 + $0x17]]
        %v452 = vstv %s451
        %v453 = vadd.f32 %v334, %v452
        %vm454 = vcmp.gt.f32.partialorder %v453, %v449
        %v455 = vsel %vm454, %v453, %v449
        %v456 = vsel %vm454, 4, %v450
        %s457 = scalar_lea.vmem [#allocation2], 24
        %458 = vst [vmem:[%s457] sm:$0xff] %v456
        %s459 = scalar_lea.vmem %s278, 64 [#allocation11]
        %v460 = vld [vmem:[%s459] sm:$0xff]
        %v461 = vadd.f32 %v455, %v460
        %s462 = sld [smem:[#allocation3 + $0x4]]
        %v463 = vstv %s462
        %v464 = vadd.f32 %v314, %v463
        %s465 = sld [smem:[#allocation3 + $0x9]]
        %v466 = vstv %s465
        %v467 = vadd.f32 %v319, %v466
        %vm468 = vcmp.gt.f32.partialorder %v467, %v464
        %v469 = vsel %vm468, %v467, %v464
        %v470 = vsel %vm468, 1, 0
        %s471 = sld [smem:[#allocation3 + $0xe]]
        %v472 = vstv %s471
        %v473 = vadd.f32 %v324, %v472
        %vm474 = vcmp.gt.f32.partialorder %v473, %v469
        %v475 = vsel %vm474, %v473, %v469
        %v476 = vsel %vm474, 2, %v470
        %s477 = sld [smem:[#allocation3 + $0x13]]
        %v478 = vstv %s477
        %v479 = vadd.f32 %v329, %v478
        %vm480 = vcmp.gt.f32.partialorder %v479, %v475
        %v481 = vsel %vm480, %v479, %v475
        %v482 = vsel %vm480, 3, %v476
        %s483 = sld [smem:[#allocation3 + $0x18]]
        %v484 = vstv %s483
        %v485 = vadd.f32 %v334, %v484
        %vm486 = vcmp.gt.f32.partialorder %v485, %v481
        %v487 = vsel %vm486, %v485, %v481
        %v488 = vsel %vm486, 4, %v482
        %s489 = scalar_lea.vmem [#allocation2], 32
        %490 = vst [vmem:[%s489] sm:$0xff] %v488
        %s491 = scalar_lea.vmem %s278, 72 [#allocation11]
        %v492 = vld [vmem:[%s491] sm:$0xff]
        %v493 = vadd.f32 %v487, %v492
        %s494 = sld [smem:[#allocation3 + $0x19]]
        %v495 = vstv %s494
        %v496 = vadd.f32 %v365, %v495
        %s497 = sld [smem:[#allocation3 + $0x1e]]
        %v498 = vstv %s497
        %v499 = vadd.f32 %v397, %v498
        %vm500 = vcmp.gt.f32.partialorder %v499, %v496
        %v501 = vsel %vm500, %v499, %v496
        %v502 = vsel %vm500, 1, 0
        %s503 = sld [smem:[#allocation3 + $0x23]]
        %v504 = vstv %s503
        %v505 = vadd.f32 %v429, %v504
        %vm506 = vcmp.gt.f32.partialorder %v505, %v501
        %v507 = vsel %vm506, %v505, %v501
        %v508 = vsel %vm506, 2, %v502
        %s509 = sld [smem:[#allocation3 + $0x28]]
        %v510 = vstv %s509
        %v511 = vadd.f32 %v461, %v510
        %vm512 = vcmp.gt.f32.partialorder %v511, %v507
        %v513 = vsel %vm512, %v511, %v507
        %v514 = vsel %vm512, 3, %v508
        %s515 = sld [smem:[#allocation3 + $0x2d]]
        %v516 = vstv %s515
        %v517 = vadd.f32 %v493, %v516
        %vm518 = vcmp.gt.f32.partialorder %v517, %v513
        %v519 = vsel %vm518, %v517, %v513
        %v520 = vsel %vm518, 4, %v514
        %s521 = scalar_lea.vmem [#allocation2], 40
        %522 = vst [vmem:[%s521] sm:$0xff] %v520
        %s523 = scalar_lea.vmem %s278, 80 [#allocation11]
        %v524 = vld [vmem:[%s523] sm:$0xff]
        %v525 = vadd.f32 %v519, %v524
        %s526 = sld [smem:[#allocation3 + $0x1a]]
        %v527 = vstv %s526
        %v528 = vadd.f32 %v365, %v527
        %s529 = sld [smem:[#allocation3 + $0x1f]]
        %v530 = vstv %s529
        %v531 = vadd.f32 %v397, %v530
        %vm532 = vcmp.gt.f32.partialorder %v531, %v528
        %v533 = vsel %vm532, %v531, %v528
        %v534 = vsel %vm532, 1, 0
        %s535 = sld [smem:[#allocation3 + $0x24]]
        %v536 = vstv %s535
        %v537 = vadd.f32 %v429, %v536
        %vm538 = vcmp.gt.f32.partialorder %v537, %v533
        %v539 = vsel %vm538, %v537, %v533
        %v540 = vsel %vm538, 2, %v534
        %s541 = sld [smem:[#allocation3 + $0x29]]
        %v542 = vstv %s541
        %v543 = vadd.f32 %v461, %v542
        %vm544 = vcmp.gt.f32.partialorder %v543, %v539
        %v545 = vsel %vm544, %v543, %v539
        %v546 = vsel %vm544, 3, %v540
        %s547 = sld [smem:[#allocation3 + $0x2e]]
        %v548 = vstv %s547
        %v549 = vadd.f32 %v493, %v548
        %vm550 = vcmp.gt.f32.partialorder %v549, %v545
        %v551 = vsel %vm550, %v549, %v545
        %v552 = vsel %vm550, 4, %v546
        %s553 = scalar_lea.vmem [#allocation2], 48
        %554 = vst [vmem:[%s553] sm:$0xff] %v552
        %s555 = scalar_lea.vmem %s278, 88 [#allocation11]
        %v556 = vld [vmem:[%s555] sm:$0xff]
        %v557 = vadd.f32 %v551, %v556
        %s558 = sld [smem:[#allocation3 + $0x1b]]
        %v559 = vstv %s558
        %v560 = vadd.f32 %v365, %v559
        %s561 = sld [smem:[#allocation3 + $0x20]]
        %v562 = vstv %s561
        %v563 = vadd.f32 %v397, %v562
        %vm564 = vcmp.gt.f32.partialorder %v563, %v560
        %v565 = vsel %vm564, %v563, %v560
        %v566 = vsel %vm564, 1, 0
        %s567 = sld [smem:[#allocation3 + $0x25]]
        %v568 = vstv %s567
        %v569 = vadd.f32 %v429, %v568
        %vm570 = vcmp.gt.f32.partialorder %v569, %v565
        %v571 = vsel %vm570, %v569, %v565
        %v572 = vsel %vm570, 2, %v566
        %s573 = sld [smem:[#allocation3 + $0x2a]]
        %v574 = vstv %s573
        %v575 = vadd.f32 %v461, %v574
        %vm576 = vcmp.gt.f32.partialorder %v575, %v571
        %v577 = vsel %vm576, %v575, %v571
        %v578 = vsel %vm576, 3, %v572
        %s579 = sld [smem:[#allocation3 + $0x2f]]
        %v580 = vstv %s579
        %v581 = vadd.f32 %v493, %v580
        %vm582 = vcmp.gt.f32.partialorder %v581, %v577
        %v583 = vsel %vm582, %v581, %v577
        %v584 = vsel %vm582, 4, %v578
        %s585 = scalar_lea.vmem [#allocation2], 56
        %586 = vst [vmem:[%s585] sm:$0xff] %v584
        %s587 = scalar_lea.vmem %s278, 96 [#allocation11]
        %v588 = vld [vmem:[%s587] sm:$0xff]
        %v589 = vadd.f32 %v583, %v588
        %s590 = sld [smem:[#allocation3 + $0x1c]]
        %v591 = vstv %s590
        %v592 = vadd.f32 %v365, %v591
        %s593 = sld [smem:[#allocation3 + $0x21]]
        %v594 = vstv %s593
        %v595 = vadd.f32 %v397, %v594
        %vm596 = vcmp.gt.f32.partialorder %v595, %v592
        %v597 = vsel %vm596, %v595, %v592
        %v598 = vsel %vm596, 1, 0
        %s599 = sld [smem:[#allocation3 + $0x26]]
        %v600 = vstv %s599
        %v601 = vadd.f32 %v429, %v600
        %vm602 = vcmp.gt.f32.partialorder %v601, %v597
        %v603 = vsel %vm602, %v601, %v597
        %v604 = vsel %vm602, 2, %v598
        %s605 = sld [smem:[#allocation3 + $0x2b]]
        %v606 = vstv %s605
        %v607 = vadd.f32 %v461, %v606
        %vm608 = vcmp.gt.f32.partialorder %v607, %v603
        %v609 = vsel %vm608, %v607, %v603
        %v610 = vsel %vm608, 3, %v604
        %s611 = sld [smem:[#allocation3 + $0x30]]
        %v612 = vstv %s611
        %v613 = vadd.f32 %v493, %v612
        %vm614 = vcmp.gt.f32.partialorder %v613, %v609
        %v615 = vsel %vm614, %v613, %v609
        %v616 = vsel %vm614, 4, %v610
        %s617 = scalar_lea.vmem [#allocation2], 64
        %618 = vst [vmem:[%s617] sm:$0xff] %v616
        %s619 = scalar_lea.vmem %s278, 104 [#allocation11]
        %v620 = vld [vmem:[%s619] sm:$0xff]
        %v621 = vadd.f32 %v615, %v620
        %s622 = sld [smem:[#allocation3 + $0x1d]]
        %v623 = vstv %s622
        %v624 = vadd.f32 %v365, %v623
        %s625 = sld [smem:[#allocation3 + $0x22]]
        %v626 = vstv %s625
        %v627 = vadd.f32 %v397, %v626
        %vm628 = vcmp.gt.f32.partialorder %v627, %v624
        %v629 = vsel %vm628, %v627, %v624
        %v630 = vsel %vm628, 1, 0
        %s631 = sld [smem:[#allocation3 + $0x27]]
        %v632 = vstv %s631
        %v633 = vadd.f32 %v429, %v632
        %vm634 = vcmp.gt.f32.partialorder %v633, %v629
        %v635 = vsel %vm634, %v633, %v629
        %v636 = vsel %vm634, 2, %v630
        %s637 = sld [smem:[#allocation3 + $0x2c]]
        %v638 = vstv %s637
        %v639 = vadd.f32 %v461, %v638
        %vm640 = vcmp.gt.f32.partialorder %v639, %v635
        %v641 = vsel %vm640, %v639, %v635
        %v642 = vsel %vm640, 3, %v636
        %s643 = sld [smem:[#allocation3 + $0x31]]
        %v644 = vstv %s643
        %v645 = vadd.f32 %v493, %v644
        %vm646 = vcmp.gt.f32.partialorder %v645, %v641
        %v647 = vsel %vm646, %v645, %v641
        %v648 = vsel %vm646, 4, %v642
        %s649 = scalar_lea.vmem [#allocation2], 72
        %650 = vst [vmem:[%s649] sm:$0xff] %v648
        %s651 = scalar_lea.vmem %s278, 112 [#allocation11]
        %v652 = vld [vmem:[%s651] sm:$0xff]
        %v653 = vadd.f32 %v647, %v652
        %s654 = sld [smem:[#allocation3 + $0x32]]
        %v655 = vstv %s654
        %v656 = vadd.f32 %v525, %v655
        %s657 = sld [smem:[#allocation3 + $0x37]]
        %v658 = vstv %s657
        %v659 = vadd.f32 %v557, %v658
        %vm660 = vcmp.gt.f32.partialorder %v659, %v656
        %v661 = vsel %vm660, %v659, %v656
        %v662 = vsel %vm660, 1, 0
        %s663 = sld [smem:[#allocation3 + $0x3c]]
        %v664 = vstv %s663
        %v665 = vadd.f32 %v589, %v664
        %vm666 = vcmp.gt.f32.partialorder %v665, %v661
        %v667 = vsel %vm666, %v665, %v661
        %v668 = vsel %vm666, 2, %v662
        %s669 = sld [smem:[#allocation3 + $0x41]]
        %v670 = vstv %s669
        %v671 = vadd.f32 %v621, %v670
        %vm672 = vcmp.gt.f32.partialorder %v671, %v667
        %v673 = vsel %vm672, %v671, %v667
        %v674 = vsel %vm672, 3, %v668
        %s675 = sld [smem:[#allocation3 + $0x46]]
        %v676 = vstv %s675
        %v677 = vadd.f32 %v653, %v676
        %vm678 = vcmp.gt.f32.partialorder %v677, %v673
        %v679 = vsel %vm678, %v677, %v673
        %v680 = vsel %vm678, 4, %v674
        %s681 = scalar_lea.vmem [#allocation2], 80
        %682 = vst [vmem:[%s681] sm:$0xff] %v680
        %s683 = scalar_lea.vmem %s278, 120 [#allocation11]
        %v684 = vld [vmem:[%s683] sm:$0xff]
        %v685 = vadd.f32 %v679, %v684
        %s686 = sld [smem:[#allocation3 + $0x33]]
        %v687 = vstv %s686
        %v688 = vadd.f32 %v525, %v687
        %s689 = sld [smem:[#allocation3 + $0x38]]
        %v690 = vstv %s689
        %v691 = vadd.f32 %v557, %v690
        %vm692 = vcmp.gt.f32.partialorder %v691, %v688
        %v693 = vsel %vm692, %v691, %v688
        %v694 = vsel %vm692, 1, 0
        %s695 = sld [smem:[#allocation3 + $0x3d]]
        %v696 = vstv %s695
        %v697 = vadd.f32 %v589, %v696
        %vm698 = vcmp.gt.f32.partialorder %v697, %v693
        %v699 = vsel %vm698, %v697, %v693
        %v700 = vsel %vm698, 2, %v694
        %s701 = sld [smem:[#allocation3 + $0x42]]
        %v702 = vstv %s701
        %v703 = vadd.f32 %v621, %v702
        %vm704 = vcmp.gt.f32.partialorder %v703, %v699
        %v705 = vsel %vm704, %v703, %v699
        %v706 = vsel %vm704, 3, %v700
        %s707 = sld [smem:[#allocation3 + $0x47]]
        %v708 = vstv %s707
        %v709 = vadd.f32 %v653, %v708
        %vm710 = vcmp.gt.f32.partialorder %v709, %v705
        %v711 = vsel %vm710, %v709, %v705
        %v712 = vsel %vm710, 4, %v706
        %s713 = scalar_lea.vmem [#allocation2], 88
        %714 = vst [vmem:[%s713] sm:$0xff] %v712
        %s715 = scalar_lea.vmem %s278, 128 [#allocation11]
        %v716 = vld [vmem:[%s715] sm:$0xff]
        %v717 = vadd.f32 %v711, %v716
        %s718 = sld [smem:[#allocation3 + $0x34]]
        %v719 = vstv %s718
        %v720 = vadd.f32 %v525, %v719
        %s721 = sld [smem:[#allocation3 + $0x39]]
        %v722 = vstv %s721
        %v723 = vadd.f32 %v557, %v722
        %vm724 = vcmp.gt.f32.partialorder %v723, %v720
        %v725 = vsel %vm724, %v723, %v720
        %v726 = vsel %vm724, 1, 0
        %s727 = sld [smem:[#allocation3 + $0x3e]]
        %v728 = vstv %s727
        %v729 = vadd.f32 %v589, %v728
        %vm730 = vcmp.gt.f32.partialorder %v729, %v725
        %v731 = vsel %vm730, %v729, %v725
        %v732 = vsel %vm730, 2, %v726
        %s733 = sld [smem:[#allocation3 + $0x43]]
        %v734 = vstv %s733
        %v735 = vadd.f32 %v621, %v734
        %vm736 = vcmp.gt.f32.partialorder %v735, %v731
        %v737 = vsel %vm736, %v735, %v731
        %v738 = vsel %vm736, 3, %v732
        %s739 = sld [smem:[#allocation3 + $0x48]]
        %v740 = vstv %s739
        %v741 = vadd.f32 %v653, %v740
        %vm742 = vcmp.gt.f32.partialorder %v741, %v737
        %v743 = vsel %vm742, %v741, %v737
        %v744 = vsel %vm742, 4, %v738
        %s745 = scalar_lea.vmem [#allocation2], 96
        %746 = vst [vmem:[%s745] sm:$0xff] %v744
        %s747 = scalar_lea.vmem %s278, 136 [#allocation11]
        %v748 = vld [vmem:[%s747] sm:$0xff]
        %v749 = vadd.f32 %v743, %v748
        %s750 = sld [smem:[#allocation3 + $0x35]]
        %v751 = vstv %s750
        %v752 = vadd.f32 %v525, %v751
        %s753 = sld [smem:[#allocation3 + $0x3a]]
        %v754 = vstv %s753
        %v755 = vadd.f32 %v557, %v754
        %vm756 = vcmp.gt.f32.partialorder %v755, %v752
        %v757 = vsel %vm756, %v755, %v752
        %v758 = vsel %vm756, 1, 0
        %s759 = sld [smem:[#allocation3 + $0x3f]]
        %v760 = vstv %s759
        %v761 = vadd.f32 %v589, %v760
        %vm762 = vcmp.gt.f32.partialorder %v761, %v757
        %v763 = vsel %vm762, %v761, %v757
        %v764 = vsel %vm762, 2, %v758
        %s765 = sld [smem:[#allocation3 + $0x44]]
        %v766 = vstv %s765
        %v767 = vadd.f32 %v621, %v766
        %vm768 = vcmp.gt.f32.partialorder %v767, %v763
        %v769 = vsel %vm768, %v767, %v763
        %v770 = vsel %vm768, 3, %v764
        %s771 = sld [smem:[#allocation3 + $0x49]]
        %v772 = vstv %s771
        %v773 = vadd.f32 %v653, %v772
        %vm774 = vcmp.gt.f32.partialorder %v773, %v769
        %v775 = vsel %vm774, %v773, %v769
        %v776 = vsel %vm774, 4, %v770
        %s777 = scalar_lea.vmem [#allocation2], 104
        %778 = vst [vmem:[%s777] sm:$0xff] %v776
        %s779 = scalar_lea.vmem %s278, 144 [#allocation11]
        %v780 = vld [vmem:[%s779] sm:$0xff]
        %v781 = vadd.f32 %v775, %v780
        %s782 = sld [smem:[#allocation3 + $0x36]]
        %v783 = vstv %s782
        %v784 = vadd.f32 %v525, %v783
        %s785 = sld [smem:[#allocation3 + $0x3b]]
        %v786 = vstv %s785
        %v787 = vadd.f32 %v557, %v786
        %vm788 = vcmp.gt.f32.partialorder %v787, %v784
        %v789 = vsel %vm788, %v787, %v784
        %v790 = vsel %vm788, 1, 0
        %s791 = sld [smem:[#allocation3 + $0x40]]
        %v792 = vstv %s791
        %v793 = vadd.f32 %v589, %v792
        %vm794 = vcmp.gt.f32.partialorder %v793, %v789
        %v795 = vsel %vm794, %v793, %v789
        %v796 = vsel %vm794, 2, %v790
        %s797 = sld [smem:[#allocation3 + $0x45]]
        %v798 = vstv %s797
        %v799 = vadd.f32 %v621, %v798
        %vm800 = vcmp.gt.f32.partialorder %v799, %v795
        %v801 = vsel %vm800, %v799, %v795
        %v802 = vsel %vm800, 3, %v796
        %s803 = sld [smem:[#allocation3 + $0x4a]]
        %v804 = vstv %s803
        %v805 = vadd.f32 %v653, %v804
        %vm806 = vcmp.gt.f32.partialorder %v805, %v801
        %v807 = vsel %vm806, %v805, %v801
        %v808 = vsel %vm806, 4, %v802
        %s809 = scalar_lea.vmem [#allocation2], 112
        %810 = vst [vmem:[%s809] sm:$0xff] %v808
        %s811 = scalar_lea.vmem %s278, 152 [#allocation11]
        %v812 = vld [vmem:[%s811] sm:$0xff]
        %v813 = vadd.f32 %v807, %v812
        %s814 = sld [smem:[#allocation3 + $0x4b]]
        %v815 = vstv %s814
        %v816 = vadd.f32 %v685, %v815
        %s817 = sld [smem:[#allocation3 + $0x50]]
        %v818 = vstv %s817
        %v819 = vadd.f32 %v717, %v818
        %vm820 = vcmp.gt.f32.partialorder %v819, %v816
        %v821 = vsel %vm820, %v819, %v816
        %v822 = vsel %vm820, 1, 0
        %s823 = sld [smem:[#allocation3 + $0x55]]
        %v824 = vstv %s823
        %v825 = vadd.f32 %v749, %v824
        %vm826 = vcmp.gt.f32.partialorder %v825, %v821
        %v827 = vsel %vm826, %v825, %v821
        %v828 = vsel %vm826, 2, %v822
        %s829 = sld [smem:[#allocation3 + $0x5a]]
        %v830 = vstv %s829
        %v831 = vadd.f32 %v781, %v830
        %vm832 = vcmp.gt.f32.partialorder %v831, %v827
        %v833 = vsel %vm832, %v831, %v827
        %v834 = vsel %vm832, 3, %v828
        %s835 = sld [smem:[#allocation3 + $0x5f]]
        %v836 = vstv %s835
        %v837 = vadd.f32 %v813, %v836
        %vm838 = vcmp.gt.f32.partialorder %v837, %v833
        %v839 = vsel %vm838, %v837, %v833
        %v840 = vsel %vm838, 4, %v834
        %s841 = scalar_lea.vmem [#allocation2], 120
        %842 = vst [vmem:[%s841] sm:$0xff] %v840
        %s843 = scalar_lea.vmem %s278, 160 [#allocation11]
        %v844 = vld [vmem:[%s843] sm:$0xff]
        %v845 = vadd.f32 %v839, %v844
        %s846 = sld [smem:[#allocation3 + $0x4c]]
        %v847 = vstv %s846
        %v848 = vadd.f32 %v685, %v847
        %s849 = sld [smem:[#allocation3 + $0x51]]
        %v850 = vstv %s849
        %v851 = vadd.f32 %v717, %v850
        %vm852 = vcmp.gt.f32.partialorder %v851, %v848
        %v853 = vsel %vm852, %v851, %v848
        %v854 = vsel %vm852, 1, 0
        %s855 = sld [smem:[#allocation3 + $0x56]]
        %v856 = vstv %s855
        %v857 = vadd.f32 %v749, %v856
        %vm858 = vcmp.gt.f32.partialorder %v857, %v853
        %v859 = vsel %vm858, %v857, %v853
        %v860 = vsel %vm858, 2, %v854
        %s861 = sld [smem:[#allocation3 + $0x5b]]
        %v862 = vstv %s861
        %v863 = vadd.f32 %v781, %v862
        %vm864 = vcmp.gt.f32.partialorder %v863, %v859
        %v865 = vsel %vm864, %v863, %v859
        %v866 = vsel %vm864, 3, %v860
        %s867 = sld [smem:[#allocation3 + $0x60]]
        %v868 = vstv %s867
        %v869 = vadd.f32 %v813, %v868
        %vm870 = vcmp.gt.f32.partialorder %v869, %v865
        %v871 = vsel %vm870, %v869, %v865
        %v872 = vsel %vm870, 4, %v866
        %s873 = scalar_lea.vmem [#allocation2], 128
        %874 = vst [vmem:[%s873] sm:$0xff] %v872
        %s875 = scalar_lea.vmem %s278, 168 [#allocation11]
        %v876 = vld [vmem:[%s875] sm:$0xff]
        %v877 = vadd.f32 %v871, %v876
        %s878 = sld [smem:[#allocation3 + $0x4d]]
        %v879 = vstv %s878
        %v880 = vadd.f32 %v685, %v879
        %s881 = sld [smem:[#allocation3 + $0x52]]
        %v882 = vstv %s881
        %v883 = vadd.f32 %v717, %v882
        %vm884 = vcmp.gt.f32.partialorder %v883, %v880
        %v885 = vsel %vm884, %v883, %v880
        %v886 = vsel %vm884, 1, 0
        %s887 = sld [smem:[#allocation3 + $0x57]]
        %v888 = vstv %s887
        %v889 = vadd.f32 %v749, %v888
        %vm890 = vcmp.gt.f32.partialorder %v889, %v885
        %v891 = vsel %vm890, %v889, %v885
        %v892 = vsel %vm890, 2, %v886
        %s893 = sld [smem:[#allocation3 + $0x5c]]
        %v894 = vstv %s893
        %v895 = vadd.f32 %v781, %v894
        %vm896 = vcmp.gt.f32.partialorder %v895, %v891
        %v897 = vsel %vm896, %v895, %v891
        %v898 = vsel %vm896, 3, %v892
        %s899 = sld [smem:[#allocation3 + $0x61]]
        %v900 = vstv %s899
        %v901 = vadd.f32 %v813, %v900
        %vm902 = vcmp.gt.f32.partialorder %v901, %v897
        %v903 = vsel %vm902, %v901, %v897
        %v904 = vsel %vm902, 4, %v898
        %s905 = scalar_lea.vmem [#allocation2], 136
        %906 = vst [vmem:[%s905] sm:$0xff] %v904
        %s907 = scalar_lea.vmem %s278, 176 [#allocation11]
        %v908 = vld [vmem:[%s907] sm:$0xff]
        %v909 = vadd.f32 %v903, %v908
        %s910 = sld [smem:[#allocation3 + $0x4e]]
        %v911 = vstv %s910
        %v912 = vadd.f32 %v685, %v911
        %s913 = sld [smem:[#allocation3 + $0x53]]
        %v914 = vstv %s913
        %v915 = vadd.f32 %v717, %v914
        %vm916 = vcmp.gt.f32.partialorder %v915, %v912
        %v917 = vsel %vm916, %v915, %v912
        %v918 = vsel %vm916, 1, 0
        %s919 = sld [smem:[#allocation3 + $0x58]]
        %v920 = vstv %s919
        %v921 = vadd.f32 %v749, %v920
        %vm922 = vcmp.gt.f32.partialorder %v921, %v917
        %v923 = vsel %vm922, %v921, %v917
        %v924 = vsel %vm922, 2, %v918
        %s925 = sld [smem:[#allocation3 + $0x5d]]
        %v926 = vstv %s925
        %v927 = vadd.f32 %v781, %v926
        %vm928 = vcmp.gt.f32.partialorder %v927, %v923
        %v929 = vsel %vm928, %v927, %v923
        %v930 = vsel %vm928, 3, %v924
        %s931 = sld [smem:[#allocation3 + $0x62]]
        %v932 = vstv %s931
        %v933 = vadd.f32 %v813, %v932
        %vm934 = vcmp.gt.f32.partialorder %v933, %v929
        %v935 = vsel %vm934, %v933, %v929
        %v936 = vsel %vm934, 4, %v930
        %s937 = scalar_lea.vmem [#allocation2], 144
        %938 = vst [vmem:[%s937] sm:$0xff] %v936
        %s939 = scalar_lea.vmem %s278, 184 [#allocation11]
        %v940 = vld [vmem:[%s939] sm:$0xff]
        %v941 = vadd.f32 %v935, %v940
        %s942 = sld [smem:[#allocation3 + $0x4f]]
        %v943 = vstv %s942
        %v944 = vadd.f32 %v685, %v943
        %s945 = sld [smem:[#allocation3 + $0x54]]
        %v946 = vstv %s945
        %v947 = vadd.f32 %v717, %v946
        %vm948 = vcmp.gt.f32.partialorder %v947, %v944
        %v949 = vsel %vm948, %v947, %v944
        %v950 = vsel %vm948, 1, 0
        %s951 = sld [smem:[#allocation3 + $0x59]]
        %v952 = vstv %s951
        %v953 = vadd.f32 %v749, %v952
        %vm954 = vcmp.gt.f32.partialorder %v953, %v949
        %v955 = vsel %vm954, %v953, %v949
        %v956 = vsel %vm954, 2, %v950
        %s957 = sld [smem:[#allocation3 + $0x5e]]
        %v958 = vstv %s957
        %v959 = vadd.f32 %v781, %v958
        %vm960 = vcmp.gt.f32.partialorder %v959, %v955
        %v961 = vsel %vm960, %v959, %v955
        %v962 = vsel %vm960, 3, %v956
        %s963 = sld [smem:[#allocation3 + $0x63]]
        %v964 = vstv %s963
        %v965 = vadd.f32 %v813, %v964
        %vm966 = vcmp.gt.f32.partialorder %v965, %v961
        %v967 = vsel %vm966, %v965, %v961
        %v968 = vsel %vm966, 4, %v962
        %s969 = scalar_lea.vmem [#allocation2], 152
        %970 = vst [vmem:[%s969] sm:$0xff] %v968
        %s971 = scalar_lea.vmem %s278, 192 [#allocation11]
        %v972 = vld [vmem:[%s971] sm:$0xff]
        %v973 = vadd.f32 %v967, %v972
        %s974 = sld [smem:[#allocation3 + $0x64]]
        %v975 = vstv %s974
        %v976 = vadd.f32 %v845, %v975
        %s977 = sld [smem:[#allocation3 + $0x69]]
        %v978 = vstv %s977
        %v979 = vadd.f32 %v877, %v978
        %vm980 = vcmp.gt.f32.partialorder %v979, %v976
        %v981 = vsel %vm980, %v979, %v976
        %v982 = vsel %vm980, 1, 0
        %s983 = sld [smem:[#allocation3 + $0x6e]]
        %v984 = vstv %s983
        %v985 = vadd.f32 %v909, %v984
        %vm986 = vcmp.gt.f32.partialorder %v985, %v981
        %v987 = vsel %vm986, %v985, %v981
        %v988 = vsel %vm986, 2, %v982
        %s989 = sld [smem:[#allocation3 + $0x73]]
        %v990 = vstv %s989
        %v991 = vadd.f32 %v941, %v990
        %vm992 = vcmp.gt.f32.partialorder %v991, %v987
        %v993 = vsel %vm992, %v991, %v987
        %v994 = vsel %vm992, 3, %v988
        %s995 = sld [smem:[#allocation3 + $0x78]]
        %v996 = vstv %s995
        %v997 = vadd.f32 %v973, %v996
        %vm998 = vcmp.gt.f32.partialorder %v997, %v993
        %v999 = vsel %vm998, %v997, %v993
        %v1000 = vsel %vm998, 4, %v994
        %s1001 = scalar_lea.vmem [#allocation2], 160
        %1002 = vst [vmem:[%s1001] sm:$0xff] %v1000
        %s1003 = scalar_lea.vmem %s278, 200 [#allocation11]
        %v1004 = vld [vmem:[%s1003] sm:$0xff]
        %v1005 = vadd.f32 %v999, %v1004
        %s1006 = sld [smem:[#allocation3 + $0x65]]
        %v1007 = vstv %s1006
        %v1008 = vadd.f32 %v845, %v1007
        %s1009 = sld [smem:[#allocation3 + $0x6a]]
        %v1010 = vstv %s1009
        %v1011 = vadd.f32 %v877, %v1010
        %vm1012 = vcmp.gt.f32.partialorder %v1011, %v1008
        %v1013 = vsel %vm1012, %v1011, %v1008
        %v1014 = vsel %vm1012, 1, 0
        %s1015 = sld [smem:[#allocation3 + $0x6f]]
        %v1016 = vstv %s1015
        %v1017 = vadd.f32 %v909, %v1016
        %vm1018 = vcmp.gt.f32.partialorder %v1017, %v1013
        %v1019 = vsel %vm1018, %v1017, %v1013
        %v1020 = vsel %vm1018, 2, %v1014
        %s1021 = sld [smem:[#allocation3 + $0x74]]
        %v1022 = vstv %s1021
        %v1023 = vadd.f32 %v941, %v1022
        %vm1024 = vcmp.gt.f32.partialorder %v1023, %v1019
        %v1025 = vsel %vm1024, %v1023, %v1019
        %v1026 = vsel %vm1024, 3, %v1020
        %s1027 = sld [smem:[#allocation3 + $0x79]]
        %v1028 = vstv %s1027
        %v1029 = vadd.f32 %v973, %v1028
        %vm1030 = vcmp.gt.f32.partialorder %v1029, %v1025
        %v1031 = vsel %vm1030, %v1029, %v1025
        %v1032 = vsel %vm1030, 4, %v1026
        %s1033 = scalar_lea.vmem [#allocation2], 168
        %1034 = vst [vmem:[%s1033] sm:$0xff] %v1032
        %s1035 = scalar_lea.vmem %s278, 208 [#allocation11]
        %v1036 = vld [vmem:[%s1035] sm:$0xff]
        %v1037 = vadd.f32 %v1031, %v1036
        %s1038 = sld [smem:[#allocation3 + $0x66]]
        %v1039 = vstv %s1038
        %v1040 = vadd.f32 %v845, %v1039
        %s1041 = sld [smem:[#allocation3 + $0x6b]]
        %v1042 = vstv %s1041
        %v1043 = vadd.f32 %v877, %v1042
        %vm1044 = vcmp.gt.f32.partialorder %v1043, %v1040
        %v1045 = vsel %vm1044, %v1043, %v1040
        %v1046 = vsel %vm1044, 1, 0
        %s1047 = sld [smem:[#allocation3 + $0x70]]
        %v1048 = vstv %s1047
        %v1049 = vadd.f32 %v909, %v1048
        %vm1050 = vcmp.gt.f32.partialorder %v1049, %v1045
        %v1051 = vsel %vm1050, %v1049, %v1045
        %v1052 = vsel %vm1050, 2, %v1046
        %s1053 = sld [smem:[#allocation3 + $0x75]]
        %v1054 = vstv %s1053
        %v1055 = vadd.f32 %v941, %v1054
        %vm1056 = vcmp.gt.f32.partialorder %v1055, %v1051
        %v1057 = vsel %vm1056, %v1055, %v1051
        %v1058 = vsel %vm1056, 3, %v1052
        %s1059 = sld [smem:[#allocation3 + $0x7a]]
        %v1060 = vstv %s1059
        %v1061 = vadd.f32 %v973, %v1060
        %vm1062 = vcmp.gt.f32.partialorder %v1061, %v1057
        %v1063 = vsel %vm1062, %v1061, %v1057
        %v1064 = vsel %vm1062, 4, %v1058
        %s1065 = scalar_lea.vmem [#allocation2], 176
        %1066 = vst [vmem:[%s1065] sm:$0xff] %v1064
        %s1067 = scalar_lea.vmem %s278, 216 [#allocation11]
        %v1068 = vld [vmem:[%s1067] sm:$0xff]
        %v1069 = vadd.f32 %v1063, %v1068
        %s1070 = sld [smem:[#allocation3 + $0x67]]
        %v1071 = vstv %s1070
        %v1072 = vadd.f32 %v845, %v1071
        %s1073 = sld [smem:[#allocation3 + $0x6c]]
        %v1074 = vstv %s1073
        %v1075 = vadd.f32 %v877, %v1074
        %vm1076 = vcmp.gt.f32.partialorder %v1075, %v1072
        %v1077 = vsel %vm1076, %v1075, %v1072
        %v1078 = vsel %vm1076, 1, 0
        %s1079 = sld [smem:[#allocation3 + $0x71]]
        %v1080 = vstv %s1079
        %v1081 = vadd.f32 %v909, %v1080
        %vm1082 = vcmp.gt.f32.partialorder %v1081, %v1077
        %v1083 = vsel %vm1082, %v1081, %v1077
        %v1084 = vsel %vm1082, 2, %v1078
        %s1085 = sld [smem:[#allocation3 + $0x76]]
        %v1086 = vstv %s1085
        %v1087 = vadd.f32 %v941, %v1086
        %vm1088 = vcmp.gt.f32.partialorder %v1087, %v1083
        %v1089 = vsel %vm1088, %v1087, %v1083
        %v1090 = vsel %vm1088, 3, %v1084
        %s1091 = sld [smem:[#allocation3 + $0x7b]]
        %v1092 = vstv %s1091
        %v1093 = vadd.f32 %v973, %v1092
        %vm1094 = vcmp.gt.f32.partialorder %v1093, %v1089
        %v1095 = vsel %vm1094, %v1093, %v1089
        %v1096 = vsel %vm1094, 4, %v1090
        %s1097 = scalar_lea.vmem [#allocation2], 184
        %1098 = vst [vmem:[%s1097] sm:$0xff] %v1096
        %s1099 = scalar_lea.vmem %s278, 224 [#allocation11]
        %v1100 = vld [vmem:[%s1099] sm:$0xff]
        %v1101 = vadd.f32 %v1095, %v1100
        %s1102 = sld [smem:[#allocation3 + $0x68]]
        %v1103 = vstv %s1102
        %v1104 = vadd.f32 %v845, %v1103
        %s1105 = sld [smem:[#allocation3 + $0x6d]]
        %v1106 = vstv %s1105
        %v1107 = vadd.f32 %v877, %v1106
        %vm1108 = vcmp.gt.f32.partialorder %v1107, %v1104
        %v1109 = vsel %vm1108, %v1107, %v1104
        %v1110 = vsel %vm1108, 1, 0
        %s1111 = sld [smem:[#allocation3 + $0x72]]
        %v1112 = vstv %s1111
        %v1113 = vadd.f32 %v909, %v1112
        %vm1114 = vcmp.gt.f32.partialorder %v1113, %v1109
        %v1115 = vsel %vm1114, %v1113, %v1109
        %v1116 = vsel %vm1114, 2, %v1110
        %s1117 = sld [smem:[#allocation3 + $0x77]]
        %v1118 = vstv %s1117
        %v1119 = vadd.f32 %v941, %v1118
        %vm1120 = vcmp.gt.f32.partialorder %v1119, %v1115
        %v1121 = vsel %vm1120, %v1119, %v1115
        %v1122 = vsel %vm1120, 3, %v1116
        %s1123 = sld [smem:[#allocation3 + $0x7c]]
        %v1124 = vstv %s1123
        %v1125 = vadd.f32 %v973, %v1124
        %vm1126 = vcmp.gt.f32.partialorder %v1125, %v1121
        %v1127 = vsel %vm1126, %v1125, %v1121
        %v1128 = vsel %vm1126, 4, %v1122
        %s1129 = scalar_lea.vmem [#allocation2], 192
        %1130 = vst [vmem:[%s1129] sm:$0xff] %v1128
        %s1131 = scalar_lea.vmem %s278, 232 [#allocation11]
        %v1132 = vld [vmem:[%s1131] sm:$0xff]
        %v1133 = vadd.f32 %v1127, %v1132
        %s1134 = sld [smem:[#allocation3 + $0x7d]]
        %v1135 = vstv %s1134
        %v1136 = vadd.f32 %v1005, %v1135
        %s1137 = sld [smem:[#allocation3 + $0x82]]
        %v1138 = vstv %s1137
        %v1139 = vadd.f32 %v1037, %v1138
        %vm1140 = vcmp.gt.f32.partialorder %v1139, %v1136
        %v1141 = vsel %vm1140, %v1139, %v1136
        %v1142 = vsel %vm1140, 1, 0
        %s1143 = sld [smem:[#allocation3 + $0x87]]
        %v1144 = vstv %s1143
        %v1145 = vadd.f32 %v1069, %v1144
        %vm1146 = vcmp.gt.f32.partialorder %v1145, %v1141
        %v1147 = vsel %vm1146, %v1145, %v1141
        %v1148 = vsel %vm1146, 2, %v1142
        %s1149 = sld [smem:[#allocation3 + $0x8c]]
        %v1150 = vstv %s1149
        %v1151 = vadd.f32 %v1101, %v1150
        %vm1152 = vcmp.gt.f32.partialorder %v1151, %v1147
        %v1153 = vsel %vm1152, %v1151, %v1147
        %v1154 = vsel %vm1152, 3, %v1148
        %s1155 = sld [smem:[#allocation3 + $0x91]]
        %v1156 = vstv %s1155
        %v1157 = vadd.f32 %v1133, %v1156
        %vm1158 = vcmp.gt.f32.partialorder %v1157, %v1153
        %v1159 = vsel %vm1158, %v1157, %v1153
        %v1160 = vsel %vm1158, 4, %v1154
        %s1161 = scalar_lea.vmem [#allocation2], 200
        %1162 = vst [vmem:[%s1161] sm:$0xff] %v1160
        %s1163 = scalar_lea.vmem %s278, 240 [#allocation11]
        %v1164 = vld [vmem:[%s1163] sm:$0xff]
        %v1165 = vadd.f32 %v1159, %v1164
        %s1166 = sld [smem:[#allocation3 + $0x7e]]
        %v1167 = vstv %s1166
        %v1168 = vadd.f32 %v1005, %v1167
        %s1169 = sld [smem:[#allocation3 + $0x83]]
        %v1170 = vstv %s1169
        %v1171 = vadd.f32 %v1037, %v1170
        %vm1172 = vcmp.gt.f32.partialorder %v1171, %v1168
        %v1173 = vsel %vm1172, %v1171, %v1168
        %v1174 = vsel %vm1172, 1, 0
        %s1175 = sld [smem:[#allocation3 + $0x88]]
        %v1176 = vstv %s1175
        %v1177 = vadd.f32 %v1069, %v1176
        %vm1178 = vcmp.gt.f32.partialorder %v1177, %v1173
        %v1179 = vsel %vm1178, %v1177, %v1173
        %v1180 = vsel %vm1178, 2, %v1174
        %s1181 = sld [smem:[#allocation3 + $0x8d]]
        %v1182 = vstv %s1181
        %v1183 = vadd.f32 %v1101, %v1182
        %vm1184 = vcmp.gt.f32.partialorder %v1183, %v1179
        %v1185 = vsel %vm1184, %v1183, %v1179
        %v1186 = vsel %vm1184, 3, %v1180
        %s1187 = sld [smem:[#allocation3 + $0x92]]
        %v1188 = vstv %s1187
        %v1189 = vadd.f32 %v1133, %v1188
        %vm1190 = vcmp.gt.f32.partialorder %v1189, %v1185
        %v1191 = vsel %vm1190, %v1189, %v1185
        %v1192 = vsel %vm1190, 4, %v1186
        %s1193 = scalar_lea.vmem [#allocation2], 208
        %1194 = vst [vmem:[%s1193] sm:$0xff] %v1192
        %s1195 = scalar_lea.vmem %s278, 248 [#allocation11]
        %v1196 = vld [vmem:[%s1195] sm:$0xff]
        %v1197 = vadd.f32 %v1191, %v1196
        %s1198 = sld [smem:[#allocation3 + $0x7f]]
        %v1199 = vstv %s1198
        %v1200 = vadd.f32 %v1005, %v1199
        %s1201 = sld [smem:[#allocation3 + $0x84]]
        %v1202 = vstv %s1201
        %v1203 = vadd.f32 %v1037, %v1202
        %vm1204 = vcmp.gt.f32.partialorder %v1203, %v1200
        %v1205 = vsel %vm1204, %v1203, %v1200
        %v1206 = vsel %vm1204, 1, 0
        %s1207 = sld [smem:[#allocation3 + $0x89]]
        %v1208 = vstv %s1207
        %v1209 = vadd.f32 %v1069, %v1208
        %vm1210 = vcmp.gt.f32.partialorder %v1209, %v1205
        %v1211 = vsel %vm1210, %v1209, %v1205
        %v1212 = vsel %vm1210, 2, %v1206
        %s1213 = sld [smem:[#allocation3 + $0x8e]]
        %v1214 = vstv %s1213
        %v1215 = vadd.f32 %v1101, %v1214
        %vm1216 = vcmp.gt.f32.partialorder %v1215, %v1211
        %v1217 = vsel %vm1216, %v1215, %v1211
        %v1218 = vsel %vm1216, 3, %v1212
        %s1219 = sld [smem:[#allocation3 + $0x93]]
        %v1220 = vstv %s1219
        %v1221 = vadd.f32 %v1133, %v1220
        %vm1222 = vcmp.gt.f32.partialorder %v1221, %v1217
        %v1223 = vsel %vm1222, %v1221, %v1217
        %v1224 = vsel %vm1222, 4, %v1218
        %s1225 = scalar_lea.vmem [#allocation2], 216
        %1226 = vst [vmem:[%s1225] sm:$0xff] %v1224
        %s1227 = scalar_lea.vmem %s278, 256 [#allocation11]
        %v1228 = vld [vmem:[%s1227] sm:$0xff]
        %v1229 = vadd.f32 %v1223, %v1228
        %s1230 = sld [smem:[#allocation3 + $0x80]]
        %v1231 = vstv %s1230
        %v1232 = vadd.f32 %v1005, %v1231
        %s1233 = sld [smem:[#allocation3 + $0x85]]
        %v1234 = vstv %s1233
        %v1235 = vadd.f32 %v1037, %v1234
        %vm1236 = vcmp.gt.f32.partialorder %v1235, %v1232
        %v1237 = vsel %vm1236, %v1235, %v1232
        %v1238 = vsel %vm1236, 1, 0
        %s1239 = sld [smem:[#allocation3 + $0x8a]]
        %v1240 = vstv %s1239
        %v1241 = vadd.f32 %v1069, %v1240
        %vm1242 = vcmp.gt.f32.partialorder %v1241, %v1237
        %v1243 = vsel %vm1242, %v1241, %v1237
        %v1244 = vsel %vm1242, 2, %v1238
        %s1245 = sld [smem:[#allocation3 + $0x8f]]
        %v1246 = vstv %s1245
        %v1247 = vadd.f32 %v1101, %v1246
        %vm1248 = vcmp.gt.f32.partialorder %v1247, %v1243
        %v1249 = vsel %vm1248, %v1247, %v1243
        %v1250 = vsel %vm1248, 3, %v1244
        %s1251 = sld [smem:[#allocation3 + $0x94]]
        %v1252 = vstv %s1251
        %v1253 = vadd.f32 %v1133, %v1252
        %vm1254 = vcmp.gt.f32.partialorder %v1253, %v1249
        %v1255 = vsel %vm1254, %v1253, %v1249
        %v1256 = vsel %vm1254, 4, %v1250
        %s1257 = scalar_lea.vmem [#allocation2], 224
        %1258 = vst [vmem:[%s1257] sm:$0xff] %v1256
        %s1259 = scalar_lea.vmem %s278, 264 [#allocation11]
        %v1260 = vld [vmem:[%s1259] sm:$0xff]
        %v1261 = vadd.f32 %v1255, %v1260
        %s1262 = sld [smem:[#allocation3 + $0x81]]
        %v1263 = vstv %s1262
        %v1264 = vadd.f32 %v1005, %v1263
        %s1265 = sld [smem:[#allocation3 + $0x86]]
        %v1266 = vstv %s1265
        %v1267 = vadd.f32 %v1037, %v1266
        %vm1268 = vcmp.gt.f32.partialorder %v1267, %v1264
        %v1269 = vsel %vm1268, %v1267, %v1264
        %v1270 = vsel %vm1268, 1, 0
        %s1271 = sld [smem:[#allocation3 + $0x8b]]
        %v1272 = vstv %s1271
        %v1273 = vadd.f32 %v1069, %v1272
        %vm1274 = vcmp.gt.f32.partialorder %v1273, %v1269
        %v1275 = vsel %vm1274, %v1273, %v1269
        %v1276 = vsel %vm1274, 2, %v1270
        %s1277 = sld [smem:[#allocation3 + $0x90]]
        %v1278 = vstv %s1277
        %v1279 = vadd.f32 %v1101, %v1278
        %vm1280 = vcmp.gt.f32.partialorder %v1279, %v1275
        %v1281 = vsel %vm1280, %v1279, %v1275
        %v1282 = vsel %vm1280, 3, %v1276
        %s1283 = sld [smem:[#allocation3 + $0x95]]
        %v1284 = vstv %s1283
        %v1285 = vadd.f32 %v1133, %v1284
        %vm1286 = vcmp.gt.f32.partialorder %v1285, %v1281
        %v1287 = vsel %vm1286, %v1285, %v1281
        %v1288 = vsel %vm1286, 4, %v1282
        %s1289 = scalar_lea.vmem [#allocation2], 232
        %1290 = vst [vmem:[%s1289] sm:$0xff] %v1288
        %s1291 = scalar_lea.vmem %s278, 272 [#allocation11]
        %v1292 = vld [vmem:[%s1291] sm:$0xff]
        %v1293 = vadd.f32 %v1287, %v1292
        %s1294 = sld [smem:[#allocation3 + $0x96]]
        %v1295 = vstv %s1294
        %v1296 = vadd.f32 %v1165, %v1295
        %s1297 = sld [smem:[#allocation3 + $0x9b]]
        %v1298 = vstv %s1297
        %v1299 = vadd.f32 %v1197, %v1298
        %vm1300 = vcmp.gt.f32.partialorder %v1299, %v1296
        %v1301 = vsel %vm1300, %v1299, %v1296
        %v1302 = vsel %vm1300, 1, 0
        %s1303 = sld [smem:[#allocation3 + $0xa0]]
        %v1304 = vstv %s1303
        %v1305 = vadd.f32 %v1229, %v1304
        %vm1306 = vcmp.gt.f32.partialorder %v1305, %v1301
        %v1307 = vsel %vm1306, %v1305, %v1301
        %v1308 = vsel %vm1306, 2, %v1302
        %s1309 = sld [smem:[#allocation3 + $0xa5]]
        %v1310 = vstv %s1309
        %v1311 = vadd.f32 %v1261, %v1310
        %vm1312 = vcmp.gt.f32.partialorder %v1311, %v1307
        %v1313 = vsel %vm1312, %v1311, %v1307
        %v1314 = vsel %vm1312, 3, %v1308
        %s1315 = sld [smem:[#allocation3 + $0xaa]]
        %v1316 = vstv %s1315
        %v1317 = vadd.f32 %v1293, %v1316
        %vm1318 = vcmp.gt.f32.partialorder %v1317, %v1313
        %v1319 = vsel %vm1318, %v1317, %v1313
        %v1320 = vsel %vm1318, 4, %v1314
        %s1321 = scalar_lea.vmem [#allocation2], 240
        %1322 = vst [vmem:[%s1321] sm:$0xff] %v1320
        %s1323 = scalar_lea.vmem %s278, 280 [#allocation11]
        %v1324 = vld [vmem:[%s1323] sm:$0xff]
        %v1325 = vadd.f32 %v1319, %v1324
        %s1326 = sld [smem:[#allocation3 + $0x97]]
        %v1327 = vstv %s1326
        %v1328 = vadd.f32 %v1165, %v1327
        %s1329 = sld [smem:[#allocation3 + $0x9c]]
        %v1330 = vstv %s1329
        %v1331 = vadd.f32 %v1197, %v1330
        %vm1332 = vcmp.gt.f32.partialorder %v1331, %v1328
        %v1333 = vsel %vm1332, %v1331, %v1328
        %v1334 = vsel %vm1332, 1, 0
        %s1335 = sld [smem:[#allocation3 + $0xa1]]
        %v1336 = vstv %s1335
        %v1337 = vadd.f32 %v1229, %v1336
        %vm1338 = vcmp.gt.f32.partialorder %v1337, %v1333
        %v1339 = vsel %vm1338, %v1337, %v1333
        %v1340 = vsel %vm1338, 2, %v1334
        %s1341 = sld [smem:[#allocation3 + $0xa6]]
        %v1342 = vstv %s1341
        %v1343 = vadd.f32 %v1261, %v1342
        %vm1344 = vcmp.gt.f32.partialorder %v1343, %v1339
        %v1345 = vsel %vm1344, %v1343, %v1339
        %v1346 = vsel %vm1344, 3, %v1340
        %s1347 = sld [smem:[#allocation3 + $0xab]]
        %v1348 = vstv %s1347
        %v1349 = vadd.f32 %v1293, %v1348
        %vm1350 = vcmp.gt.f32.partialorder %v1349, %v1345
        %v1351 = vsel %vm1350, %v1349, %v1345
        %v1352 = vsel %vm1350, 4, %v1346
        %s1353 = scalar_lea.vmem [#allocation2], 248
        %1354 = vst [vmem:[%s1353] sm:$0xff] %v1352
        %s1355 = scalar_lea.vmem %s278, 288 [#allocation11]
        %v1356 = vld [vmem:[%s1355] sm:$0xff]
        %v1357 = vadd.f32 %v1351, %v1356
        %s1358 = sld [smem:[#allocation3 + $0x98]]
        %v1359 = vstv %s1358
        %v1360 = vadd.f32 %v1165, %v1359
        %s1361 = sld [smem:[#allocation3 + $0x9d]]
        %v1362 = vstv %s1361
        %v1363 = vadd.f32 %v1197, %v1362
        %vm1364 = vcmp.gt.f32.partialorder %v1363, %v1360
        %v1365 = vsel %vm1364, %v1363, %v1360
        %v1366 = vsel %vm1364, 1, 0
        %s1367 = sld [smem:[#allocation3 + $0xa2]]
        %v1368 = vstv %s1367
        %v1369 = vadd.f32 %v1229, %v1368
        %vm1370 = vcmp.gt.f32.partialorder %v1369, %v1365
        %v1371 = vsel %vm1370, %v1369, %v1365
        %v1372 = vsel %vm1370, 2, %v1366
        %s1373 = sld [smem:[#allocation3 + $0xa7]]
        %v1374 = vstv %s1373
        %v1375 = vadd.f32 %v1261, %v1374
        %vm1376 = vcmp.gt.f32.partialorder %v1375, %v1371
        %v1377 = vsel %vm1376, %v1375, %v1371
        %v1378 = vsel %vm1376, 3, %v1372
        %s1379 = sld [smem:[#allocation3 + $0xac]]
        %v1380 = vstv %s1379
        %v1381 = vadd.f32 %v1293, %v1380
        %vm1382 = vcmp.gt.f32.partialorder %v1381, %v1377
        %v1383 = vsel %vm1382, %v1381, %v1377
        %v1384 = vsel %vm1382, 4, %v1378
        %s1385 = scalar_lea.vmem [#allocation2], 256
        %1386 = vst [vmem:[%s1385] sm:$0xff] %v1384
        %s1387 = scalar_lea.vmem %s278, 296 [#allocation11]
        %v1388 = vld [vmem:[%s1387] sm:$0xff]
        %v1389 = vadd.f32 %v1383, %v1388
        %s1390 = sld [smem:[#allocation3 + $0x99]]
        %v1391 = vstv %s1390
        %v1392 = vadd.f32 %v1165, %v1391
        %s1393 = sld [smem:[#allocation3 + $0x9e]]
        %v1394 = vstv %s1393
        %v1395 = vadd.f32 %v1197, %v1394
        %vm1396 = vcmp.gt.f32.partialorder %v1395, %v1392
        %v1397 = vsel %vm1396, %v1395, %v1392
        %v1398 = vsel %vm1396, 1, 0
        %s1399 = sld [smem:[#allocation3 + $0xa3]]
        %v1400 = vstv %s1399
        %v1401 = vadd.f32 %v1229, %v1400
        %vm1402 = vcmp.gt.f32.partialorder %v1401, %v1397
        %v1403 = vsel %vm1402, %v1401, %v1397
        %v1404 = vsel %vm1402, 2, %v1398
        %s1405 = sld [smem:[#allocation3 + $0xa8]]
        %v1406 = vstv %s1405
        %v1407 = vadd.f32 %v1261, %v1406
        %vm1408 = vcmp.gt.f32.partialorder %v1407, %v1403
        %v1409 = vsel %vm1408, %v1407, %v1403
        %v1410 = vsel %vm1408, 3, %v1404
        %s1411 = sld [smem:[#allocation3 + $0xad]]
        %v1412 = vstv %s1411
        %v1413 = vadd.f32 %v1293, %v1412
        %vm1414 = vcmp.gt.f32.partialorder %v1413, %v1409
        %v1415 = vsel %vm1414, %v1413, %v1409
        %v1416 = vsel %vm1414, 4, %v1410
        %s1417 = scalar_lea.vmem [#allocation2], 264
        %1418 = vst [vmem:[%s1417] sm:$0xff] %v1416
        %s1419 = scalar_lea.vmem %s278, 304 [#allocation11]
        %v1420 = vld [vmem:[%s1419] sm:$0xff]
        %v1421 = vadd.f32 %v1415, %v1420
        %s1422 = sld [smem:[#allocation3 + $0x9a]]
        %v1423 = vstv %s1422
        %v1424 = vadd.f32 %v1165, %v1423
        %s1425 = sld [smem:[#allocation3 + $0x9f]]
        %v1426 = vstv %s1425
        %v1427 = vadd.f32 %v1197, %v1426
        %vm1428 = vcmp.gt.f32.partialorder %v1427, %v1424
        %v1429 = vsel %vm1428, %v1427, %v1424
        %v1430 = vsel %vm1428, 1, 0
        %s1431 = sld [smem:[#allocation3 + $0xa4]]
        %v1432 = vstv %s1431
        %v1433 = vadd.f32 %v1229, %v1432
        %vm1434 = vcmp.gt.f32.partialorder %v1433, %v1429
        %v1435 = vsel %vm1434, %v1433, %v1429
        %v1436 = vsel %vm1434, 2, %v1430
        %s1437 = sld [smem:[#allocation3 + $0xa9]]
        %v1438 = vstv %s1437
        %v1439 = vadd.f32 %v1261, %v1438
        %vm1440 = vcmp.gt.f32.partialorder %v1439, %v1435
        %v1441 = vsel %vm1440, %v1439, %v1435
        %v1442 = vsel %vm1440, 3, %v1436
        %s1443 = sld [smem:[#allocation3 + $0xae]]
        %v1444 = vstv %s1443
        %v1445 = vadd.f32 %v1293, %v1444
        %vm1446 = vcmp.gt.f32.partialorder %v1445, %v1441
        %v1447 = vsel %vm1446, %v1445, %v1441
        %v1448 = vsel %vm1446, 4, %v1442
        %s1449 = scalar_lea.vmem [#allocation2], 272
        %1450 = vst [vmem:[%s1449] sm:$0xff] %v1448
        %s1451 = scalar_lea.vmem %s278, 312 [#allocation11]
        %v1452 = vld [vmem:[%s1451] sm:$0xff]
        %v1453 = vadd.f32 %v1447, %v1452
        %s1454 = sld [smem:[#allocation9]]
        %v1455 = vstv %s1454
        %v1456 = vadd.f32 %v1325, %v1455
        %s1457 = sld [smem:[#allocation9 + $0x1]]
        %v1458 = vstv %s1457
        %v1459 = vadd.f32 %v1357, %v1458
        %s1460 = sld [smem:[#allocation9 + $0x2]]
        %v1461 = vstv %s1460
        %v1462 = vadd.f32 %v1389, %v1461
        %s1463 = sld [smem:[#allocation9 + $0x3]]
        %v1464 = vstv %s1463
        %v1465 = vadd.f32 %v1421, %v1464
        %s1466 = sld [smem:[#allocation9 + $0x4]]
        %v1467 = vstv %s1466
        %v1468 = vadd.f32 %v1453, %v1467
        %vm1469 = vcmp.gt.f32.partialorder %v1459, %v1456
        %v1470 = vsel %vm1469, %v1459, %v1456
        %v1471 = vsel %vm1469, 1, 0
        %vm1472 = vcmp.gt.f32.partialorder %v1462, %v1470
        %v1473 = vsel %vm1472, %v1462, %v1470
        %v1474 = vsel %vm1472, 2, %v1471
        %vm1475 = vcmp.gt.f32.partialorder %v1465, %v1473
        %v1476 = vsel %vm1475, %v1465, %v1473
        %v1477 = vsel %vm1475, 3, %v1474
        %vm1478 = vcmp.gt.f32.partialorder %v1468, %v1476
        %v1479 = vsel %vm1478, 4, %v1477
        %1480 = vst [vmem:[%s310] sm:$0xff] %v1456
        %s1481 = scalar_lea.vmem %s310, 8 [#allocation13]
        %1482 = vst [vmem:[%s1481] sm:$0xff] %v1459
        %s1483 = scalar_lea.vmem %s310, 16 [#allocation13]
        %1484 = vst [vmem:[%s1483] sm:$0xff] %v1462
        %s1485 = scalar_lea.vmem %s310, 24 [#allocation13]
        %1486 = vst [vmem:[%s1485] sm:$0xff] %v1465
        %s1487 = scalar_lea.vmem %s310, 32 [#allocation13]
        %1488 = vst [vmem:[%s1487] sm:$0xff] %v1468
        %s1489 = scalar_lea.vmem %s303, 56 [#allocation12]
        %1490 = vst [vmem:[%s1489] sm:$0xff] %v1479
        %v1491 = vld [vmem:[%s1321] sm:$0xff]
        %vm1492 = vcmp.eq.s32.totalorder %v1479, 1
        %v1493 = vld [vmem:[%s1353] sm:$0xff]
        %v1494 = vsel %vm1492, %v1493, %v1491
        %vm1495 = vcmp.eq.s32.totalorder %v1479, 2
        %v1496 = vld [vmem:[%s1385] sm:$0xff]
        %v1497 = vsel %vm1495, %v1496, %v1494
        %vm1498 = vcmp.eq.s32.totalorder %v1479, 3
        %v1499 = vld [vmem:[%s1417] sm:$0xff]
        %v1500 = vsel %vm1498, %v1499, %v1497
        %vm1501 = vcmp.eq.s32.totalorder %v1479, 4
        %v1502 = vld [vmem:[%s1449] sm:$0xff]
        %v1503 = vsel %vm1501, %v1502, %v1500
        %s1504 = scalar_lea.vmem %s303, 48 [#allocation12]
        %1505 = vst [vmem:[%s1504] sm:$0xff] %v1503
        %v1506 = vld [vmem:[%s1161] sm:$0xff]
        %vm1507 = vcmp.eq.s32.totalorder %v1503, 1
        %v1508 = vld [vmem:[%s1193] sm:$0xff]
        %v1509 = vsel %vm1507, %v1508, %v1506
        %vm1510 = vcmp.eq.s32.totalorder %v1503, 2
        %v1511 = vld [vmem:[%s1225] sm:$0xff]
        %v1512 = vsel %vm1510, %v1511, %v1509
        %vm1513 = vcmp.eq.s32.totalorder %v1503, 3
        %v1514 = vld [vmem:[%s1257] sm:$0xff]
        %v1515 = vsel %vm1513, %v1514, %v1512
        %vm1516 = vcmp.eq.s32.totalorder %v1503, 4
        %v1517 = vld [vmem:[%s1289] sm:$0xff]
        %v1518 = vsel %vm1516, %v1517, %v1515
        %s1519 = scalar_lea.vmem %s303, 40 [#allocation12]
        %1520 = vst [vmem:[%s1519] sm:$0xff] %v1518
        %v1521 = vld [vmem:[%s1001] sm:$0xff]
        %vm1522 = vcmp.eq.s32.totalorder %v1518, 1
        %v1523 = vld [vmem:[%s1033] sm:$0xff]
        %v1524 = vsel %vm1522, %v1523, %v1521
        %vm1525 = vcmp.eq.s32.totalorder %v1518, 2
        %v1526 = vld [vmem:[%s1065] sm:$0xff]
        %v1527 = vsel %vm1525, %v1526, %v1524
        %vm1528 = vcmp.eq.s32.totalorder %v1518, 3
        %v1529 = vld [vmem:[%s1097] sm:$0xff]
        %v1530 = vsel %vm1528, %v1529, %v1527
        %vm1531 = vcmp.eq.s32.totalorder %v1518, 4
        %v1532 = vld [vmem:[%s1129] sm:$0xff]
        %v1533 = vsel %vm1531, %v1532, %v1530
        %s1534 = scalar_lea.vmem %s303, 32 [#allocation12]
        %1535 = vst [vmem:[%s1534] sm:$0xff] %v1533
        %v1536 = vld [vmem:[%s841] sm:$0xff]
        %vm1537 = vcmp.eq.s32.totalorder %v1533, 1
        %v1538 = vld [vmem:[%s873] sm:$0xff]
        %v1539 = vsel %vm1537, %v1538, %v1536
        %vm1540 = vcmp.eq.s32.totalorder %v1533, 2
        %v1541 = vld [vmem:[%s905] sm:$0xff]
        %v1542 = vsel %vm1540, %v1541, %v1539
        %vm1543 = vcmp.eq.s32.totalorder %v1533, 3
        %v1544 = vld [vmem:[%s937] sm:$0xff]
        %v1545 = vsel %vm1543, %v1544, %v1542
        %vm1546 = vcmp.eq.s32.totalorder %v1533, 4
        %v1547 = vld [vmem:[%s969] sm:$0xff]
        %v1548 = vsel %vm1546, %v1547, %v1545
        %s1549 = scalar_lea.vmem %s303, 24 [#allocation12]
        %1550 = vst [vmem:[%s1549] sm:$0xff] %v1548
        %v1551 = vld [vmem:[%s681] sm:$0xff]
        %vm1552 = vcmp.eq.s32.totalorder %v1548, 1
        %v1553 = vld [vmem:[%s713] sm:$0xff]
        %v1554 = vsel %vm1552, %v1553, %v1551
        %vm1555 = vcmp.eq.s32.totalorder %v1548, 2
        %v1556 = vld [vmem:[%s745] sm:$0xff]
        %v1557 = vsel %vm1555, %v1556, %v1554
        %vm1558 = vcmp.eq.s32.totalorder %v1548, 3
        %v1559 = vld [vmem:[%s777] sm:$0xff]
        %v1560 = vsel %vm1558, %v1559, %v1557
        %vm1561 = vcmp.eq.s32.totalorder %v1548, 4
        %v1562 = vld [vmem:[%s809] sm:$0xff]
        %v1563 = vsel %vm1561, %v1562, %v1560
        %s1564 = scalar_lea.vmem %s303, 16 [#allocation12]
        %1565 = vst [vmem:[%s1564] sm:$0xff] %v1563
        %v1566 = vld [vmem:[%s521] sm:$0xff]
        %vm1567 = vcmp.eq.s32.totalorder %v1563, 1
        %v1568 = vld [vmem:[%s553] sm:$0xff]
        %v1569 = vsel %vm1567, %v1568, %v1566
        %vm1570 = vcmp.eq.s32.totalorder %v1563, 2
        %v1571 = vld [vmem:[%s585] sm:$0xff]
        %v1572 = vsel %vm1570, %v1571, %v1569
        %vm1573 = vcmp.eq.s32.totalorder %v1563, 3
        %v1574 = vld [vmem:[%s617] sm:$0xff]
        %v1575 = vsel %vm1573, %v1574, %v1572
        %vm1576 = vcmp.eq.s32.totalorder %v1563, 4
        %v1577 = vld [vmem:[%s649] sm:$0xff]
        %v1578 = vsel %vm1576, %v1577, %v1575
        %s1579 = scalar_lea.vmem %s303, 8 [#allocation12]
        %1580 = vst [vmem:[%s1579] sm:$0xff] %v1578
        %v1581 = vld [vmem:[#allocation2] sm:$0xff]
        %vm1582 = vcmp.eq.s32.totalorder %v1578, 1
        %v1583 = vld [vmem:[%s393] sm:$0xff]
        %v1584 = vsel %vm1582, %v1583, %v1581
        %vm1585 = vcmp.eq.s32.totalorder %v1578, 2
        %v1586 = vld [vmem:[%s425] sm:$0xff]
        %v1587 = vsel %vm1585, %v1586, %v1584
        %vm1588 = vcmp.eq.s32.totalorder %v1578, 3
        %v1589 = vld [vmem:[%s457] sm:$0xff]
        %v1590 = vsel %vm1588, %v1589, %v1587
        %vm1591 = vcmp.eq.s32.totalorder %v1578, 4
        %v1592 = vld [vmem:[%s489] sm:$0xff]
        %v1593 = vsel %vm1591, %v1592, %v1590
        %1594 = vst [vmem:[%s303] sm:$0xff] %v1593
        %s1595 = sand.u32 %s142, 1
        %s1596 = scalar_lea.sflag [#allocation5], %s1595
        %s1597 = sand.u32 %s142, 1
        %s1598 = smul.addr %s1597, 64
        %s1599 = scalar_lea.vmem [#allocation12], %s1598
        %s1600 = sand.u32 %s170, 1
        %s1601 = scalar_lea.sflag [#allocation14], %s1600
        %s1602 = sand.u32 %s170, 1
        %s1603 = smul.addr %s1602, 40
        %s1604 = scalar_lea.vmem [#allocation13], %s1603
        // Predicated region
        $region53: #{tpu_custom_call.1} parent=35 // pred_check
          %p1605 = pneg %p152
        $region54: #{tpu_custom_call.1} parent=35 // pred_check_branch
          %1607 = sbr.rel (%p1605) target = $region56
        $region55: #{tpu_custom_call.1} parent=35 // pred_region
          %s1609 = ssub.s32 1024, 1024
          %1610 = vsyncadd %s1596, %s1609
          %s1611 = smul.addr %s33, 8
          %s1612 = sadd.s32 %s34, %s1611
          %s1613 = smul.addr %s1612, 128
          %s1614 = scalar_lea.hbm %s4, %s1613
          %s1615 = sshll.u32 %s1599, 4
          %s1616 = int_to_ptr.vmem [resolvable:$true] %s1615
          %1621 = dma.vmem_to_hbm [thread:$0]  %s1616, 1024, %s1614, %s1596, 128, 128, 8
        $region56: #{tpu_custom_call.1} parent=35 // pred_fallthru
          _
        // Predicated region
        $region57: #{tpu_custom_call.1} parent=35 // pred_check
          %p1622 = pneg %p180
        $region58: #{tpu_custom_call.1} parent=35 // pred_check_branch
          %1624 = sbr.rel (%p1622) target = $region60
        $region59: #{tpu_custom_call.1} parent=35 // pred_region
          %s1626 = ssub.s32 640, 640
          %1627 = vsyncadd %s1601, %s1626
          %s1628 = smul.addr %s33, 5
          %s1629 = sadd.s32 %s34, %s1628
          %s1630 = smul.addr %s1629, 128
          %s1631 = scalar_lea.hbm %s5, %s1630
          %s1632 = sshll.u32 %s1604, 4
          %s1633 = int_to_ptr.vmem [resolvable:$true] %s1632
          %1638 = dma.vmem_to_hbm [thread:$0]  %s1633, 640, %s1631, %s1601, 128, 128, 8
        $region60: #{tpu_custom_call.1} parent=35 // pred_fallthru
          _
      $region36: #{tpu_custom_call.1} parent=5 // pred_fallthru
        _
      %p1639 = scmp.le.s32.totalorder 2, %s24
      // Predicated region
      $region61: #{tpu_custom_call.1} parent=5 // pred_check
        %p1640 = pneg %p1639
      $region62: #{tpu_custom_call.1} parent=5 // pred_check_branch
        %1642 = sbr.rel (%p1640) target = $region64
      $region63: #{tpu_custom_call.1} parent=5 // pred_region
        %s1643 = ssub.s32 %s24, 2
        // Predicated region
        $region65: #{tpu_custom_call.1} parent=63 // pred_check
          %p1644 = pneg %p158
        $region66: #{tpu_custom_call.1} parent=63 // pred_check_branch
          %1646 = sbr.rel (%p1644) target = $region68
        $region67: #{tpu_custom_call.1} parent=63 // pred_region
          %s1647 = sand.u32 %s143, 1
          %s1648 = scalar_lea.sflag [#allocation5], %s1647
          %s1649 = sand.u32 %s143, 1
          %s1650 = smul.addr %s1649, 64
          %s1651 = scalar_lea.vmem [#allocation12], %s1650
          %1652 = dma.done %s1648, 1024
        $region68: #{tpu_custom_call.1} parent=63 // pred_fallthru
          _
        // Predicated region
        $region69: #{tpu_custom_call.1} parent=63 // pred_check
          %p1653 = pneg %p186
        $region70: #{tpu_custom_call.1} parent=63 // pred_check_branch
          %1655 = sbr.rel (%p1653) target = $region72
        $region71: #{tpu_custom_call.1} parent=63 // pred_region
          %s1656 = sand.u32 %s171, 1
          %s1657 = scalar_lea.sflag [#allocation14], %s1656
          %s1658 = sand.u32 %s171, 1
          %s1659 = smul.addr %s1658, 40
          %s1660 = scalar_lea.vmem [#allocation13], %s1659
          %1661 = dma.done %s1657, 640
        $region72: #{tpu_custom_call.1} parent=63 // pred_fallthru
          _
      $region64: #{tpu_custom_call.1} parent=5 // pred_fallthru
        _
    $region6: #{tpu_custom_call.1} parent=1 // loop_footer
      %s28 = sadd.s32 1, %s24
    $region7: #{tpu_custom_call.1} parent=1 // loop_footer_branch
      %23 = sbr.rel target = $region3
    $region8: #{tpu_custom_call.1} parent=1 // loop_exit
      _
    %1662 = vsyncpa [#allocation4], 1
    %s1663 = scalar_lea.sflag [#allocation4], 1
    %1664 = vsyncpa %s1663, 1
    %1665 = vsyncpa [#allocation5], 1
    %s1666 = scalar_lea.sflag [#allocation5], 1
    %1667 = vsyncpa %s1666, 1
    %1668 = vsyncpa [#allocation14], 1
    %s1669 = scalar_lea.sflag [#allocation14], 1
    %1670 = vsyncpa %s1669, 1
    %1671 = vsyncpa [#allocation6], 1
    %s1672 = scalar_lea.sflag [#allocation6], 1
    %1673 = vsyncpa %s1672, 1
    %1674 = vsyncpa [#allocation7], 1
    %s1675 = scalar_lea.sflag [#allocation7], 1
    %1676 = vsyncpa %s1675, 1
    %1677 = vsyncpa [#allocation10], 1

</llo_original>
